<compile_context>
chip_gen: v7x
topology: tpu7x:2x2x1
jax: 0.10.0
libtpu: 0.0.40
codegen_flags: <defaults>
</compile_context>

<pallas_src>
import math

import jax
import jax.numpy as jnp
from jax.experimental import pallas as pl
from jax.experimental.pallas import tpu as pltpu


def _kl_sd_fused_kernel(params_ref, f_ref, w0_ref, ld_ref, sw_ref,
                        w_iter_ref, loss_ref):
    """All steepest-descent iterations + KL losses for one sequence."""
    step_len = params_ref[0]   # exp(log_step_length)
    reg_w    = params_ref[1]   # reg_weight (from score_predictor.init_data)
    sl_reg   = params_ref[2]   # steplength_reg
    hes_reg  = params_ref[3]   # hessian_reg
    exp_reg  = params_ref[4]   # exp(softmax_reg) or 0

    num_iter = w_iter_ref.shape[1]
    N = ld_ref.shape[1]
    f_dtype = f_ref.dtype

    ld = ld_ref[0]             # (N, HW) f32
    sw = sw_ref[0]             # (N, 1)  f32
    w  = w0_ref[0]             # (1, D)  f32

    def image_pass(w_cur, compute_grad):
        """One sweep over the N train images at parameter w_cur.

        Returns (KL data term (1,1), per-image softmax list, raw J^T dLds (1,D))."""
        w_lo = w_cur.astype(f_dtype)
        data = jnp.zeros((1, 1), jnp.float32)
        wg = jnp.zeros_like(w_cur) if compute_grad else None
        sm_list = []
        for n in range(N):                           # static unroll, N small
            f_n  = f_ref[0, n]                       # (HW, D) bf16/f32 in VMEM
            ld_n = ld[n:n + 1, :]                    # (1, HW)
            sw_n = sw[n:n + 1, :]                    # (1, 1)

            # scores_n[h] = <f_n[h, :], w>   (MXU: (1,D) x (HW,D)^T)
            scores_n = jax.lax.dot_general(
                w_lo, f_n, (((1,), (1,)), ((), ())),
                preferred_element_type=jnp.float32)                    # (1, HW)

            # regularized softmax over the spatial dim (stabilized).
            m_n = jnp.max(scores_n, axis=-1, keepdims=True)            # (1, 1)
            e_n = jnp.exp(scores_n - m_n)                              # (1, HW)
            denom_n = (jnp.sum(e_n, axis=-1, keepdims=True)
                       + exp_reg * jnp.exp(-m_n))                      # (1, 1)
            log_z_n = m_n + jnp.log(denom_n)                           # (1, 1)

            ld_score_n = jnp.sum(ld_n * scores_n, axis=-1, keepdims=True)
            data = data + sw_n * (log_z_n - ld_score_n)

            if compute_grad:
                sm_n = e_n * pl.reciprocal(denom_n, approx=True)       # (1, HW)
                sm_list.append(sm_n)
                dLds_n = sw_n * (sm_n - ld_n)                          # (1, HW)
                # J^T dLds contribution: (1,HW) @ (HW,D) on the MXU.
                wg = wg + jnp.dot(dLds_n.astype(f_dtype), f_n,
                                  preferred_element_type=jnp.float32)
        return data, sm_list, wg

    for it in range(num_iter):                       # static unroll of steps
        data, sm_list, wg_raw = image_pass(w, compute_grad=True)

        # KL loss at the *current* parameter (per-sequence contribution;
        # summed over sequences and divided by S outside the kernel).
        loss = data + reg_w * jnp.sum(w * w, axis=-1, keepdims=True)   # (1, 1)
        loss_ref[0, it] = loss

        wg = wg_raw + reg_w * w                      # weights_grad (1, D)
        wg_lo = wg.astype(f_dtype)

        # Gauss-Newton curvature g^T H g accumulated over images.
        ghg = jnp.zeros((1, 1), jnp.float32)
        for n in range(N):
            f_n  = f_ref[0, n]
            sw_n = sw[n:n + 1, :]
            # scores_grad_n = J wg   (MXU: (1,D) x (HW,D)^T)
            sg_n = jax.lax.dot_general(
                wg_lo, f_n, (((1,), (1,)), ((), ())),
                preferred_element_type=jnp.float32)                    # (1, HW)
            sm_n = sm_list[n]
            sm_sg = sm_n * sg_n
            hes_sg = (sm_sg
                      - sm_n * jnp.sum(sm_sg, axis=-1, keepdims=True)
                      + hes_reg * sg_n)
            # per-(image, sequence) clamp(min=0), exactly as the reference's
            # `.sum(dim=2).clamp(min=0)` before the sample-weight sum.
            ghg_n = jnp.maximum(
                jnp.sum(sg_n * hes_sg, axis=-1, keepdims=True), 0.0)   # (1, 1)
            ghg = ghg + sw_n * ghg_n

        gg = jnp.sum(wg * wg, axis=-1, keepdims=True)                  # (1, 1)
        alpha_den = jnp.maximum(ghg + reg_w * gg + sl_reg * gg, 1e-8)
        alpha = step_len * gg / alpha_den
        w = w - alpha * wg
        w_iter_ref[0, it] = w

    # Trailing loss-only evaluation at the final parameter
    # (no wasted Gauss-Newton step or discarded parameter write).
    data, _, _ = image_pass(w, compute_grad=False)
    loss = data + reg_w * jnp.sum(w * w, axis=-1, keepdims=True)
    loss_ref[0, num_iter] = loss


def _build_call(S, N, HW, D, num_iter, feat_dtype):
    grid_spec = pltpu.PrefetchScalarGridSpec(
        num_scalar_prefetch=0,
        grid=(S,),
        in_specs=[
            pl.BlockSpec(memory_space=pltpu.MemorySpace.SMEM),          # params (8,)
            pl.BlockSpec((1, N, HW, D), lambda s: (s, 0, 0, 0)),        # features
            pl.BlockSpec((1, 1, D),     lambda s: (s, 0, 0)),           # w0
            pl.BlockSpec((1, N, HW),    lambda s: (s, 0, 0)),           # label_density
            pl.BlockSpec((1, N, 1),     lambda s: (s, 0, 0)),           # sample_weight
        ],
        out_specs=[
            pl.BlockSpec((1, num_iter, 1, D),     lambda s: (s, 0, 0, 0)),  # iterates
            pl.BlockSpec((1, num_iter + 1, 1, 1), lambda s: (s, 0, 0, 0)),  # losses
        ],
    )
    itemsize = jnp.dtype(feat_dtype).itemsize
    flops = int(2 * S * N * HW * D * (3 * num_iter + 1))
    transcendentals = int(S * (num_iter + 1) * N * HW)
    bytes_accessed = int(S * N * HW * D * itemsize + S * N * HW * 4 + S * N * 4
                         + S * D * 4 + S * num_iter * D * 4
                         + S * (num_iter + 1) * 4)
    return pl.pallas_call(
        _kl_sd_fused_kernel,
        out_shape=(jax.ShapeDtypeStruct((S, num_iter, 1, D), jnp.float32),
                   jax.ShapeDtypeStruct((S, num_iter + 1, 1, 1), jnp.float32)),
        grid_spec=grid_spec,
        compiler_params=pltpu.CompilerParams(
            dimension_semantics=("parallel",),   # sequences are independent
            vmem_limit_bytes=32 * 1024 * 1024),  # safe on v5e/v6e/v7x
        cost_estimate=pl.CostEstimate(flops=flops,
                                      transcendentals=transcendentals,
                                      bytes_accessed=bytes_accessed),
    )


def kl_reg_steepest_descent(w0, feat, label_density, sample_weight, reg_weight,
                            num_iter=1, init_step_length=1.0, steplength_reg=0.0,
                            hessian_reg=0.0, softmax_reg=None,
                            features_dtype=jnp.bfloat16):
    """Forward pass of KLRegSteepestDescent (compute_losses=True).

    Returns (meta_parameter, meta_parameter_iterates, losses), matching the
    PyTorch module. All num_iter optimizer steps plus the trailing loss-only
    evaluation run inside a single fused Pallas kernel, so the features are
    read from HBM exactly once.
    """
    S, N, HW, D = feat.shape
    num_iter = int(num_iter)
    if num_iter < 1:
        raise ValueError("num_iter must be >= 1")

    # nn.Parameter(log(init_step_length) * ones(1)); deterministic init.
    step_length_factor = math.exp(math.log(init_step_length))
    exp_reg = 0.0 if softmax_reg is None else math.exp(softmax_reg)
    params = jnp.array([step_length_factor, float(reg_weight),
                        float(steplength_reg), float(hessian_reg),
                        float(exp_reg), 0.0, 0.0, 0.0], dtype=jnp.float32)

    feat_lp = feat.astype(features_dtype)            # halves HBM traffic
    w0_blk = w0.reshape(S, 1, D).astype(jnp.float32)
    ld = label_density.astype(jnp.float32)
    sw = sample_weight.reshape(S, N, 1).astype(jnp.float32)

    call = _build_call(S, N, HW, D, num_iter, features_dtype)
    w_iters, losses_seq = call(params, feat_lp, w0_blk, ld, sw)

    # TODO(synk): detach_length / torch.set_grad_enabled bookkeeping is pure
    # autograd-graph management and has no Pallas equivalent; it is omitted.
    losses_all = jnp.sum(losses_seq[:, :, 0, 0], axis=0) / S     # (num_iter+1,)
    iterates = [w0] + [w_iters[:, i, 0, :] for i in range(num_iter)]
    meta_parameter = iterates[-1]
    losses = [losses_all[i] for i in range(num_iter + 1)]
    return meta_parameter, iterates, losses


if __name__ == "__main__":
    key = jax.random.PRNGKey(0)
    S, N, H, W = 4, 2, 16, 16          # num_sequences, num train images, spatial
    C, fH, fW = 32, 2, 2               # flattened filter size D = 128
    D = C * fH * fW
    HW = H * W

    k1, k2, k3 = jax.random.split(key, 3)
    feat = 0.1 * jax.random.normal(k1, (S, N, HW, D), dtype=jnp.float32)
    w0 = 0.1 * jax.random.normal(k2, (S, D), dtype=jnp.float32)
    label_density = jax.nn.softmax(
        jax.random.normal(k3, (S, N, HW), dtype=jnp.float32), axis=-1)
    sample_weight = jnp.full((S, N, 1), 1.0 / N, dtype=jnp.float32)
    reg_weight = 0.01

    w_final, iterates, losses = kl_reg_steepest_descent(
        w0, feat, label_density, sample_weight, reg_weight,
        num_iter=2, init_step_length=1.0, steplength_reg=0.0,
        hessian_reg=0.0, softmax_reg=None)

    jax.block_until_ready((w_final, iterates, losses))
    print("KERNEL_OK")
</pallas_src>

<mosaic_0001>
module attributes {stable_mosaic.version = 11 : i64} {
  func.func @_kl_sd_fused_kernel(%arg0: i32, %arg1: memref<8xf32, #tpu.memory_space<smem>>, %arg2: memref<1x2x256x128xbf16, #tpu.memory_space<vmem>>, %arg3: memref<1x1x128xf32, #tpu.memory_space<vmem>>, %arg4: memref<1x2x256xf32, #tpu.memory_space<vmem>>, %arg5: memref<1x2x1xf32, #tpu.memory_space<vmem>>, %arg6: memref<1x2x1x128xf32, #tpu.memory_space<vmem>>, %arg7: memref<1x3x1x1xf32, #tpu.memory_space<vmem>>) attributes {dimension_semantics = [#tpu.dimension_semantics<parallel>], iteration_bounds = array<i64: 4>, scalar_prefetch = 0 : i64, scratch_operands = 0 : i64, tpu.core_type = #tpu.core_type<tc>, window_params = [{transform_indices = @transform_0, window_bounds = array<i64: 8>}, {transform_indices = @transform_1, window_bounds = array<i64: 1, 2, 256, 128>}, {transform_indices = @transform_2, window_bounds = array<i64: 1, 1, 128>}, {transform_indices = @transform_3, window_bounds = array<i64: 1, 2, 256>}, {transform_indices = @transform_4, window_bounds = array<i64: 1, 2, 1>}, {transform_indices = @transform_5, window_bounds = array<i64: 1, 2, 1, 128>}, {transform_indices = @transform_6, window_bounds = array<i64: 1, 3, 1, 1>}]} {
    %c0 = arith.constant 0 : index
    %0 = memref.load %arg1[%c0] : memref<8xf32, #tpu.memory_space<smem>>
    %c1 = arith.constant 1 : index
    %1 = memref.load %arg1[%c1] : memref<8xf32, #tpu.memory_space<smem>>
    %c2 = arith.constant 2 : index
    %2 = memref.load %arg1[%c2] : memref<8xf32, #tpu.memory_space<smem>>
    %c3 = arith.constant 3 : index
    %3 = memref.load %arg1[%c3] : memref<8xf32, #tpu.memory_space<smem>>
    %c4 = arith.constant 4 : index
    %4 = memref.load %arg1[%c4] : memref<8xf32, #tpu.memory_space<smem>>
    %c0_0 = arith.constant 0 : index
    %c0_1 = arith.constant 0 : index
    %c0_2 = arith.constant 0 : index
    %5 = vector.load %arg4[%c0_0, %c0_1, %c0_2] : memref<1x2x256xf32, #tpu.memory_space<vmem>>, vector<1x2x256xf32>
    %6 = vector.shape_cast %5 : vector<1x2x256xf32> to vector<2x256xf32>
    %c0_3 = arith.constant 0 : index
    %c0_4 = arith.constant 0 : index
    %c0_5 = arith.constant 0 : index
    %7 = vector.load %arg5[%c0_3, %c0_4, %c0_5] : memref<1x2x1xf32, #tpu.memory_space<vmem>>, vector<1x2x1xf32>
    %8 = vector.shape_cast %7 : vector<1x2x1xf32> to vector<2x1xf32>
    %c0_6 = arith.constant 0 : index
    %c0_7 = arith.constant 0 : index
    %c0_8 = arith.constant 0 : index
    %9 = vector.load %arg3[%c0_6, %c0_7, %c0_8] : memref<1x1x128xf32, #tpu.memory_space<vmem>>, vector<1x1x128xf32>
    %10 = vector.shape_cast %9 : vector<1x1x128xf32> to vector<1x128xf32>
    %11 = arith.truncf %10 : vector<1x128xf32> to vector<1x128xbf16>
    %cst = arith.constant 0.000000e+00 : f32
    %12 = vector.broadcast %cst : f32 to vector<1x1xf32>
    %cst_9 = arith.constant 0.000000e+00 : f32
    %13 = vector.broadcast %cst_9 : f32 to vector<1x128xf32>
    %c0_10 = arith.constant 0 : index
    %c0_11 = arith.constant 0 : index
    %c0_12 = arith.constant 0 : index
    %c0_13 = arith.constant 0 : index
    %14 = vector.load %arg2[%c0_10, %c0_11, %c0_12, %c0_13] : memref<1x2x256x128xbf16, #tpu.memory_space<vmem>>, vector<1x1x256x128xbf16>
    %15 = vector.shape_cast %14 : vector<1x1x256x128xbf16> to vector<256x128xbf16>
    %16 = vector.extract_strided_slice %6 {offsets = [0, 0], sizes = [1, 256], strides = [1, 1]} : vector<2x256xf32> to vector<1x256xf32>
    %17 = vector.extract_strided_slice %8 {offsets = [0, 0], sizes = [1, 1], strides = [1, 1]} : vector<2x1xf32> to vector<1x1xf32>
    %cst_14 = arith.constant dense<0.000000e+00> : vector<1x256xf32>
    %18 = tpu.matmul %11, %15, %cst_14 {dimension_numbers = #tpu.dot_dimension_numbers<[1], [1], [0], [0], [0, 0, 1, 0], [], []>} : vector<1x128xbf16>, vector<256x128xbf16>, vector<1x256xf32> -> vector<1x256xf32>
    %cst_15 = arith.constant dense<0xFF800000> : vector<1xf32>
    %19 = vector.multi_reduction <maximumf>, %18, %cst_15 [1] : vector<1x256xf32> to vector<1xf32>
    %20 = vector.shape_cast %19 : vector<1xf32> to vector<1x1xf32>
    %21 = vector.broadcast %20 : vector<1x1xf32> to vector<1x256xf32>
    %22 = arith.subf %18, %21 : vector<1x256xf32>
    %23 = math.exp %22 : vector<1x256xf32>
    %cst_16 = arith.constant dense<0.000000e+00> : vector<1xf32>
    %24 = vector.multi_reduction <add>, %23, %cst_16 [1] : vector<1x256xf32> to vector<1xf32>
    %25 = vector.shape_cast %24 : vector<1xf32> to vector<1x1xf32>
    %cst_17 = arith.constant 0.000000e+00 : f32
    %26 = vector.broadcast %cst_17 : f32 to vector<1x1xf32>
    %27 = arith.subf %26, %20 : vector<1x1xf32>
    %28 = math.exp %27 : vector<1x1xf32>
    %29 = vector.broadcast %4 : f32 to vector<1x1xf32>
    %30 = arith.mulf %29, %28 : vector<1x1xf32>
    %31 = arith.addf %25, %30 : vector<1x1xf32>
    %32 = math.log %31 : vector<1x1xf32>
    %33 = arith.addf %20, %32 : vector<1x1xf32>
    %34 = arith.mulf %16, %18 : vector<1x256xf32>
    %cst_18 = arith.constant dense<0.000000e+00> : vector<1xf32>
    %35 = vector.multi_reduction <add>, %34, %cst_18 [1] : vector<1x256xf32> to vector<1xf32>
    %36 = vector.shape_cast %35 : vector<1xf32> to vector<1x1xf32>
    %37 = arith.subf %33, %36 : vector<1x1xf32>
    %38 = arith.mulf %17, %37 : vector<1x1xf32>
    %39 = arith.addf %12, %38 : vector<1x1xf32>
    %40 = tpu.reciprocal %31 {approx = true} : vector<1x1xf32> -> vector<1x1xf32>
    %41 = vector.broadcast %40 : vector<1x1xf32> to vector<1x256xf32>
    %42 = arith.mulf %23, %41 : vector<1x256xf32>
    %43 = arith.subf %42, %16 : vector<1x256xf32>
    %44 = vector.broadcast %17 : vector<1x1xf32> to vector<1x256xf32>
    %45 = arith.mulf %44, %43 : vector<1x256xf32>
    %46 = arith.truncf %45 : vector<1x256xf32> to vector<1x256xbf16>
    %cst_19 = arith.constant dense<0.000000e+00> : vector<1x128xf32>
    %47 = tpu.matmul %46, %15, %cst_19 {dimension_numbers = #tpu.dot_dimension_numbers<[1], [0], [0], [1], [0, 0, 1, 1], [], []>} : vector<1x256xbf16>, vector<256x128xbf16>, vector<1x128xf32> -> vector<1x128xf32>
    %48 = arith.addf %13, %47 : vector<1x128xf32>
    %c0_20 = arith.constant 0 : index
    %c1_21 = arith.constant 1 : index
    %c0_22 = arith.constant 0 : index
    %c0_23 = arith.constant 0 : index
    %49 = vector.load %arg2[%c0_20, %c1_21, %c0_22, %c0_23] : memref<1x2x256x128xbf16, #tpu.memory_space<vmem>>, vector<1x1x256x128xbf16>
    %50 = vector.shape_cast %49 : vector<1x1x256x128xbf16> to vector<256x128xbf16>
    %51 = vector.extract_strided_slice %6 {offsets = [1, 0], sizes = [1, 256], strides = [1, 1]} : vector<2x256xf32> to vector<1x256xf32>
    %52 = vector.extract_strided_slice %8 {offsets = [1, 0], sizes = [1, 1], strides = [1, 1]} : vector<2x1xf32> to vector<1x1xf32>
    %cst_24 = arith.constant dense<0.000000e+00> : vector<1x256xf32>
    %53 = tpu.matmul %11, %50, %cst_24 {dimension_numbers = #tpu.dot_dimension_numbers<[1], [1], [0], [0], [0, 0, 1, 0], [], []>} : vector<1x128xbf16>, vector<256x128xbf16>, vector<1x256xf32> -> vector<1x256xf32>
    %cst_25 = arith.constant dense<0xFF800000> : vector<1xf32>
    %54 = vector.multi_reduction <maximumf>, %53, %cst_25 [1] : vector<1x256xf32> to vector<1xf32>
    %55 = vector.shape_cast %54 : vector<1xf32> to vector<1x1xf32>
    %56 = vector.broadcast %55 : vector<1x1xf32> to vector<1x256xf32>
    %57 = arith.subf %53, %56 : vector<1x256xf32>
    %58 = math.exp %57 : vector<1x256xf32>
    %cst_26 = arith.constant dense<0.000000e+00> : vector<1xf32>
    %59 = vector.multi_reduction <add>, %58, %cst_26 [1] : vector<1x256xf32> to vector<1xf32>
    %60 = vector.shape_cast %59 : vector<1xf32> to vector<1x1xf32>
    %cst_27 = arith.constant 0.000000e+00 : f32
    %61 = vector.broadcast %cst_27 : f32 to vector<1x1xf32>
    %62 = arith.subf %61, %55 : vector<1x1xf32>
    %63 = math.exp %62 : vector<1x1xf32>
    %64 = vector.broadcast %4 : f32 to vector<1x1xf32>
    %65 = arith.mulf %64, %63 : vector<1x1xf32>
    %66 = arith.addf %60, %65 : vector<1x1xf32>
    %67 = math.log %66 : vector<1x1xf32>
    %68 = arith.addf %55, %67 : vector<1x1xf32>
    %69 = arith.mulf %51, %53 : vector<1x256xf32>
    %cst_28 = arith.constant dense<0.000000e+00> : vector<1xf32>
    %70 = vector.multi_reduction <add>, %69, %cst_28 [1] : vector<1x256xf32> to vector<1xf32>
    %71 = vector.shape_cast %70 : vector<1xf32> to vector<1x1xf32>
    %72 = arith.subf %68, %71 : vector<1x1xf32>
    %73 = arith.mulf %52, %72 : vector<1x1xf32>
    %74 = arith.addf %39, %73 : vector<1x1xf32>
    %75 = tpu.reciprocal %66 {approx = true} : vector<1x1xf32> -> vector<1x1xf32>
    %76 = vector.broadcast %75 : vector<1x1xf32> to vector<1x256xf32>
    %77 = arith.mulf %58, %76 : vector<1x256xf32>
    %78 = arith.subf %77, %51 : vector<1x256xf32>
    %79 = vector.broadcast %52 : vector<1x1xf32> to vector<1x256xf32>
    %80 = arith.mulf %79, %78 : vector<1x256xf32>
    %81 = arith.truncf %80 : vector<1x256xf32> to vector<1x256xbf16>
    %cst_29 = arith.constant dense<0.000000e+00> : vector<1x128xf32>
    %82 = tpu.matmul %81, %50, %cst_29 {dimension_numbers = #tpu.dot_dimension_numbers<[1], [0], [0], [1], [0, 0, 1, 1], [], []>} : vector<1x256xbf16>, vector<256x128xbf16>, vector<1x128xf32> -> vector<1x128xf32>
    %83 = arith.addf %48, %82 : vector<1x128xf32>
    %84 = arith.mulf %10, %10 : vector<1x128xf32>
    %cst_30 = arith.constant dense<0.000000e+00> : vector<1xf32>
    %85 = vector.multi_reduction <add>, %84, %cst_30 [1] : vector<1x128xf32> to vector<1xf32>
    %86 = vector.shape_cast %85 : vector<1xf32> to vector<1x1xf32>
    %87 = vector.broadcast %1 : f32 to vector<1x1xf32>
    %88 = arith.mulf %87, %86 : vector<1x1xf32>
    %89 = arith.addf %74, %88 : vector<1x1xf32>
    %c0_31 = arith.constant 0 : index
    %c0_32 = arith.constant 0 : index
    %c0_33 = arith.constant 0 : index
    %c0_34 = arith.constant 0 : index
    %90 = vector.load %arg7[%c0_31, %c0_32, %c0_33, %c0_34] : memref<1x3x1x1xf32, #tpu.memory_space<vmem>>, vector<1x1x1x1xf32>
    %91 = vector.shape_cast %90 : vector<1x1x1x1xf32> to vector<1x1xf32>
    %92 = vector.shape_cast %89 : vector<1x1xf32> to vector<1x1x1x1xf32>
    tpu.vector_store %arg7[%c0_31, %c0_32, %c0_33, %c0_34], %92 {strides = array<i32>} : memref<1x3x1x1xf32, #tpu.memory_space<vmem>>, vector<1x1x1x1xf32>,
    %93 = vector.broadcast %1 : f32 to vector<1x128xf32>
    %94 = arith.mulf %93, %10 : vector<1x128xf32>
    %95 = arith.addf %83, %94 : vector<1x128xf32>
    %96 = arith.truncf %95 : vector<1x128xf32> to vector<1x128xbf16>
    %cst_35 = arith.constant 0.000000e+00 : f32
    %97 = vector.broadcast %cst_35 : f32 to vector<1x1xf32>
    %c0_36 = arith.constant 0 : index
    %c0_37 = arith.constant 0 : index
    %c0_38 = arith.constant 0 : index
    %c0_39 = arith.constant 0 : index
    %98 = vector.load %arg2[%c0_36, %c0_37, %c0_38, %c0_39] : memref<1x2x256x128xbf16, #tpu.memory_space<vmem>>, vector<1x1x256x128xbf16>
    %99 = vector.shape_cast %98 : vector<1x1x256x128xbf16> to vector<256x128xbf16>
    %100 = vector.extract_strided_slice %8 {offsets = [0, 0], sizes = [1, 1], strides = [1, 1]} : vector<2x1xf32> to vector<1x1xf32>
    %cst_40 = arith.constant dense<0.000000e+00> : vector<1x256xf32>
    %101 = tpu.matmul %96, %99, %cst_40 {dimension_numbers = #tpu.dot_dimension_numbers<[1], [1], [0], [0], [0, 0, 1, 0], [], []>} : vector<1x128xbf16>, vector<256x128xbf16>, vector<1x256xf32> -> vector<1x256xf32>
    %102 = arith.mulf %42, %101 : vector<1x256xf32>
    %cst_41 = arith.constant dense<0.000000e+00> : vector<1xf32>
    %103 = vector.multi_reduction <add>, %102, %cst_41 [1] : vector<1x256xf32> to vector<1xf32>
    %104 = vector.shape_cast %103 : vector<1xf32> to vector<1x1xf32>
    %105 = vector.broadcast %104 : vector<1x1xf32> to vector<1x256xf32>
    %106 = arith.mulf %42, %105 : vector<1x256xf32>
    %107 = arith.subf %102, %106 : vector<1x256xf32>
    %108 = vector.broadcast %3 : f32 to vector<1x256xf32>
    %109 = arith.mulf %108, %101 : vector<1x256xf32>
    %110 = arith.addf %107, %109 : vector<1x256xf32>
    %111 = arith.mulf %101, %110 : vector<1x256xf32>
    %cst_42 = arith.constant dense<0.000000e+00> : vector<1xf32>
    %112 = vector.multi_reduction <add>, %111, %cst_42 [1] : vector<1x256xf32> to vector<1xf32>
    %113 = vector.shape_cast %112 : vector<1xf32> to vector<1x1xf32>
    %cst_43 = arith.constant 0.000000e+00 : f32
    %114 = vector.broadcast %cst_43 : f32 to vector<1x1xf32>
    %115 = arith.maximumf %113, %114 : vector<1x1xf32>
    %116 = arith.mulf %100, %115 : vector<1x1xf32>
    %117 = arith.addf %97, %116 : vector<1x1xf32>
    %c0_44 = arith.constant 0 : index
    %c1_45 = arith.constant 1 : index
    %c0_46 = arith.constant 0 : index
    %c0_47 = arith.constant 0 : index
    %118 = vector.load %arg2[%c0_44, %c1_45, %c0_46, %c0_47] : memref<1x2x256x128xbf16, #tpu.memory_space<vmem>>, vector<1x1x256x128xbf16>
    %119 = vector.shape_cast %118 : vector<1x1x256x128xbf16> to vector<256x128xbf16>
    %120 = vector.extract_strided_slice %8 {offsets = [1, 0], sizes = [1, 1], strides = [1, 1]} : vector<2x1xf32> to vector<1x1xf32>
    %cst_48 = arith.constant dense<0.000000e+00> : vector<1x256xf32>
    %121 = tpu.matmul %96, %119, %cst_48 {dimension_numbers = #tpu.dot_dimension_numbers<[1], [1], [0], [0], [0, 0, 1, 0], [], []>} : vector<1x128xbf16>, vector<256x128xbf16>, vector<1x256xf32> -> vector<1x256xf32>
    %122 = arith.mulf %77, %121 : vector<1x256xf32>
    %cst_49 = arith.constant dense<0.000000e+00> : vector<1xf32>
    %123 = vector.multi_reduction <add>, %122, %cst_49 [1] : vector<1x256xf32> to vector<1xf32>
    %124 = vector.shape_cast %123 : vector<1xf32> to vector<1x1xf32>
    %125 = vector.broadcast %124 : vector<1x1xf32> to vector<1x256xf32>
    %126 = arith.mulf %77, %125 : vector<1x256xf32>
    %127 = arith.subf %122, %126 : vector<1x256xf32>
    %128 = vector.broadcast %3 : f32 to vector<1x256xf32>
    %129 = arith.mulf %128, %121 : vector<1x256xf32>
    %130 = arith.addf %127, %129 : vector<1x256xf32>
    %131 = arith.mulf %121, %130 : vector<1x256xf32>
    %cst_50 = arith.constant dense<0.000000e+00> : vector<1xf32>
    %132 = vector.multi_reduction <add>, %131, %cst_50 [1] : vector<1x256xf32> to vector<1xf32>
    %133 = vector.shape_cast %132 : vector<1xf32> to vector<1x1xf32>
    %cst_51 = arith.constant 0.000000e+00 : f32
    %134 = vector.broadcast %cst_51 : f32 to vector<1x1xf32>
    %135 = arith.maximumf %133, %134 : vector<1x1xf32>
    %136 = arith.mulf %120, %135 : vector<1x1xf32>
    %137 = arith.addf %117, %136 : vector<1x1xf32>
    %138 = arith.mulf %95, %95 : vector<1x128xf32>
    %cst_52 = arith.constant dense<0.000000e+00> : vector<1xf32>
    %139 = vector.multi_reduction <add>, %138, %cst_52 [1] : vector<1x128xf32> to vector<1xf32>
    %140 = vector.shape_cast %139 : vector<1xf32> to vector<1x1xf32>
    %141 = vector.broadcast %1 : f32 to vector<1x1xf32>
    %142 = arith.mulf %141, %140 : vector<1x1xf32>
    %143 = arith.addf %137, %142 : vector<1x1xf32>
    %144 = vector.broadcast %2 : f32 to vector<1x1xf32>
    %145 = arith.mulf %144, %140 : vector<1x1xf32>
    %146 = arith.addf %143, %145 : vector<1x1xf32>
    %cst_53 = arith.constant 9.99999993E-9 : f32
    %147 = vector.broadcast %cst_53 : f32 to vector<1x1xf32>
    %148 = arith.maximumf %146, %147 : vector<1x1xf32>
    %149 = vector.broadcast %0 : f32 to vector<1x1xf32>
    %150 = arith.mulf %149, %140 : vector<1x1xf32>
    %151 = arith.divf %150, %148 : vector<1x1xf32>
    %152 = vector.broadcast %151 : vector<1x1xf32> to vector<1x128xf32>
    %153 = arith.mulf %152, %95 : vector<1x128xf32>
    %154 = arith.subf %10, %153 : vector<1x128xf32>
    %c0_54 = arith.constant 0 : index
    %c0_55 = arith.constant 0 : index
    %c0_56 = arith.constant 0 : index
    %c0_57 = arith.constant 0 : index
    %155 = vector.load %arg6[%c0_54, %c0_55, %c0_56, %c0_57] : memref<1x2x1x128xf32, #tpu.memory_space<vmem>>, vector<1x1x1x128xf32>
    %156 = vector.shape_cast %155 : vector<1x1x1x128xf32> to vector<1x128xf32>
    %157 = vector.shape_cast %154 : vector<1x128xf32> to vector<1x1x1x128xf32>
    tpu.vector_store %arg6[%c0_54, %c0_55, %c0_56, %c0_57], %157 {strides = array<i32>} : memref<1x2x1x128xf32, #tpu.memory_space<vmem>>, vector<1x1x1x128xf32>,
    %158 = arith.truncf %154 : vector<1x128xf32> to vector<1x128xbf16>
    %cst_58 = arith.constant 0.000000e+00 : f32
    %159 = vector.broadcast %cst_58 : f32 to vector<1x1xf32>
    %cst_59 = arith.constant 0.000000e+00 : f32
    %160 = vector.broadcast %cst_59 : f32 to vector<1x128xf32>
    %c0_60 = arith.constant 0 : index
    %c0_61 = arith.constant 0 : index
    %c0_62 = arith.constant 0 : index
    %c0_63 = arith.constant 0 : index
    %161 = vector.load %arg2[%c0_60, %c0_61, %c0_62, %c0_63] : memref<1x2x256x128xbf16, #tpu.memory_space<vmem>>, vector<1x1x256x128xbf16>
    %162 = vector.shape_cast %161 : vector<1x1x256x128xbf16> to vector<256x128xbf16>
    %163 = vector.extract_strided_slice %6 {offsets = [0, 0], sizes = [1, 256], strides = [1, 1]} : vector<2x256xf32> to vector<1x256xf32>
    %164 = vector.extract_strided_slice %8 {offsets = [0, 0], sizes = [1, 1], strides = [1, 1]} : vector<2x1xf32> to vector<1x1xf32>
    %cst_64 = arith.constant dense<0.000000e+00> : vector<1x256xf32>
    %165 = tpu.matmul %158, %162, %cst_64 {dimension_numbers = #tpu.dot_dimension_numbers<[1], [1], [0], [0], [0, 0, 1, 0], [], []>} : vector<1x128xbf16>, vector<256x128xbf16>, vector<1x256xf32> -> vector<1x256xf32>
    %cst_65 = arith.constant dense<0xFF800000> : vector<1xf32>
    %166 = vector.multi_reduction <maximumf>, %165, %cst_65 [1] : vector<1x256xf32> to vector<1xf32>
    %167 = vector.shape_cast %166 : vector<1xf32> to vector<1x1xf32>
    %168 = vector.broadcast %167 : vector<1x1xf32> to vector<1x256xf32>
    %169 = arith.subf %165, %168 : vector<1x256xf32>
    %170 = math.exp %169 : vector<1x256xf32>
    %cst_66 = arith.constant dense<0.000000e+00> : vector<1xf32>
    %171 = vector.multi_reduction <add>, %170, %cst_66 [1] : vector<1x256xf32> to vector<1xf32>
    %172 = vector.shape_cast %171 : vector<1xf32> to vector<1x1xf32>
    %cst_67 = arith.constant 0.000000e+00 : f32
    %173 = vector.broadcast %cst_67 : f32 to vector<1x1xf32>
    %174 = arith.subf %173, %167 : vector<1x1xf32>
    %175 = math.exp %174 : vector<1x1xf32>
    %176 = vector.broadcast %4 : f32 to vector<1x1xf32>
    %177 = arith.mulf %176, %175 : vector<1x1xf32>
    %178 = arith.addf %172, %177 : vector<1x1xf32>
    %179 = math.log %178 : vector<1x1xf32>
    %180 = arith.addf %167, %179 : vector<1x1xf32>
    %181 = arith.mulf %163, %165 : vector<1x256xf32>
    %cst_68 = arith.constant dense<0.000000e+00> : vector<1xf32>
    %182 = vector.multi_reduction <add>, %181, %cst_68 [1] : vector<1x256xf32> to vector<1xf32>
    %183 = vector.shape_cast %182 : vector<1xf32> to vector<1x1xf32>
    %184 = arith.subf %180, %183 : vector<1x1xf32>
    %185 = arith.mulf %164, %184 : vector<1x1xf32>
    %186 = arith.addf %159, %185 : vector<1x1xf32>
    %187 = tpu.reciprocal %178 {approx = true} : vector<1x1xf32> -> vector<1x1xf32>
    %188 = vector.broadcast %187 : vector<1x1xf32> to vector<1x256xf32>
    %189 = arith.mulf %170, %188 : vector<1x256xf32>
    %190 = arith.subf %189, %163 : vector<1x256xf32>
    %191 = vector.broadcast %164 : vector<1x1xf32> to vector<1x256xf32>
    %192 = arith.mulf %191, %190 : vector<1x256xf32>
    %193 = arith.truncf %192 : vector<1x256xf32> to vector<1x256xbf16>
    %cst_69 = arith.constant dense<0.000000e+00> : vector<1x128xf32>
    %194 = tpu.matmul %193, %162, %cst_69 {dimension_numbers = #tpu.dot_dimension_numbers<[1], [0], [0], [1], [0, 0, 1, 1], [], []>} : vector<1x256xbf16>, vector<256x128xbf16>, vector<1x128xf32> -> vector<1x128xf32>
    %195 = arith.addf %160, %194 : vector<1x128xf32>
    %c0_70 = arith.constant 0 : index
    %c1_71 = arith.constant 1 : index
    %c0_72 = arith.constant 0 : index
    %c0_73 = arith.constant 0 : index
    %196 = vector.load %arg2[%c0_70, %c1_71, %c0_72, %c0_73] : memref<1x2x256x128xbf16, #tpu.memory_space<vmem>>, vector<1x1x256x128xbf16>
    %197 = vector.shape_cast %196 : vector<1x1x256x128xbf16> to vector<256x128xbf16>
    %198 = vector.extract_strided_slice %6 {offsets = [1, 0], sizes = [1, 256], strides = [1, 1]} : vector<2x256xf32> to vector<1x256xf32>
    %199 = vector.extract_strided_slice %8 {offsets = [1, 0], sizes = [1, 1], strides = [1, 1]} : vector<2x1xf32> to vector<1x1xf32>
    %cst_74 = arith.constant dense<0.000000e+00> : vector<1x256xf32>
    %200 = tpu.matmul %158, %197, %cst_74 {dimension_numbers = #tpu.dot_dimension_numbers<[1], [1], [0], [0], [0, 0, 1, 0], [], []>} : vector<1x128xbf16>, vector<256x128xbf16>, vector<1x256xf32> -> vector<1x256xf32>
    %cst_75 = arith.constant dense<0xFF800000> : vector<1xf32>
    %201 = vector.multi_reduction <maximumf>, %200, %cst_75 [1] : vector<1x256xf32> to vector<1xf32>
    %202 = vector.shape_cast %201 : vector<1xf32> to vector<1x1xf32>
    %203 = vector.broadcast %202 : vector<1x1xf32> to vector<1x256xf32>
    %204 = arith.subf %200, %203 : vector<1x256xf32>
    %205 = math.exp %204 : vector<1x256xf32>
    %cst_76 = arith.constant dense<0.000000e+00> : vector<1xf32>
    %206 = vector.multi_reduction <add>, %205, %cst_76 [1] : vector<1x256xf32> to vector<1xf32>
    %207 = vector.shape_cast %206 : vector<1xf32> to vector<1x1xf32>
    %cst_77 = arith.constant 0.000000e+00 : f32
    %208 = vector.broadcast %cst_77 : f32 to vector<1x1xf32>
    %209 = arith.subf %208, %202 : vector<1x1xf32>
    %210 = math.exp %209 : vector<1x1xf32>
    %211 = vector.broadcast %4 : f32 to vector<1x1xf32>
    %212 = arith.mulf %211, %210 : vector<1x1xf32>
    %213 = arith.addf %207, %212 : vector<1x1xf32>
    %214 = math.log %213 : vector<1x1xf32>
    %215 = arith.addf %202, %214 : vector<1x1xf32>
    %216 = arith.mulf %198, %200 : vector<1x256xf32>
    %cst_78 = arith.constant dense<0.000000e+00> : vector<1xf32>
    %217 = vector.multi_reduction <add>, %216, %cst_78 [1] : vector<1x256xf32> to vector<1xf32>
    %218 = vector.shape_cast %217 : vector<1xf32> to vector<1x1xf32>
    %219 = arith.subf %215, %218 : vector<1x1xf32>
    %220 = arith.mulf %199, %219 : vector<1x1xf32>
    %221 = arith.addf %186, %220 : vector<1x1xf32>
    %222 = tpu.reciprocal %213 {approx = true} : vector<1x1xf32> -> vector<1x1xf32>
    %223 = vector.broadcast %222 : vector<1x1xf32> to vector<1x256xf32>
    %224 = arith.mulf %205, %223 : vector<1x256xf32>
    %225 = arith.subf %224, %198 : vector<1x256xf32>
    %226 = vector.broadcast %199 : vector<1x1xf32> to vector<1x256xf32>
    %227 = arith.mulf %226, %225 : vector<1x256xf32>
    %228 = arith.truncf %227 : vector<1x256xf32> to vector<1x256xbf16>
    %cst_79 = arith.constant dense<0.000000e+00> : vector<1x128xf32>
    %229 = tpu.matmul %228, %197, %cst_79 {dimension_numbers = #tpu.dot_dimension_numbers<[1], [0], [0], [1], [0, 0, 1, 1], [], []>} : vector<1x256xbf16>, vector<256x128xbf16>, vector<1x128xf32> -> vector<1x128xf32>
    %230 = arith.addf %195, %229 : vector<1x128xf32>
    %231 = arith.mulf %154, %154 : vector<1x128xf32>
    %cst_80 = arith.constant dense<0.000000e+00> : vector<1xf32>
    %232 = vector.multi_reduction <add>, %231, %cst_80 [1] : vector<1x128xf32> to vector<1xf32>
    %233 = vector.shape_cast %232 : vector<1xf32> to vector<1x1xf32>
    %234 = vector.broadcast %1 : f32 to vector<1x1xf32>
    %235 = arith.mulf %234, %233 : vector<1x1xf32>
    %236 = arith.addf %221, %235 : vector<1x1xf32>
    %c0_81 = arith.constant 0 : index
    %c1_82 = arith.constant 1 : index
    %c0_83 = arith.constant 0 : index
    %c0_84 = arith.constant 0 : index
    %237 = vector.load %arg7[%c0_81, %c1_82, %c0_83, %c0_84] : memref<1x3x1x1xf32, #tpu.memory_space<vmem>>, vector<1x1x1x1xf32>
    %238 = vector.shape_cast %237 : vector<1x1x1x1xf32> to vector<1x1xf32>
    %239 = vector.shape_cast %236 : vector<1x1xf32> to vector<1x1x1x1xf32>
    tpu.vector_store %arg7[%c0_81, %c1_82, %c0_83, %c0_84], %239 {strides = array<i32>} : memref<1x3x1x1xf32, #tpu.memory_space<vmem>>, vector<1x1x1x1xf32>,
    %240 = vector.broadcast %1 : f32 to vector<1x128xf32>
    %241 = arith.mulf %240, %154 : vector<1x128xf32>
    %242 = arith.addf %230, %241 : vector<1x128xf32>
    %243 = arith.truncf %242 : vector<1x128xf32> to vector<1x128xbf16>
    %cst_85 = arith.constant 0.000000e+00 : f32
    %244 = vector.broadcast %cst_85 : f32 to vector<1x1xf32>
    %c0_86 = arith.constant 0 : index
    %c0_87 = arith.constant 0 : index
    %c0_88 = arith.constant 0 : index
    %c0_89 = arith.constant 0 : index
    %245 = vector.load %arg2[%c0_86, %c0_87, %c0_88, %c0_89] : memref<1x2x256x128xbf16, #tpu.memory_space<vmem>>, vector<1x1x256x128xbf16>
    %246 = vector.shape_cast %245 : vector<1x1x256x128xbf16> to vector<256x128xbf16>
    %247 = vector.extract_strided_slice %8 {offsets = [0, 0], sizes = [1, 1], strides = [1, 1]} : vector<2x1xf32> to vector<1x1xf32>
    %cst_90 = arith.constant dense<0.000000e+00> : vector<1x256xf32>
    %248 = tpu.matmul %243, %246, %cst_90 {dimension_numbers = #tpu.dot_dimension_numbers<[1], [1], [0], [0], [0, 0, 1, 0], [], []>} : vector<1x128xbf16>, vector<256x128xbf16>, vector<1x256xf32> -> vector<1x256xf32>
    %249 = arith.mulf %189, %248 : vector<1x256xf32>
    %cst_91 = arith.constant dense<0.000000e+00> : vector<1xf32>
    %250 = vector.multi_reduction <add>, %249, %cst_91 [1] : vector<1x256xf32> to vector<1xf32>
    %251 = vector.shape_cast %250 : vector<1xf32> to vector<1x1xf32>
    %252 = vector.broadcast %251 : vector<1x1xf32> to vector<1x256xf32>
    %253 = arith.mulf %189, %252 : vector<1x256xf32>
    %254 = arith.subf %249, %253 : vector<1x256xf32>
    %255 = vector.broadcast %3 : f32 to vector<1x256xf32>
    %256 = arith.mulf %255, %248 : vector<1x256xf32>
    %257 = arith.addf %254, %256 : vector<1x256xf32>
    %258 = arith.mulf %248, %257 : vector<1x256xf32>
    %cst_92 = arith.constant dense<0.000000e+00> : vector<1xf32>
    %259 = vector.multi_reduction <add>, %258, %cst_92 [1] : vector<1x256xf32> to vector<1xf32>
    %260 = vector.shape_cast %259 : vector<1xf32> to vector<1x1xf32>
    %cst_93 = arith.constant 0.000000e+00 : f32
    %261 = vector.broadcast %cst_93 : f32 to vector<1x1xf32>
    %262 = arith.maximumf %260, %261 : vector<1x1xf32>
    %263 = arith.mulf %247, %262 : vector<1x1xf32>
    %264 = arith.addf %244, %263 : vector<1x1xf32>
    %c0_94 = arith.constant 0 : index
    %c1_95 = arith.constant 1 : index
    %c0_96 = arith.constant 0 : index
    %c0_97 = arith.constant 0 : index
    %265 = vector.load %arg2[%c0_94, %c1_95, %c0_96, %c0_97] : memref<1x2x256x128xbf16, #tpu.memory_space<vmem>>, vector<1x1x256x128xbf16>
    %266 = vector.shape_cast %265 : vector<1x1x256x128xbf16> to vector<256x128xbf16>
    %267 = vector.extract_strided_slice %8 {offsets = [1, 0], sizes = [1, 1], strides = [1, 1]} : vector<2x1xf32> to vector<1x1xf32>
    %cst_98 = arith.constant dense<0.000000e+00> : vector<1x256xf32>
    %268 = tpu.matmul %243, %266, %cst_98 {dimension_numbers = #tpu.dot_dimension_numbers<[1], [1], [0], [0], [0, 0, 1, 0], [], []>} : vector<1x128xbf16>, vector<256x128xbf16>, vector<1x256xf32> -> vector<1x256xf32>
    %269 = arith.mulf %224, %268 : vector<1x256xf32>
    %cst_99 = arith.constant dense<0.000000e+00> : vector<1xf32>
    %270 = vector.multi_reduction <add>, %269, %cst_99 [1] : vector<1x256xf32> to vector<1xf32>
    %271 = vector.shape_cast %270 : vector<1xf32> to vector<1x1xf32>
    %272 = vector.broadcast %271 : vector<1x1xf32> to vector<1x256xf32>
    %273 = arith.mulf %224, %272 : vector<1x256xf32>
    %274 = arith.subf %269, %273 : vector<1x256xf32>
    %275 = vector.broadcast %3 : f32 to vector<1x256xf32>
    %276 = arith.mulf %275, %268 : vector<1x256xf32>
    %277 = arith.addf %274, %276 : vector<1x256xf32>
    %278 = arith.mulf %268, %277 : vector<1x256xf32>
    %cst_100 = arith.constant dense<0.000000e+00> : vector<1xf32>
    %279 = vector.multi_reduction <add>, %278, %cst_100 [1] : vector<1x256xf32> to vector<1xf32>
    %280 = vector.shape_cast %279 : vector<1xf32> to vector<1x1xf32>
    %cst_101 = arith.constant 0.000000e+00 : f32
    %281 = vector.broadcast %cst_101 : f32 to vector<1x1xf32>
    %282 = arith.maximumf %280, %281 : vector<1x1xf32>
    %283 = arith.mulf %267, %282 : vector<1x1xf32>
    %284 = arith.addf %264, %283 : vector<1x1xf32>
    %285 = arith.mulf %242, %242 : vector<1x128xf32>
    %cst_102 = arith.constant dense<0.000000e+00> : vector<1xf32>
    %286 = vector.multi_reduction <add>, %285, %cst_102 [1] : vector<1x128xf32> to vector<1xf32>
    %287 = vector.shape_cast %286 : vector<1xf32> to vector<1x1xf32>
    %288 = vector.broadcast %1 : f32 to vector<1x1xf32>
    %289 = arith.mulf %288, %287 : vector<1x1xf32>
    %290 = arith.addf %284, %289 : vector<1x1xf32>
    %291 = vector.broadcast %2 : f32 to vector<1x1xf32>
    %292 = arith.mulf %291, %287 : vector<1x1xf32>
    %293 = arith.addf %290, %292 : vector<1x1xf32>
    %cst_103 = arith.constant 9.99999993E-9 : f32
    %294 = vector.broadcast %cst_103 : f32 to vector<1x1xf32>
    %295 = arith.maximumf %293, %294 : vector<1x1xf32>
    %296 = vector.broadcast %0 : f32 to vector<1x1xf32>
    %297 = arith.mulf %296, %287 : vector<1x1xf32>
    %298 = arith.divf %297, %295 : vector<1x1xf32>
    %299 = vector.broadcast %298 : vector<1x1xf32> to vector<1x128xf32>
    %300 = arith.mulf %299, %242 : vector<1x128xf32>
    %301 = arith.subf %154, %300 : vector<1x128xf32>
    %c0_104 = arith.constant 0 : index
    %c1_105 = arith.constant 1 : index
    %c0_106 = arith.constant 0 : index
    %c0_107 = arith.constant 0 : index
    %302 = vector.load %arg6[%c0_104, %c1_105, %c0_106, %c0_107] : memref<1x2x1x128xf32, #tpu.memory_space<vmem>>, vector<1x1x1x128xf32>
    %303 = vector.shape_cast %302 : vector<1x1x1x128xf32> to vector<1x128xf32>
    %304 = vector.shape_cast %301 : vector<1x128xf32> to vector<1x1x1x128xf32>
    tpu.vector_store %arg6[%c0_104, %c1_105, %c0_106, %c0_107], %304 {strides = array<i32>} : memref<1x2x1x128xf32, #tpu.memory_space<vmem>>, vector<1x1x1x128xf32>,
    %305 = arith.truncf %301 : vector<1x128xf32> to vector<1x128xbf16>
    %cst_108 = arith.constant 0.000000e+00 : f32
    %306 = vector.broadcast %cst_108 : f32 to vector<1x1xf32>
    %c0_109 = arith.constant 0 : index
    %c0_110 = arith.constant 0 : index
    %c0_111 = arith.constant 0 : index
    %c0_112 = arith.constant 0 : index
    %307 = vector.load %arg2[%c0_109, %c0_110, %c0_111, %c0_112] : memref<1x2x256x128xbf16, #tpu.memory_space<vmem>>, vector<1x1x256x128xbf16>
    %308 = vector.shape_cast %307 : vector<1x1x256x128xbf16> to vector<256x128xbf16>
    %309 = vector.extract_strided_slice %6 {offsets = [0, 0], sizes = [1, 256], strides = [1, 1]} : vector<2x256xf32> to vector<1x256xf32>
    %310 = vector.extract_strided_slice %8 {offsets = [0, 0], sizes = [1, 1], strides = [1, 1]} : vector<2x1xf32> to vector<1x1xf32>
    %cst_113 = arith.constant dense<0.000000e+00> : vector<1x256xf32>
    %311 = tpu.matmul %305, %308, %cst_113 {dimension_numbers = #tpu.dot_dimension_numbers<[1], [1], [0], [0], [0, 0, 1, 0], [], []>} : vector<1x128xbf16>, vector<256x128xbf16>, vector<1x256xf32> -> vector<1x256xf32>
    %cst_114 = arith.constant dense<0xFF800000> : vector<1xf32>
    %312 = vector.multi_reduction <maximumf>, %311, %cst_114 [1] : vector<1x256xf32> to vector<1xf32>
    %313 = vector.shape_cast %312 : vector<1xf32> to vector<1x1xf32>
    %314 = vector.broadcast %313 : vector<1x1xf32> to vector<1x256xf32>
    %315 = arith.subf %311, %314 : vector<1x256xf32>
    %316 = math.exp %315 : vector<1x256xf32>
    %cst_115 = arith.constant dense<0.000000e+00> : vector<1xf32>
    %317 = vector.multi_reduction <add>, %316, %cst_115 [1] : vector<1x256xf32> to vector<1xf32>
    %318 = vector.shape_cast %317 : vector<1xf32> to vector<1x1xf32>
    %cst_116 = arith.constant 0.000000e+00 : f32
    %319 = vector.broadcast %cst_116 : f32 to vector<1x1xf32>
    %320 = arith.subf %319, %313 : vector<1x1xf32>
    %321 = math.exp %320 : vector<1x1xf32>
    %322 = vector.broadcast %4 : f32 to vector<1x1xf32>
    %323 = arith.mulf %322, %321 : vector<1x1xf32>
    %324 = arith.addf %318, %323 : vector<1x1xf32>
    %325 = math.log %324 : vector<1x1xf32>
    %326 = arith.addf %313, %325 : vector<1x1xf32>
    %327 = arith.mulf %309, %311 : vector<1x256xf32>
    %cst_117 = arith.constant dense<0.000000e+00> : vector<1xf32>
    %328 = vector.multi_reduction <add>, %327, %cst_117 [1] : vector<1x256xf32> to vector<1xf32>
    %329 = vector.shape_cast %328 : vector<1xf32> to vector<1x1xf32>
    %330 = arith.subf %326, %329 : vector<1x1xf32>
    %331 = arith.mulf %310, %330 : vector<1x1xf32>
    %332 = arith.addf %306, %331 : vector<1x1xf32>
    %c0_118 = arith.constant 0 : index
    %c1_119 = arith.constant 1 : index
    %c0_120 = arith.constant 0 : index
    %c0_121 = arith.constant 0 : index
    %333 = vector.load %arg2[%c0_118, %c1_119, %c0_120, %c0_121] : memref<1x2x256x128xbf16, #tpu.memory_space<vmem>>, vector<1x1x256x128xbf16>
    %334 = vector.shape_cast %333 : vector<1x1x256x128xbf16> to vector<256x128xbf16>
    %335 = vector.extract_strided_slice %6 {offsets = [1, 0], sizes = [1, 256], strides = [1, 1]} : vector<2x256xf32> to vector<1x256xf32>
    %336 = vector.extract_strided_slice %8 {offsets = [1, 0], sizes = [1, 1], strides = [1, 1]} : vector<2x1xf32> to vector<1x1xf32>
    %cst_122 = arith.constant dense<0.000000e+00> : vector<1x256xf32>
    %337 = tpu.matmul %305, %334, %cst_122 {dimension_numbers = #tpu.dot_dimension_numbers<[1], [1], [0], [0], [0, 0, 1, 0], [], []>} : vector<1x128xbf16>, vector<256x128xbf16>, vector<1x256xf32> -> vector<1x256xf32>
    %cst_123 = arith.constant dense<0xFF800000> : vector<1xf32>
    %338 = vector.multi_reduction <maximumf>, %337, %cst_123 [1] : vector<1x256xf32> to vector<1xf32>
    %339 = vector.shape_cast %338 : vector<1xf32> to vector<1x1xf32>
    %340 = vector.broadcast %339 : vector<1x1xf32> to vector<1x256xf32>
    %341 = arith.subf %337, %340 : vector<1x256xf32>
    %342 = math.exp %341 : vector<1x256xf32>
    %cst_124 = arith.constant dense<0.000000e+00> : vector<1xf32>
    %343 = vector.multi_reduction <add>, %342, %cst_124 [1] : vector<1x256xf32> to vector<1xf32>
    %344 = vector.shape_cast %343 : vector<1xf32> to vector<1x1xf32>
    %cst_125 = arith.constant 0.000000e+00 : f32
    %345 = vector.broadcast %cst_125 : f32 to vector<1x1xf32>
    %346 = arith.subf %345, %339 : vector<1x1xf32>
    %347 = math.exp %346 : vector<1x1xf32>
    %348 = vector.broadcast %4 : f32 to vector<1x1xf32>
    %349 = arith.mulf %348, %347 : vector<1x1xf32>
    %350 = arith.addf %344, %349 : vector<1x1xf32>
    %351 = math.log %350 : vector<1x1xf32>
    %352 = arith.addf %339, %351 : vector<1x1xf32>
    %353 = arith.mulf %335, %337 : vector<1x256xf32>
    %cst_126 = arith.constant dense<0.000000e+00> : vector<1xf32>
    %354 = vector.multi_reduction <add>, %353, %cst_126 [1] : vector<1x256xf32> to vector<1xf32>
    %355 = vector.shape_cast %354 : vector<1xf32> to vector<1x1xf32>
    %356 = arith.subf %352, %355 : vector<1x1xf32>
    %357 = arith.mulf %336, %356 : vector<1x1xf32>
    %358 = arith.addf %332, %357 : vector<1x1xf32>
    %359 = arith.mulf %301, %301 : vector<1x128xf32>
    %cst_127 = arith.constant dense<0.000000e+00> : vector<1xf32>
    %360 = vector.multi_reduction <add>, %359, %cst_127 [1] : vector<1x128xf32> to vector<1xf32>
    %361 = vector.shape_cast %360 : vector<1xf32> to vector<1x1xf32>
    %362 = vector.broadcast %1 : f32 to vector<1x1xf32>
    %363 = arith.mulf %362, %361 : vector<1x1xf32>
    %364 = arith.addf %358, %363 : vector<1x1xf32>
    %c0_128 = arith.constant 0 : index
    %c2_129 = arith.constant 2 : index
    %c0_130 = arith.constant 0 : index
    %c0_131 = arith.constant 0 : index
    %365 = vector.load %arg7[%c0_128, %c2_129, %c0_130, %c0_131] : memref<1x3x1x1xf32, #tpu.memory_space<vmem>>, vector<1x1x1x1xf32>
    %366 = vector.shape_cast %365 : vector<1x1x1x1xf32> to vector<1x1xf32>
    %367 = vector.shape_cast %364 : vector<1x1xf32> to vector<1x1x1x1xf32>
    tpu.vector_store %arg7[%c0_128, %c2_129, %c0_130, %c0_131], %367 {strides = array<i32>} : memref<1x3x1x1xf32, #tpu.memory_space<vmem>>, vector<1x1x1x1xf32>,
    return
  }
  func.func @transform_0(%arg0: i32) -> i32 {
    %c0_i32 = arith.constant 0 : i32
    %c0_i32_0 = arith.constant 0 : i32
    return %c0_i32 : i32
  }
  func.func @transform_1(%arg0: i32) -> (i32, i32, i32, i32) {
    %c0_i32 = arith.constant 0 : i32
    %c0_i32_0 = arith.constant 0 : i32
    %c0_i32_1 = arith.constant 0 : i32
    %c0_i32_2 = arith.constant 0 : i32
    return %arg0, %c0_i32, %c0_i32_0, %c0_i32_1 : i32, i32, i32, i32
  }
  func.func @transform_2(%arg0: i32) -> (i32, i32, i32) {
    %c0_i32 = arith.constant 0 : i32
    %c0_i32_0 = arith.constant 0 : i32
    %c0_i32_1 = arith.constant 0 : i32
    return %arg0, %c0_i32, %c0_i32_0 : i32, i32, i32
  }
  func.func @transform_3(%arg0: i32) -> (i32, i32, i32) {
    %c0_i32 = arith.constant 0 : i32
    %c0_i32_0 = arith.constant 0 : i32
    %c0_i32_1 = arith.constant 0 : i32
    return %arg0, %c0_i32, %c0_i32_0 : i32, i32, i32
  }
  func.func @transform_4(%arg0: i32) -> (i32, i32, i32) {
    %c0_i32 = arith.constant 0 : i32
    %c0_i32_0 = arith.constant 0 : i32
    %c0_i32_1 = arith.constant 0 : i32
    return %arg0, %c0_i32, %c0_i32_0 : i32, i32, i32
  }
  func.func @transform_5(%arg0: i32) -> (i32, i32, i32, i32) {
    %c0_i32 = arith.constant 0 : i32
    %c0_i32_0 = arith.constant 0 : i32
    %c0_i32_1 = arith.constant 0 : i32
    %c0_i32_2 = arith.constant 0 : i32
    return %arg0, %c0_i32, %c0_i32_0, %c0_i32_1 : i32, i32, i32, i32
  }
  func.func @transform_6(%arg0: i32) -> (i32, i32, i32, i32) {
    %c0_i32 = arith.constant 0 : i32
    %c0_i32_0 = arith.constant 0 : i32
    %c0_i32_1 = arith.constant 0 : i32
    %c0_i32_2 = arith.constant 0 : i32
    return %arg0, %c0_i32, %c0_i32_0, %c0_i32_1 : i32, i32, i32, i32
  }
}

</mosaic_0001>

<llo_original>
// kernel: tpu_custom_call.1
$region0: #{tpu_custom_call.1}
  #allocation0 [shape = 'u32[]', space=smem, size = 0x4, offset = 0x4, fixed_abs, tag = 'smem constant byte address 0x4 - core index']
  #allocation1 [shape = 'u32[144,128]{1,0:T(1,128)}', space=vmem, size = 0x12000, scoped, tag = 'internal scratch']
  %s0 = inlined_call_operand.vmem [shape: f32[8], index: 0, kind: input, shape index: {}]
  %s1 = inlined_call_operand.hbm [shape: bf16[4,2,256,128], index: 1, kind: input, shape index: {}]
  %s2 = inlined_call_operand.vmem [shape: f32[4,1,128], index: 2, kind: input, shape index: {}]
  %s3 = inlined_call_operand.vmem [shape: f32[4,2,256], index: 3, kind: input, shape index: {}]
  %s4 = inlined_call_operand.vmem [shape: f32[4,2,1], index: 4, kind: input, shape index: {}]
  %s5 = inlined_call_operand.hbm [shape: f32[4,2,1,128], index: 5, kind: output, shape index: {0}]
  %s6 = inlined_call_operand.vmem [shape: f32[4,3,1,1], index: 6, kind: output, shape index: {1}]
  %7 = xla_tuple %s5, %s6
  %s8 = sld [smem:[#allocation0]]
  $region69: #{tpu_custom_call.1} parent=0
    _
  %s10 = ssub.s32 1, %s8
  %s11 = scalar_select 0, %s10, %s8
  $region1: #{tpu_custom_call.1} parent=0
    #allocation2 [shape = 'u8[512]{0}', space=smem, size = 0x200, scoped, tag = 'input window, operand 0, single buffered']
    #allocation3 [shape = 's32[2]{0}', space=sflag, size = 0x8, scoped, tag = 'scoped memory for tpu_custom_call.1']
    #allocation4 [shape = 's32[2]{0}', space=sflag, size = 0x8, scoped, tag = 'scoped memory for tpu_custom_call.1']
    #allocation5 [shape = 's32[2]{0}', space=sflag, size = 0x8, scoped, tag = 'scoped memory for tpu_custom_call.1']
    #allocation6 [shape = 'u8[262144]{0}', space=vmem, size = 0x40000, scoped, tag = 'input window, operand 1']
    #allocation7 [shape = 'u8[2048]{0}', space=vmem, size = 0x800, scoped, tag = 'output window, operand 0']
    %12 = vsyncpa [#allocation5], 0
    %13 = vsyncpa [#allocation3], 0
    %s14 = scalar_lea.sflag [#allocation3], 1
    %15 = vsyncpa %s14, 0
    %16 = vsyncpa [#allocation4], 0
    %s17 = scalar_lea.sflag [#allocation4], 1
    %18 = vsyncpa %s17, 0
    loop: start=0, step=1, limit=6
    $region2: #{tpu_custom_call.1} parent=1 // loop_pre_header
      _
    $region3: #{tpu_custom_call.1} parent=1 // loop_header
      %s20 = sphi 0, %s24
      %p21 = scmp.ge.s32.totalorder %s20, 6
      %s28 = sphi 0, %s28
      %s30 = sphi 0, %s28
      %s31 = sphi 0, %s30
      %s45 = sphi 0, %s31
      %s51 = sphi 0, %s53
      %s54 = sphi 0, %s51
      %s55 = sphi 0, %s54
      %s71 = sphi 0, %s55
      %s77 = sphi 0, %s79
      %s80 = sphi 0, %s77
      %s81 = sphi 0, %s80
      %s97 = sphi 0, %s81
      %s103 = sphi 0, %s105
      %s106 = sphi 0, %s103
      %s107 = sphi 0, %s106
      %s123 = sphi 0, %s107
      %s129 = sphi 0, %s131
      %s132 = sphi 0, %s129
      %s133 = sphi 0, %s132
      %s149 = sphi 0, %s133
      %s155 = sphi 0, %s157
      %s158 = sphi 0, %s155
      %s159 = sphi 0, %s158
      %s175 = sphi 0, %s159
      %s181 = sphi 0, %s183
      %s184 = sphi 0, %s181
      %s185 = sphi 0, %s184
      %s201 = sphi 0, %s185
    $region4: #{tpu_custom_call.1} parent=1 // loop_header_branch
      %23 = sbr.rel (%p21) target = $region8
    $region5: #{tpu_custom_call.1} parent=1 // loop_body
      %s25 = ssub.s32 %s20, 1
      %s26 = ssub.s32 %s20, 2
      %s27 = sadd.s32 %s20, 1
      %s29 = sadd.s32 %s28, 1
      %p32 = scmp.eq.s32.totalorder %s20, 3
      %p33 = scmp.ne.s32.totalorder %s28, %s30
      %p34 = scmp.eq.s32.totalorder %s20, 0
      %p35 = por %p33, %p34
      %p36 = scmp.ne.s32.totalorder %s28, %s30
      %p37 = scmp.eq.s32.totalorder %s25, 3
      %p38 = por %p36, %p37
      %p39 = scmp.ne.s32.totalorder %s30, %s31
      %p40 = scmp.eq.s32.totalorder %s25, 0
      %p41 = por %p39, %p40
      %p42 = scmp.ne.s32.totalorder %s30, %s31
      %p43 = scmp.eq.s32.totalorder %s26, 3
      %p44 = por %p42, %p43
      %p46 = scmp.ne.s32.totalorder %s31, %s45
      %p47 = scmp.eq.s32.totalorder %s26, 0
      %p48 = por %p46, %p47
      %s49 = ssub.s32 %s20, %s27
      %p50 = scmp.eq.s32.totalorder %s49, 0
      %s52 = sadd.s32 %s51, 1
      %s53 = scalar_select %p50, %s51, %s52
      %p56 = pneg %p50
      %p57 = scmp.eq.s32.totalorder %s20, 3
      %p58 = por %p56, %p57
      %p59 = scmp.ne.s32.totalorder %s51, %s54
      %p60 = scmp.eq.s32.totalorder %s20, 0
      %p61 = por %p59, %p60
      %p62 = scmp.ne.s32.totalorder %s51, %s54
      %p63 = scmp.eq.s32.totalorder %s25, 3
      %p64 = por %p62, %p63
      %p65 = scmp.ne.s32.totalorder %s54, %s55
      %p66 = scmp.eq.s32.totalorder %s25, 0
      %p67 = por %p65, %p66
      %p68 = scmp.ne.s32.totalorder %s54, %s55
      %p69 = scmp.eq.s32.totalorder %s26, 3
      %p70 = por %p68, %p69
      %p72 = scmp.ne.s32.totalorder %s55, %s71
      %p73 = scmp.eq.s32.totalorder %s26, 0
      %p74 = por %p72, %p73
      %s75 = ssub.s32 %s20, %s27
      %p76 = scmp.eq.s32.totalorder %s75, 0
      %s78 = sadd.s32 %s77, 1
      %s79 = scalar_select %p76, %s77, %s78
      %p82 = pneg %p76
      %p83 = scmp.eq.s32.totalorder %s20, 3
      %p84 = por %p82, %p83
      %p85 = scmp.ne.s32.totalorder %s77, %s80
      %p86 = scmp.eq.s32.totalorder %s20, 0
      %p87 = por %p85, %p86
      %p88 = scmp.ne.s32.totalorder %s77, %s80
      %p89 = scmp.eq.s32.totalorder %s25, 3
      %p90 = por %p88, %p89
      %p91 = scmp.ne.s32.totalorder %s80, %s81
      %p92 = scmp.eq.s32.totalorder %s25, 0
      %p93 = por %p91, %p92
      %p94 = scmp.ne.s32.totalorder %s80, %s81
      %p95 = scmp.eq.s32.totalorder %s26, 3
      %p96 = por %p94, %p95
      %p98 = scmp.ne.s32.totalorder %s81, %s97
      %p99 = scmp.eq.s32.totalorder %s26, 0
      %p100 = por %p98, %p99
      %s101 = ssub.s32 %s20, %s27
      %p102 = scmp.eq.s32.totalorder %s101, 0
      %s104 = sadd.s32 %s103, 1
      %s105 = scalar_select %p102, %s103, %s104
      %p108 = pneg %p102
      %p109 = scmp.eq.s32.totalorder %s20, 3
      %p110 = por %p108, %p109
      %p111 = scmp.ne.s32.totalorder %s103, %s106
      %p112 = scmp.eq.s32.totalorder %s20, 0
      %p113 = por %p111, %p112
      %p114 = scmp.ne.s32.totalorder %s103, %s106
      %p115 = scmp.eq.s32.totalorder %s25, 3
      %p116 = por %p114, %p115
      %p117 = scmp.ne.s32.totalorder %s106, %s107
      %p118 = scmp.eq.s32.totalorder %s25, 0
      %p119 = por %p117, %p118
      %p120 = scmp.ne.s32.totalorder %s106, %s107
      %p121 = scmp.eq.s32.totalorder %s26, 3
      %p122 = por %p120, %p121
      %p124 = scmp.ne.s32.totalorder %s107, %s123
      %p125 = scmp.eq.s32.totalorder %s26, 0
      %p126 = por %p124, %p125
      %s127 = ssub.s32 %s20, %s27
      %p128 = scmp.eq.s32.totalorder %s127, 0
      %s130 = sadd.s32 %s129, 1
      %s131 = scalar_select %p128, %s129, %s130
      %p134 = pneg %p128
      %p135 = scmp.eq.s32.totalorder %s20, 3
      %p136 = por %p134, %p135
      %p137 = scmp.ne.s32.totalorder %s129, %s132
      %p138 = scmp.eq.s32.totalorder %s20, 0
      %p139 = por %p137, %p138
      %p140 = scmp.ne.s32.totalorder %s129, %s132
      %p141 = scmp.eq.s32.totalorder %s25, 3
      %p142 = por %p140, %p141
      %p143 = scmp.ne.s32.totalorder %s132, %s133
      %p144 = scmp.eq.s32.totalorder %s25, 0
      %p145 = por %p143, %p144
      %p146 = scmp.ne.s32.totalorder %s132, %s133
      %p147 = scmp.eq.s32.totalorder %s26, 3
      %p148 = por %p146, %p147
      %p150 = scmp.ne.s32.totalorder %s133, %s149
      %p151 = scmp.eq.s32.totalorder %s26, 0
      %p152 = por %p150, %p151
      %s153 = ssub.s32 %s20, %s27
      %p154 = scmp.eq.s32.totalorder %s153, 0
      %s156 = sadd.s32 %s155, 1
      %s157 = scalar_select %p154, %s155, %s156
      %p160 = pneg %p154
      %p161 = scmp.eq.s32.totalorder %s20, 3
      %p162 = por %p160, %p161
      %p163 = scmp.ne.s32.totalorder %s155, %s158
      %p164 = scmp.eq.s32.totalorder %s20, 0
      %p165 = por %p163, %p164
      %p166 = scmp.ne.s32.totalorder %s155, %s158
      %p167 = scmp.eq.s32.totalorder %s25, 3
      %p168 = por %p166, %p167
      %p169 = scmp.ne.s32.totalorder %s158, %s159
      %p170 = scmp.eq.s32.totalorder %s25, 0
      %p171 = por %p169, %p170
      %p172 = scmp.ne.s32.totalorder %s158, %s159
      %p173 = scmp.eq.s32.totalorder %s26, 3
      %p174 = por %p172, %p173
      %p176 = scmp.ne.s32.totalorder %s159, %s175
      %p177 = scmp.eq.s32.totalorder %s26, 0
      %p178 = por %p176, %p177
      %s179 = ssub.s32 %s20, %s27
      %p180 = scmp.eq.s32.totalorder %s179, 0
      %s182 = sadd.s32 %s181, 1
      %s183 = scalar_select %p180, %s181, %s182
      %p186 = pneg %p180
      %p187 = scmp.eq.s32.totalorder %s20, 3
      %p188 = por %p186, %p187
      %p189 = scmp.ne.s32.totalorder %s181, %s184
      %p190 = scmp.eq.s32.totalorder %s20, 0
      %p191 = por %p189, %p190
      %p192 = scmp.ne.s32.totalorder %s181, %s184
      %p193 = scmp.eq.s32.totalorder %s25, 3
      %p194 = por %p192, %p193
      %p195 = scmp.ne.s32.totalorder %s184, %s185
      %p196 = scmp.eq.s32.totalorder %s25, 0
      %p197 = por %p195, %p196
      %p198 = scmp.ne.s32.totalorder %s184, %s185
      %p199 = scmp.eq.s32.totalorder %s26, 3
      %p200 = por %p198, %p199
      %p202 = scmp.ne.s32.totalorder %s185, %s201
      %p203 = scmp.eq.s32.totalorder %s26, 0
      %p204 = por %p202, %p203
      %p205 = scmp.le.s32.totalorder 1, %s20
      %p206 = scmp.lt.s32.totalorder %s20, 5
      %p207 = pnand %p205, %p206
      %p208 = pneg %p207
      // Predicated region
      $region9: #{tpu_custom_call.1} parent=5 // pred_check
        _
      $region10: #{tpu_custom_call.1} parent=5 // pred_check_branch
        %210 = sbr.rel (%p207) target = $region12
      $region11: #{tpu_custom_call.1} parent=5 // pred_region
        %s211 = ssub.s32 %s20, 1
        // Predicated region
        $region13: #{tpu_custom_call.1} parent=11 // pred_check
          %p212 = pneg %p41
        $region14: #{tpu_custom_call.1} parent=11 // pred_check_branch
          %214 = sbr.rel (%p212) target = $region16
        $region15: #{tpu_custom_call.1} parent=11 // pred_region
          %s216 = ssub.s32 16, 16
          %217 = vsyncadd [#allocation5], %s216
          %s219 = sshll.u32 %s0, 4
          %s220 = int_to_ptr.vmem [resolvable:$true] %s219
          %222 = dma.vmem_to_smem %s220, 16, [#allocation2], [#allocation5]
        $region16: #{tpu_custom_call.1} parent=11 // pred_fallthru
          _
      $region12: #{tpu_custom_call.1} parent=5 // pred_fallthru
        _
      %p223 = scmp.lt.s32.totalorder %s20, 4
      // Predicated region
      $region17: #{tpu_custom_call.1} parent=5 // pred_check
        %p224 = pneg %p223
      $region18: #{tpu_custom_call.1} parent=5 // pred_check_branch
        %226 = sbr.rel (%p224) target = $region20
      $region19: #{tpu_custom_call.1} parent=5 // pred_region
        // Predicated region
        $region21: #{tpu_custom_call.1} parent=19 // pred_check
          %p227 = pneg %p61
        $region22: #{tpu_custom_call.1} parent=19 // pred_check_branch
          %229 = sbr.rel (%p227) target = $region24
        $region23: #{tpu_custom_call.1} parent=19 // pred_region
          %s230 = sand.u32 %s51, 1
          %s231 = scalar_lea.sflag [#allocation3], %s230
          %s232 = sand.u32 %s51, 1
          %s233 = smul.addr %s232, 256
          %s234 = scalar_lea.vmem [#allocation6], %s233
          %s236 = ssub.s32 4096, 4096
          %237 = vsyncadd %s231, %s236
          %s238 = smul.addr %s20, 64
          %s239 = smul.addr %s238, 64
          %s240 = scalar_lea.hbm %s1, %s239
          %s241 = sshll.u32 %s234, 4
          %s242 = int_to_ptr.vmem [resolvable:$true] %s241
          %247 = dma.hbm_to_vmem [thread:$0]  %s240, 4096, %s242, %s231, 64, 64, 4
        $region24: #{tpu_custom_call.1} parent=19 // pred_fallthru
          _
        // Predicated region
        $region25: #{tpu_custom_call.1} parent=19 // pred_check
          %p248 = pneg %p87
        $region26: #{tpu_custom_call.1} parent=19 // pred_check_branch
          %250 = sbr.rel (%p248) target = $region28
        $region27: #{tpu_custom_call.1} parent=19 // pred_region
          %p251 = scmp.lt.s32.totalorder %s20, 3
          %s252 = scalar_select %p251, %s20, 3
          %s253 = scalar_lea.vmem %s2, %s252
        $region28: #{tpu_custom_call.1} parent=19 // pred_fallthru
          _
        // Predicated region
        $region29: #{tpu_custom_call.1} parent=19 // pred_check
          %p254 = pneg %p113
        $region30: #{tpu_custom_call.1} parent=19 // pred_check_branch
          %256 = sbr.rel (%p254) target = $region32
        $region31: #{tpu_custom_call.1} parent=19 // pred_region
          %p257 = scmp.lt.s32.totalorder %s20, 3
          %s258 = scalar_select %p257, %s20, 3
          %s259 = smul.addr %s258, 2
          %s260 = smul.addr %s259, 2
          %s261 = scalar_lea.vmem %s3, %s260
        $region32: #{tpu_custom_call.1} parent=19 // pred_fallthru
          _
        // Predicated region
        $region33: #{tpu_custom_call.1} parent=19 // pred_check
          %p262 = pneg %p139
        $region34: #{tpu_custom_call.1} parent=19 // pred_check_branch
          %264 = sbr.rel (%p262) target = $region36
        $region35: #{tpu_custom_call.1} parent=19 // pred_region
          %p265 = scmp.lt.s32.totalorder %s20, 3
          %s266 = scalar_select %p265, %s20, 3
          %s267 = smul.addr %s266, 2
          %s268 = scalar_lea.vmem %s4, %s267
        $region36: #{tpu_custom_call.1} parent=19 // pred_fallthru
          _
      $region20: #{tpu_custom_call.1} parent=5 // pred_fallthru
        _
      %p269 = scmp.le.s32.totalorder 1, %s20
      %p270 = scmp.lt.s32.totalorder %s20, 5
      %p271 = pnand %p269, %p270
      %p272 = pneg %p271
      // Predicated region
      $region37: #{tpu_custom_call.1} parent=5 // pred_check
        _
      $region38: #{tpu_custom_call.1} parent=5 // pred_check_branch
        %274 = sbr.rel (%p271) target = $region40
      $region39: #{tpu_custom_call.1} parent=5 // pred_region
        %s275 = ssub.s32 %s20, 1
        // Predicated region
        $region41: #{tpu_custom_call.1} parent=39 // pred_check
          %p276 = pneg %p41
        $region42: #{tpu_custom_call.1} parent=39 // pred_check_branch
          %278 = sbr.rel (%p276) target = $region44
        $region43: #{tpu_custom_call.1} parent=39 // pred_region
          %279 = dma.done [#allocation5], 16
        $region44: #{tpu_custom_call.1} parent=39 // pred_fallthru
          _
        %s280 = sand.u32 %s54, 1
        %s281 = scalar_lea.sflag [#allocation3], %s280
        %s282 = sand.u32 %s54, 1
        %s283 = smul.addr %s282, 256
        %s284 = scalar_lea.vmem [#allocation6], %s283
        // Predicated region
        $region45: #{tpu_custom_call.1} parent=39 // pred_check
          %p285 = pneg %p67
        $region46: #{tpu_custom_call.1} parent=39 // pred_check_branch
          %287 = sbr.rel (%p285) target = $region48
        $region47: #{tpu_custom_call.1} parent=39 // pred_region
          %288 = dma.done %s281, 4096
        $region48: #{tpu_custom_call.1} parent=39 // pred_fallthru
          _
        %289 = sfence
        %p290 = pneg %p41
        %p291 = pneg %p38
        %s292 = sand.u32 %s54, 1
        %s293 = scalar_lea.sflag [#allocation3], %s292
        %s294 = sand.u32 %s54, 1
        %s295 = smul.addr %s294, 256
        %s296 = scalar_lea.vmem [#allocation6], %s295
        %p297 = pneg %p67
        %p298 = pneg %p64
        %p299 = scmp.lt.s32.totalorder %s25, 3
        %s300 = scalar_select %p299, %s25, 3
        %s301 = scalar_lea.vmem %s2, %s300
        %p302 = pneg %p93
        %p303 = pneg %p90
        %p304 = scmp.lt.s32.totalorder %s25, 3
        %s305 = scalar_select %p304, %s25, 3
        %s306 = smul.addr %s305, 2
        %s307 = smul.addr %s306, 2
        %s308 = scalar_lea.vmem %s3, %s307
        %p309 = pneg %p119
        %p310 = pneg %p116
        %p311 = scmp.lt.s32.totalorder %s25, 3
        %s312 = scalar_select %p311, %s25, 3
        %s313 = smul.addr %s312, 2
        %s314 = scalar_lea.vmem %s4, %s313
        %p315 = pneg %p145
        %p316 = pneg %p142
        %p317 = pneg %p171
        %p318 = pneg %p168
        %s319 = sand.u32 %s158, 1
        %s320 = scalar_lea.sflag [#allocation4], %s319
        %s321 = sand.u32 %s158, 1
        %s322 = smul.addr %s321, 2
        %s323 = scalar_lea.vmem [#allocation7], %s322
        %p324 = pneg %p197
        %p325 = pneg %p194
        %p326 = scmp.lt.s32.totalorder %s25, 3
        %s327 = scalar_select %p326, %s25, 3
        %s328 = smul.addr %s327, 3
        %s329 = scalar_lea.vmem %s6, %s328
        %p330 = scmp.lt.s32.totalorder %s25, 3
        %s331 = scalar_select %p330, %s25, 3
        %s332 = scalar_lea.vmem %s2, %s331
        %p333 = scmp.lt.s32.totalorder %s25, 3
        %s334 = scalar_select %p333, %s25, 3
        %s335 = smul.addr %s334, 2
        %s336 = smul.addr %s335, 2
        %s337 = scalar_lea.vmem %s3, %s336
        %p338 = scmp.lt.s32.totalorder %s25, 3
        %s339 = scalar_select %p338, %s25, 3
        %s340 = smul.addr %s339, 2
        %s341 = scalar_lea.vmem %s4, %s340
        %p342 = scmp.lt.s32.totalorder %s25, 3
        %s343 = scalar_select %p342, %s25, 3
        %s344 = smul.addr %s343, 3
        %s345 = scalar_lea.vmem %s6, %s344
        %s347 = sld [smem:[#allocation2]]
        %s348 = sld [smem:[#allocation2 + $0x1]]
        %s349 = sld [smem:[#allocation2 + $0x2]]
        %s350 = sld [smem:[#allocation2 + $0x3]]
        %s351 = sld [smem:[#allocation2 + $0x4]]
        %v352 = vld [vmem:[%s337] sm:$0xf]
        %v353 = vld [vmem:[%s341] sm:$0x3]
        %v354 = vld [vmem:[%s332] sm:$0x1]
        %v355 = vpack.c.bf16 %v354, %v354
        %v356 = vld [vmem:[%s284] sm:$0xf]
        %v357 = vld [vmem:[%s284 + $0x4] sm:$0xf]
        %v358 = vld [vmem:[%s284 + $0x8] sm:$0xf]
        %v359 = vld [vmem:[%s284 + $0xc] sm:$0xf]
        %v360 = vld [vmem:[%s284 + $0x10] sm:$0xf]
        %v361 = vld [vmem:[%s284 + $0x14] sm:$0xf]
        %v362 = vld [vmem:[%s284 + $0x18] sm:$0xf]
        %v363 = vld [vmem:[%s284 + $0x1c] sm:$0xf]
        %v364 = vld [vmem:[%s284 + $0x20] sm:$0xf]
        %v365 = vld [vmem:[%s284 + $0x24] sm:$0xf]
        %v366 = vld [vmem:[%s284 + $0x28] sm:$0xf]
        %v367 = vld [vmem:[%s284 + $0x2c] sm:$0xf]
        %v368 = vld [vmem:[%s284 + $0x30] sm:$0xf]
        %v369 = vld [vmem:[%s284 + $0x34] sm:$0xf]
        %v370 = vld [vmem:[%s284 + $0x38] sm:$0xf]
        %v371 = vld [vmem:[%s284 + $0x3c] sm:$0xf]
        %v372 = vld [vmem:[%s284 + $0x40] sm:$0xf]
        %v373 = vld [vmem:[%s284 + $0x44] sm:$0xf]
        %v374 = vld [vmem:[%s284 + $0x48] sm:$0xf]
        %v375 = vld [vmem:[%s284 + $0x4c] sm:$0xf]
        %v376 = vld [vmem:[%s284 + $0x50] sm:$0xf]
        %v377 = vld [vmem:[%s284 + $0x54] sm:$0xf]
        %v378 = vld [vmem:[%s284 + $0x58] sm:$0xf]
        %v379 = vld [vmem:[%s284 + $0x5c] sm:$0xf]
        %v380 = vld [vmem:[%s284 + $0x60] sm:$0xf]
        %v381 = vld [vmem:[%s284 + $0x64] sm:$0xf]
        %v382 = vld [vmem:[%s284 + $0x68] sm:$0xf]
        %v383 = vld [vmem:[%s284 + $0x6c] sm:$0xf]
        %v384 = vld [vmem:[%s284 + $0x70] sm:$0xf]
        %v385 = vld [vmem:[%s284 + $0x74] sm:$0xf]
        %v386 = vld [vmem:[%s284 + $0x78] sm:$0xf]
        %v387 = vld [vmem:[%s284 + $0x7c] sm:$0xf]
        %v420 = vunpack.c.l.b16 %v356
        %v421 = vunpack.c.l.b16 %v357
        %v422 = vunpack.c.l.b16 %v358
        %v423 = vunpack.c.l.b16 %v359
        %v424 = vunpack.c.l.b16 %v360
        %v425 = vunpack.c.l.b16 %v361
        %v426 = vunpack.c.l.b16 %v362
        %v427 = vunpack.c.l.b16 %v363
        %v428 = vunpack.c.l.b16 %v364
        %v429 = vunpack.c.l.b16 %v365
        %v430 = vunpack.c.l.b16 %v366
        %v431 = vunpack.c.l.b16 %v367
        %v432 = vunpack.c.l.b16 %v368
        %v433 = vunpack.c.l.b16 %v369
        %v434 = vunpack.c.l.b16 %v370
        %v435 = vunpack.c.l.b16 %v371
        %v436 = vunpack.c.l.b16 %v372
        %v437 = vunpack.c.l.b16 %v373
        %v438 = vunpack.c.l.b16 %v374
        %v439 = vunpack.c.l.b16 %v375
        %v440 = vunpack.c.l.b16 %v376
        %v441 = vunpack.c.l.b16 %v377
        %v442 = vunpack.c.l.b16 %v378
        %v443 = vunpack.c.l.b16 %v379
        %v444 = vunpack.c.l.b16 %v380
        %v445 = vunpack.c.l.b16 %v381
        %v446 = vunpack.c.l.b16 %v382
        %v447 = vunpack.c.l.b16 %v383
        %v448 = vunpack.c.l.b16 %v384
        %v449 = vunpack.c.l.b16 %v385
        %v450 = vunpack.c.l.b16 %v386
        %v451 = vunpack.c.l.b16 %v387
        %v452 = vpack.c.b16 %v421, %v420
        %v453 = vpack.c.b16 %v423, %v422
        %v454 = vpack.c.b16 %v425, %v424
        %v455 = vpack.c.b16 %v427, %v426
        %v456 = vpack.c.b16 %v429, %v428
        %v457 = vpack.c.b16 %v431, %v430
        %v458 = vpack.c.b16 %v433, %v432
        %v459 = vpack.c.b16 %v435, %v434
        %v460 = vpack.c.b16 %v437, %v436
        %v461 = vpack.c.b16 %v439, %v438
        %v462 = vpack.c.b16 %v441, %v440
        %v463 = vpack.c.b16 %v443, %v442
        %v464 = vpack.c.b16 %v445, %v444
        %v465 = vpack.c.b16 %v447, %v446
        %v466 = vpack.c.b16 %v449, %v448
        %v467 = vpack.c.b16 %v451, %v450
        %484 = vmatprep.subr.bf16.mxu0 0
        %485 = vmatpush1.bf16.xpose.msra.mxu0 %v452
        %486 = vmatprep.subr.bf16.mxu0 0
        %487 = vmatpush1.bf16.xpose.msra.mxu0 %v453
        %488 = vmatprep.subr.bf16.mxu0 0
        %489 = vmatpush1.bf16.xpose.msra.mxu0 %v454
        %490 = vmatprep.subr.bf16.mxu0 0
        %491 = vmatpush1.bf16.xpose.msra.mxu0 %v455
        %492 = vmatprep.subr.bf16.mxu0 0
        %493 = vmatpush1.bf16.xpose.msra.mxu0 %v456
        %494 = vmatprep.subr.bf16.mxu0 0
        %495 = vmatpush1.bf16.xpose.msra.mxu0 %v457
        %496 = vmatprep.subr.bf16.mxu0 0
        %497 = vmatpush1.bf16.xpose.msra.mxu0 %v458
        %498 = vmatprep.subr.bf16.mxu0 0
        %499 = vmatpush1.bf16.xpose.msra.mxu0 %v459
        %500 = vmatprep.subr.bf16.mxu0 0
        %501 = vmatpush1.bf16.xpose.msra.mxu0 %v460
        %502 = vmatprep.subr.bf16.mxu0 0
        %503 = vmatpush1.bf16.xpose.msra.mxu0 %v461
        %504 = vmatprep.subr.bf16.mxu0 0
        %505 = vmatpush1.bf16.xpose.msra.mxu0 %v462
        %506 = vmatprep.subr.bf16.mxu0 0
        %507 = vmatpush1.bf16.xpose.msra.mxu0 %v463
        %508 = vmatprep.subr.bf16.mxu0 0
        %509 = vmatpush1.bf16.xpose.msra.mxu0 %v464
        %510 = vmatprep.subr.bf16.mxu0 0
        %511 = vmatpush1.bf16.xpose.msra.mxu0 %v465
        %512 = vmatprep.subr.bf16.mxu0 0
        %513 = vmatpush1.bf16.xpose.msra.mxu0 %v466
        %514 = vmatprep.subr.bf16.mxu0 0
        %515 = vmatpush1.bf16.xpose.msra.mxu0 %v467
        %516 = vmatprep.mubr.bf16.mxu0 0
        %517 = vmatmul.mubr.bf16.gmra.mrb[0].mxu0 %v355
        %v518 = vpop.f32.mrb[0].mxu0
        %v519 = vadd.f32 0.0, %v518
        %v520 = vpop.f32.mrb[0].mxu0
        %v521 = vadd.f32 0.0, %v520
        %v522 = vpop.f32.mrb[0].mxu0
        %v523 = vpop.f32.mrb[0].mxu0
        %524 = vdwg.mxu0
        %vm525 = vcmask 1040384
        %v526 = vsel %vm525, %v519, -inf
        %v527 = vsel %vm525, %v521, -inf
        %v528 = vmax.f32 %v526, %v527
        %529 = vmax.xlane.f32.xlu0 %v528
        %v530 = vpop.xlane.xlu0 %529
        %v531 = vsub.f32 %v519, %v530
        %v532 = vsub.f32 %v521, %v530
        %v533 = vmul.f32 %v531, 1.442695
        %v534 = vpow.pop %v533
        %v535 = vmul.f32 %v532, 1.442695
        %v536 = vpow.pop %v535
        %v537 = vsel %vm525, %v534, 0.0
        %v538 = vsel %vm525, %v536, 0.0
        %v539 = vadd.f32 %v537, %v538
        %540 = vadd.xlane.f32.xlu0 %v539
        %v541 = vpop.xlane.xlu0 %540
        %v542 = vsub.f32 0.0, %v530
        %v543 = vmul.f32 %v542, 1.442695
        %v544 = vpow.pop %v543
        %v545 = vstv %s351
        %v546 = vmul.f32 %v545, %v544
        %v547 = vadd.f32 %v541, %v546
        %v548 = vlog2.pop %v547
        %v549 = vmul.f32 %v548, 0.6931472
        %v550 = vadd.f32 %v530, %v549
        %v553 = vcombine.low %v519, %v521
        %v555 = vunpack.c.l.s4 1983009808
        %v556 = vunpack.c.0.s8 %v555
        %v557 = vlaneseq
        %v558 = vshrl.u32 %v557, 7
        %v559 = vsub.s32 %v556, %v558
        %v560 = vrot.slane %v553, %v559
        %v562 = vmul.f32 %v352, %v560
        %v564 = vlaneseq
        %v565 = vshrl.u32 %v564, 7
        %v566 = vsub.s32 0, %v565
        %v567 = vrot.slane %v562, %v566
        %v568 = vlaneseq
        %v569 = vshrl.u32 %v568, 7
        %v570 = vsub.s32 2, %v569
        %v571 = vrot.slane %v562, %v570
        %v574 = vsel %vm525, %v567, 0.0
        %v575 = vsel %vm525, %v571, 0.0
        %v576 = vadd.f32 %v574, %v575
        %577 = vadd.xlane.f32.xlu0 %v576
        %v578 = vpop.xlane.xlu0 %577
        %v579 = vsub.f32 %v550, %v578
        %v580 = vmul.f32 %v353, %v579
        %v581 = vadd.f32 %v580, 0.0
        %v582 = vrcp.pop %v547
        %v583 = vmul.f32 %v534, %v582
        %v584 = vmul.f32 %v536, %v582
        %v586 = vlaneseq
        %v587 = vshrl.u32 %v586, 7
        %v588 = vsub.s32 0, %v587
        %v589 = vrot.slane %v352, %v588
        %v590 = vlaneseq
        %v591 = vshrl.u32 %v590, 7
        %v592 = vsub.s32 2, %v591
        %v593 = vrot.slane %v352, %v592
        %v596 = vsub.f32 %v583, %v589
        %v597 = vsub.f32 %v584, %v593
        %599 = vset.pattern.permute.xlu0 0
        %600 = vperm.xlu0 %599, %v353
        %v601 = vpop.permute.xlu0 %600
        %v603 = vmul.f32 %v601, %v596
        %v604 = vmul.f32 %v601, %v597
        %v605 = vpack.c.bf16 %v603, %v603
        %v606 = vpack.c.bf16 %v604, %v604
        %s607 = scalar_lea.vmem %s284, 128 [#allocation6]
        %v608 = vld [vmem:[%s607] sm:$0xf]
        %v609 = vld [vmem:[%s607 + $0x4] sm:$0xf]
        %v610 = vld [vmem:[%s607 + $0x8] sm:$0xf]
        %v611 = vld [vmem:[%s607 + $0xc] sm:$0xf]
        %v612 = vld [vmem:[%s607 + $0x10] sm:$0xf]
        %v613 = vld [vmem:[%s607 + $0x14] sm:$0xf]
        %v614 = vld [vmem:[%s607 + $0x18] sm:$0xf]
        %v615 = vld [vmem:[%s607 + $0x1c] sm:$0xf]
        %v616 = vld [vmem:[%s607 + $0x20] sm:$0xf]
        %v617 = vld [vmem:[%s607 + $0x24] sm:$0xf]
        %v618 = vld [vmem:[%s607 + $0x28] sm:$0xf]
        %v619 = vld [vmem:[%s607 + $0x2c] sm:$0xf]
        %v620 = vld [vmem:[%s607 + $0x30] sm:$0xf]
        %v621 = vld [vmem:[%s607 + $0x34] sm:$0xf]
        %v622 = vld [vmem:[%s607 + $0x38] sm:$0xf]
        %v623 = vld [vmem:[%s607 + $0x3c] sm:$0xf]
        %v624 = vld [vmem:[%s607 + $0x40] sm:$0xf]
        %v625 = vld [vmem:[%s607 + $0x44] sm:$0xf]
        %v626 = vld [vmem:[%s607 + $0x48] sm:$0xf]
        %v627 = vld [vmem:[%s607 + $0x4c] sm:$0xf]
        %v628 = vld [vmem:[%s607 + $0x50] sm:$0xf]
        %v629 = vld [vmem:[%s607 + $0x54] sm:$0xf]
        %v630 = vld [vmem:[%s607 + $0x58] sm:$0xf]
        %v631 = vld [vmem:[%s607 + $0x5c] sm:$0xf]
        %v632 = vld [vmem:[%s607 + $0x60] sm:$0xf]
        %v633 = vld [vmem:[%s607 + $0x64] sm:$0xf]
        %v634 = vld [vmem:[%s607 + $0x68] sm:$0xf]
        %v635 = vld [vmem:[%s607 + $0x6c] sm:$0xf]
        %v636 = vld [vmem:[%s607 + $0x70] sm:$0xf]
        %v637 = vld [vmem:[%s607 + $0x74] sm:$0xf]
        %v638 = vld [vmem:[%s607 + $0x78] sm:$0xf]
        %v639 = vld [vmem:[%s607 + $0x7c] sm:$0xf]
        %v672 = vunpack.c.l.b16 %v608
        %v673 = vunpack.c.l.b16 %v609
        %v674 = vunpack.c.l.b16 %v610
        %v675 = vunpack.c.l.b16 %v611
        %v676 = vunpack.c.l.b16 %v612
        %v677 = vunpack.c.l.b16 %v613
        %v678 = vunpack.c.l.b16 %v614
        %v679 = vunpack.c.l.b16 %v615
        %v680 = vunpack.c.l.b16 %v616
        %v681 = vunpack.c.l.b16 %v617
        %v682 = vunpack.c.l.b16 %v618
        %v683 = vunpack.c.l.b16 %v619
        %v684 = vunpack.c.l.b16 %v620
        %v685 = vunpack.c.l.b16 %v621
        %v686 = vunpack.c.l.b16 %v622
        %v687 = vunpack.c.l.b16 %v623
        %v688 = vunpack.c.l.b16 %v624
        %v689 = vunpack.c.l.b16 %v625
        %v690 = vunpack.c.l.b16 %v626
        %v691 = vunpack.c.l.b16 %v627
        %v692 = vunpack.c.l.b16 %v628
        %v693 = vunpack.c.l.b16 %v629
        %v694 = vunpack.c.l.b16 %v630
        %v695 = vunpack.c.l.b16 %v631
        %v696 = vunpack.c.l.b16 %v632
        %v697 = vunpack.c.l.b16 %v633
        %v698 = vunpack.c.l.b16 %v634
        %v699 = vunpack.c.l.b16 %v635
        %v700 = vunpack.c.l.b16 %v636
        %v701 = vunpack.c.l.b16 %v637
        %v702 = vunpack.c.l.b16 %v638
        %v703 = vunpack.c.l.b16 %v639
        %v704 = vpack.c.b16 %v673, %v672
        %v705 = vpack.c.b16 %v675, %v674
        %v706 = vpack.c.b16 %v677, %v676
        %v707 = vpack.c.b16 %v679, %v678
        %v708 = vpack.c.b16 %v681, %v680
        %v709 = vpack.c.b16 %v683, %v682
        %v710 = vpack.c.b16 %v685, %v684
        %v711 = vpack.c.b16 %v687, %v686
        %v712 = vpack.c.b16 %v689, %v688
        %v713 = vpack.c.b16 %v691, %v690
        %v714 = vpack.c.b16 %v693, %v692
        %v715 = vpack.c.b16 %v695, %v694
        %v716 = vpack.c.b16 %v697, %v696
        %v717 = vpack.c.b16 %v699, %v698
        %v718 = vpack.c.b16 %v701, %v700
        %v719 = vpack.c.b16 %v703, %v702
        %736 = vmatprep.subr.bf16.mxu0 0
        %737 = vmatpush1.bf16.xpose.msra.mxu0 %v704
        %738 = vmatprep.subr.bf16.mxu0 0
        %739 = vmatpush1.bf16.xpose.msra.mxu0 %v705
        %740 = vmatprep.subr.bf16.mxu0 0
        %741 = vmatpush1.bf16.xpose.msra.mxu0 %v706
        %742 = vmatprep.subr.bf16.mxu0 0
        %743 = vmatpush1.bf16.xpose.msra.mxu0 %v707
        %744 = vmatprep.subr.bf16.mxu0 0
        %745 = vmatpush1.bf16.xpose.msra.mxu0 %v708
        %746 = vmatprep.subr.bf16.mxu0 0
        %747 = vmatpush1.bf16.xpose.msra.mxu0 %v709
        %748 = vmatprep.subr.bf16.mxu0 0
        %749 = vmatpush1.bf16.xpose.msra.mxu0 %v710
        %750 = vmatprep.subr.bf16.mxu0 0
        %751 = vmatpush1.bf16.xpose.msra.mxu0 %v711
        %752 = vmatprep.subr.bf16.mxu0 0
        %753 = vmatpush1.bf16.xpose.msra.mxu0 %v712
        %754 = vmatprep.subr.bf16.mxu0 0
        %755 = vmatpush1.bf16.xpose.msra.mxu0 %v713
        %756 = vmatprep.subr.bf16.mxu0 0
        %757 = vmatpush1.bf16.xpose.msra.mxu0 %v714
        %758 = vmatprep.subr.bf16.mxu0 0
        %759 = vmatpush1.bf16.xpose.msra.mxu0 %v715
        %760 = vmatprep.subr.bf16.mxu0 0
        %761 = vmatpush1.bf16.xpose.msra.mxu0 %v716
        %762 = vmatprep.subr.bf16.mxu0 0
        %763 = vmatpush1.bf16.xpose.msra.mxu0 %v717
        %764 = vmatprep.subr.bf16.mxu0 0
        %765 = vmatpush1.bf16.xpose.msra.mxu0 %v718
        %766 = vmatprep.subr.bf16.mxu0 0
        %767 = vmatpush1.bf16.xpose.msra.mxu0 %v719
        %768 = vmatprep.mubr.bf16.mxu0 0
        %769 = vmatmul.mubr.bf16.gmra.mrb[0].mxu0 %v355
        %v770 = vpop.f32.mrb[0].mxu0
        %v771 = vadd.f32 0.0, %v770
        %v772 = vpop.f32.mrb[0].mxu0
        %v773 = vadd.f32 0.0, %v772
        %v774 = vpop.f32.mrb[0].mxu0
        %v775 = vpop.f32.mrb[0].mxu0
        %776 = vdwg.mxu0
        %v777 = vsel %vm525, %v771, -inf
        %v778 = vsel %vm525, %v773, -inf
        %v779 = vmax.f32 %v777, %v778
        %780 = vmax.xlane.f32.xlu0 %v779
        %v781 = vpop.xlane.xlu0 %780
        %v782 = vsub.f32 %v771, %v781
        %v783 = vsub.f32 %v773, %v781
        %v784 = vmul.f32 %v782, 1.442695
        %v785 = vpow.pop %v784
        %v786 = vmul.f32 %v783, 1.442695
        %v787 = vpow.pop %v786
        %v788 = vsel %vm525, %v785, 0.0
        %v789 = vsel %vm525, %v787, 0.0
        %v790 = vadd.f32 %v788, %v789
        %791 = vadd.xlane.f32.xlu0 %v790
        %v792 = vpop.xlane.xlu0 %791
        %v793 = vsub.f32 0.0, %v781
        %v794 = vmul.f32 %v793, 1.442695
        %v795 = vpow.pop %v794
        %v796 = vmul.f32 %v545, %v795
        %v797 = vadd.f32 %v792, %v796
        %v798 = vlog2.pop %v797
        %v799 = vmul.f32 %v798, 0.6931472
        %v800 = vadd.f32 %v781, %v799
        %v803 = vcombine.low %v771, %v773
        %v805 = vunpack.c.l.s4 1983009808
        %v806 = vunpack.c.0.s8 %v805
        %v807 = vlaneseq
        %v808 = vshrl.u32 %v807, 7
        %v809 = vsub.s32 %v806, %v808
        %v810 = vrot.slane %v803, %v809
        %v811 = vrot.slane %v810, 7
        %v813 = vmul.f32 %v352, %v811
        %v815 = vlaneseq
        %v816 = vshrl.u32 %v815, 7
        %v817 = vsub.s32 1, %v816
        %v818 = vrot.slane %v813, %v817
        %v819 = vlaneseq
        %v820 = vshrl.u32 %v819, 7
        %v821 = vsub.s32 3, %v820
        %v822 = vrot.slane %v813, %v821
        %vm825 = vcmask 1041409
        %v826 = vsel %vm825, %v818, 0.0
        %v827 = vsel %vm825, %v822, 0.0
        %v828 = vadd.f32 %v826, %v827
        %829 = vadd.xlane.f32.xlu0 %v828
        %v830 = vpop.xlane.xlu0 %829
        %v832 = vrot.slane %v830, 1
        %v834 = vsub.f32 %v800, %v832
        %v836 = vrot.slane %v834, 7
        %v838 = vmul.f32 %v353, %v836
        %v840 = vrot.slane %v838, 1
        %v842 = vadd.f32 %v581, %v840
        %v843 = vrcp.pop %v797
        %v844 = vmul.f32 %v785, %v843
        %v845 = vmul.f32 %v787, %v843
        %v846 = vlaneseq
        %v847 = vshrl.u32 %v846, 7
        %v848 = vsub.s32 1, %v847
        %v849 = vrot.slane %v352, %v848
        %v850 = vlaneseq
        %v851 = vshrl.u32 %v850, 7
        %v852 = vsub.s32 3, %v851
        %v853 = vrot.slane %v352, %v852
        %v856 = vsub.f32 %v844, %v849
        %v857 = vsub.f32 %v845, %v853
        %v860 = vrot.slane %v856, 7
        %v861 = vrot.slane %v857, 7
        %v864 = vmul.f32 %v601, %v860
        %v865 = vmul.f32 %v601, %v861
        %v866 = vpack.c.bf16 %v864, %v864
        %v867 = vpack.c.bf16 %v865, %v865
        %v869 = vshrl.u32 %v866, 16
        %v872 = vshrl.u32 %v867, 16
        %876 = vmatprep.subr.bf16.mxu0 0
        %877 = vmatpush1.bf16.msra.mxu0 %v704
        %878 = vmatprep.subr.bf16.mxu0 0
        %879 = vmatpush1.bf16.msra.mxu0 %v705
        %880 = vmatprep.subr.bf16.mxu0 0
        %881 = vmatpush1.bf16.msra.mxu0 %v706
        %882 = vmatprep.subr.bf16.mxu0 0
        %883 = vmatpush1.bf16.msra.mxu0 %v707
        %884 = vmatprep.subr.bf16.mxu0 0
        %885 = vmatpush1.bf16.msra.mxu0 %v708
        %886 = vmatprep.subr.bf16.mxu0 0
        %887 = vmatpush1.bf16.msra.mxu0 %v709
        %888 = vmatprep.subr.bf16.mxu0 0
        %889 = vmatpush1.bf16.msra.mxu0 %v710
        %890 = vmatprep.subr.bf16.mxu0 0
        %891 = vmatpush1.bf16.msra.mxu0 %v711
        %892 = vmatprep.subr.bf16.mxu0 0
        %893 = vmatpush1.bf16.msra.mxu0 %v712
        %894 = vmatprep.subr.bf16.mxu0 0
        %895 = vmatpush1.bf16.msra.mxu0 %v713
        %896 = vmatprep.subr.bf16.mxu0 0
        %897 = vmatpush1.bf16.msra.mxu0 %v714
        %898 = vmatprep.subr.bf16.mxu0 0
        %899 = vmatpush1.bf16.msra.mxu0 %v715
        %900 = vmatprep.subr.bf16.mxu0 0
        %901 = vmatpush1.bf16.msra.mxu0 %v716
        %902 = vmatprep.subr.bf16.mxu0 0
        %903 = vmatpush1.bf16.msra.mxu0 %v717
        %904 = vmatprep.subr.bf16.mxu0 0
        %905 = vmatpush1.bf16.msra.mxu0 %v718
        %906 = vmatprep.subr.bf16.mxu0 0
        %907 = vmatpush1.bf16.msra.mxu0 %v719
        %908 = vmatprep.mubr.bf16.mxu0 %v872
        %909 = vmatmul.mubr.bf16.gmra.mrb[0].mxu0 %v869
        %v910 = vpop.f32.mrb[0].mxu0
        %v911 = vadd.f32 0.0, %v910
        %v912 = vpop.f32.mrb[0].mxu0
        %v913 = vpop.f32.mrb[0].mxu0
        %v914 = vpop.f32.mrb[0].mxu0
        %915 = vdwg.mxu0
        %916 = vmatprep.subr.bf16.mxu0 0
        %917 = vmatpush1.bf16.msra.mxu0 %v452
        %918 = vmatprep.subr.bf16.mxu0 0
        %919 = vmatpush1.bf16.msra.mxu0 %v453
        %920 = vmatprep.subr.bf16.mxu0 0
        %921 = vmatpush1.bf16.msra.mxu0 %v454
        %922 = vmatprep.subr.bf16.mxu0 0
        %923 = vmatpush1.bf16.msra.mxu0 %v455
        %924 = vmatprep.subr.bf16.mxu0 0
        %925 = vmatpush1.bf16.msra.mxu0 %v456
        %926 = vmatprep.subr.bf16.mxu0 0
        %927 = vmatpush1.bf16.msra.mxu0 %v457
        %928 = vmatprep.subr.bf16.mxu0 0
        %929 = vmatpush1.bf16.msra.mxu0 %v458
        %930 = vmatprep.subr.bf16.mxu0 0
        %931 = vmatpush1.bf16.msra.mxu0 %v459
        %932 = vmatprep.subr.bf16.mxu0 0
        %933 = vmatpush1.bf16.msra.mxu0 %v460
        %934 = vmatprep.subr.bf16.mxu0 0
        %935 = vmatpush1.bf16.msra.mxu0 %v461
        %936 = vmatprep.subr.bf16.mxu0 0
        %937 = vmatpush1.bf16.msra.mxu0 %v462
        %938 = vmatprep.subr.bf16.mxu0 0
        %939 = vmatpush1.bf16.msra.mxu0 %v463
        %940 = vmatprep.subr.bf16.mxu0 0
        %941 = vmatpush1.bf16.msra.mxu0 %v464
        %942 = vmatprep.subr.bf16.mxu0 0
        %943 = vmatpush1.bf16.msra.mxu0 %v465
        %944 = vmatprep.subr.bf16.mxu0 0
        %945 = vmatpush1.bf16.msra.mxu0 %v466
        %946 = vmatprep.subr.bf16.mxu0 0
        %947 = vmatpush1.bf16.msra.mxu0 %v467
        %948 = vmatprep.mubr.bf16.mxu0 %v606
        %949 = vmatmul.mubr.bf16.gmra.mrb[0].mxu0 %v605
        %v950 = vpop.f32.mrb[0].mxu0
        %v951 = vadd.f32 %v911, %v950
        %v952 = vpop.f32.mrb[0].mxu0
        %v953 = vpop.f32.mrb[0].mxu0
        %v954 = vpop.f32.mrb[0].mxu0
        %955 = vdwg.mxu0
        %v956 = vmul.f32 %v354, %v354
        %v957 = vsel %vm525, %v956, 0.0
        %958 = vadd.xlane.f32.xlu0 %v957
        %v959 = vpop.xlane.xlu0 %958
        %v960 = vstv %s348
        %v961 = vmul.f32 %v960, %v959
        %v962 = vadd.f32 %v842, %v961
        %vm963 = vcmask 0
        %964 = vst.msk [vmem:[%s345] sm:$0x1] %vm963, %v962
        %v965 = vmul.f32 %v960, %v354
        %v966 = vadd.f32 %v951, %v965
        %v967 = vpack.c.bf16 %v966, %v966
        %v968 = vld [vmem:[%s284] sm:$0xf]
        %v969 = vld [vmem:[%s284 + $0x4] sm:$0xf]
        %v970 = vld [vmem:[%s284 + $0x8] sm:$0xf]
        %v971 = vld [vmem:[%s284 + $0xc] sm:$0xf]
        %v972 = vld [vmem:[%s284 + $0x10] sm:$0xf]
        %v973 = vld [vmem:[%s284 + $0x14] sm:$0xf]
        %v974 = vld [vmem:[%s284 + $0x18] sm:$0xf]
        %v975 = vld [vmem:[%s284 + $0x1c] sm:$0xf]
        %v976 = vld [vmem:[%s284 + $0x20] sm:$0xf]
        %v977 = vld [vmem:[%s284 + $0x24] sm:$0xf]
        %v978 = vld [vmem:[%s284 + $0x28] sm:$0xf]
        %v979 = vld [vmem:[%s284 + $0x2c] sm:$0xf]
        %v980 = vld [vmem:[%s284 + $0x30] sm:$0xf]
        %v981 = vld [vmem:[%s284 + $0x34] sm:$0xf]
        %v982 = vld [vmem:[%s284 + $0x38] sm:$0xf]
        %v983 = vld [vmem:[%s284 + $0x3c] sm:$0xf]
        %v984 = vld [vmem:[%s284 + $0x40] sm:$0xf]
        %v985 = vld [vmem:[%s284 + $0x44] sm:$0xf]
        %v986 = vld [vmem:[%s284 + $0x48] sm:$0xf]
        %v987 = vld [vmem:[%s284 + $0x4c] sm:$0xf]
        %v988 = vld [vmem:[%s284 + $0x50] sm:$0xf]
        %v989 = vld [vmem:[%s284 + $0x54] sm:$0xf]
        %v990 = vld [vmem:[%s284 + $0x58] sm:$0xf]
        %v991 = vld [vmem:[%s284 + $0x5c] sm:$0xf]
        %v992 = vld [vmem:[%s284 + $0x60] sm:$0xf]
        %v993 = vld [vmem:[%s284 + $0x64] sm:$0xf]
        %v994 = vld [vmem:[%s284 + $0x68] sm:$0xf]
        %v995 = vld [vmem:[%s284 + $0x6c] sm:$0xf]
        %v996 = vld [vmem:[%s284 + $0x70] sm:$0xf]
        %v997 = vld [vmem:[%s284 + $0x74] sm:$0xf]
        %v998 = vld [vmem:[%s284 + $0x78] sm:$0xf]
        %v999 = vld [vmem:[%s284 + $0x7c] sm:$0xf]
        %v1032 = vunpack.c.l.b16 %v968
        %v1033 = vunpack.c.l.b16 %v969
        %v1034 = vunpack.c.l.b16 %v970
        %v1035 = vunpack.c.l.b16 %v971
        %v1036 = vunpack.c.l.b16 %v972
        %v1037 = vunpack.c.l.b16 %v973
        %v1038 = vunpack.c.l.b16 %v974
        %v1039 = vunpack.c.l.b16 %v975
        %v1040 = vunpack.c.l.b16 %v976
        %v1041 = vunpack.c.l.b16 %v977
        %v1042 = vunpack.c.l.b16 %v978
        %v1043 = vunpack.c.l.b16 %v979
        %v1044 = vunpack.c.l.b16 %v980
        %v1045 = vunpack.c.l.b16 %v981
        %v1046 = vunpack.c.l.b16 %v982
        %v1047 = vunpack.c.l.b16 %v983
        %v1048 = vunpack.c.l.b16 %v984
        %v1049 = vunpack.c.l.b16 %v985
        %v1050 = vunpack.c.l.b16 %v986
        %v1051 = vunpack.c.l.b16 %v987
        %v1052 = vunpack.c.l.b16 %v988
        %v1053 = vunpack.c.l.b16 %v989
        %v1054 = vunpack.c.l.b16 %v990
        %v1055 = vunpack.c.l.b16 %v991
        %v1056 = vunpack.c.l.b16 %v992
        %v1057 = vunpack.c.l.b16 %v993
        %v1058 = vunpack.c.l.b16 %v994
        %v1059 = vunpack.c.l.b16 %v995
        %v1060 = vunpack.c.l.b16 %v996
        %v1061 = vunpack.c.l.b16 %v997
        %v1062 = vunpack.c.l.b16 %v998
        %v1063 = vunpack.c.l.b16 %v999
        %v1064 = vpack.c.b16 %v1033, %v1032
        %v1065 = vpack.c.b16 %v1035, %v1034
        %v1066 = vpack.c.b16 %v1037, %v1036
        %v1067 = vpack.c.b16 %v1039, %v1038
        %v1068 = vpack.c.b16 %v1041, %v1040
        %v1069 = vpack.c.b16 %v1043, %v1042
        %v1070 = vpack.c.b16 %v1045, %v1044
        %v1071 = vpack.c.b16 %v1047, %v1046
        %v1072 = vpack.c.b16 %v1049, %v1048
        %v1073 = vpack.c.b16 %v1051, %v1050
        %v1074 = vpack.c.b16 %v1053, %v1052
        %v1075 = vpack.c.b16 %v1055, %v1054
        %v1076 = vpack.c.b16 %v1057, %v1056
        %v1077 = vpack.c.b16 %v1059, %v1058
        %v1078 = vpack.c.b16 %v1061, %v1060
        %v1079 = vpack.c.b16 %v1063, %v1062
        %1096 = vmatprep.subr.bf16.mxu0 0
        %1097 = vmatpush1.bf16.xpose.msra.mxu0 %v1064
        %1098 = vmatprep.subr.bf16.mxu0 0
        %1099 = vmatpush1.bf16.xpose.msra.mxu0 %v1065
        %1100 = vmatprep.subr.bf16.mxu0 0
        %1101 = vmatpush1.bf16.xpose.msra.mxu0 %v1066
        %1102 = vmatprep.subr.bf16.mxu0 0
        %1103 = vmatpush1.bf16.xpose.msra.mxu0 %v1067
        %1104 = vmatprep.subr.bf16.mxu0 0
        %1105 = vmatpush1.bf16.xpose.msra.mxu0 %v1068
        %1106 = vmatprep.subr.bf16.mxu0 0
        %1107 = vmatpush1.bf16.xpose.msra.mxu0 %v1069
        %1108 = vmatprep.subr.bf16.mxu0 0
        %1109 = vmatpush1.bf16.xpose.msra.mxu0 %v1070
        %1110 = vmatprep.subr.bf16.mxu0 0
        %1111 = vmatpush1.bf16.xpose.msra.mxu0 %v1071
        %1112 = vmatprep.subr.bf16.mxu0 0
        %1113 = vmatpush1.bf16.xpose.msra.mxu0 %v1072
        %1114 = vmatprep.subr.bf16.mxu0 0
        %1115 = vmatpush1.bf16.xpose.msra.mxu0 %v1073
        %1116 = vmatprep.subr.bf16.mxu0 0
        %1117 = vmatpush1.bf16.xpose.msra.mxu0 %v1074
        %1118 = vmatprep.subr.bf16.mxu0 0
        %1119 = vmatpush1.bf16.xpose.msra.mxu0 %v1075
        %1120 = vmatprep.subr.bf16.mxu0 0
        %1121 = vmatpush1.bf16.xpose.msra.mxu0 %v1076
        %1122 = vmatprep.subr.bf16.mxu0 0
        %1123 = vmatpush1.bf16.xpose.msra.mxu0 %v1077
        %1124 = vmatprep.subr.bf16.mxu0 0
        %1125 = vmatpush1.bf16.xpose.msra.mxu0 %v1078
        %1126 = vmatprep.subr.bf16.mxu0 0
        %1127 = vmatpush1.bf16.xpose.msra.mxu0 %v1079
        %1128 = vmatprep.mubr.bf16.mxu0 0
        %1129 = vmatmul.mubr.bf16.gmra.mrb[0].mxu0 %v967
        %v1130 = vpop.f32.mrb[0].mxu0
        %v1131 = vadd.f32 0.0, %v1130
        %v1132 = vpop.f32.mrb[0].mxu0
        %v1133 = vadd.f32 0.0, %v1132
        %v1134 = vpop.f32.mrb[0].mxu0
        %v1135 = vpop.f32.mrb[0].mxu0
        %1136 = vdwg.mxu0
        %v1137 = vmul.f32 %v583, %v1131
        %v1138 = vmul.f32 %v584, %v1133
        %v1139 = vsel %vm525, %v1137, 0.0
        %v1140 = vsel %vm525, %v1138, 0.0
        %v1141 = vadd.f32 %v1139, %v1140
        %1142 = vadd.xlane.f32.xlu0 %v1141
        %v1143 = vpop.xlane.xlu0 %1142
        %v1144 = vmul.f32 %v583, %v1143
        %v1145 = vmul.f32 %v584, %v1143
        %v1146 = vsub.f32 %v1137, %v1144
        %v1147 = vsub.f32 %v1138, %v1145
        %v1148 = vstv %s350
        %v1149 = vmul.f32 %v1148, %v1131
        %v1150 = vmul.f32 %v1148, %v1133
        %v1151 = vadd.f32 %v1146, %v1149
        %v1152 = vadd.f32 %v1147, %v1150
        %v1153 = vmul.f32 %v1131, %v1151
        %v1154 = vmul.f32 %v1133, %v1152
        %v1155 = vsel %vm525, %v1153, 0.0
        %v1156 = vsel %vm525, %v1154, 0.0
        %v1157 = vadd.f32 %v1155, %v1156
        %1158 = vadd.xlane.f32.xlu0 %v1157
        %v1159 = vpop.xlane.xlu0 %1158
        %v1160 = vmax.f32 %v1159, 0.0
        %v1161 = vmul.f32 %v353, %v1160
        %v1162 = vadd.f32 %v1161, 0.0
        %v1163 = vld [vmem:[%s607] sm:$0xf]
        %v1164 = vld [vmem:[%s607 + $0x4] sm:$0xf]
        %v1165 = vld [vmem:[%s607 + $0x8] sm:$0xf]
        %v1166 = vld [vmem:[%s607 + $0xc] sm:$0xf]
        %v1167 = vld [vmem:[%s607 + $0x10] sm:$0xf]
        %v1168 = vld [vmem:[%s607 + $0x14] sm:$0xf]
        %v1169 = vld [vmem:[%s607 + $0x18] sm:$0xf]
        %v1170 = vld [vmem:[%s607 + $0x1c] sm:$0xf]
        %v1171 = vld [vmem:[%s607 + $0x20] sm:$0xf]
        %v1172 = vld [vmem:[%s607 + $0x24] sm:$0xf]
        %v1173 = vld [vmem:[%s607 + $0x28] sm:$0xf]
        %v1174 = vld [vmem:[%s607 + $0x2c] sm:$0xf]
        %v1175 = vld [vmem:[%s607 + $0x30] sm:$0xf]
        %v1176 = vld [vmem:[%s607 + $0x34] sm:$0xf]
        %v1177 = vld [vmem:[%s607 + $0x38] sm:$0xf]
        %v1178 = vld [vmem:[%s607 + $0x3c] sm:$0xf]
        %v1179 = vld [vmem:[%s607 + $0x40] sm:$0xf]
        %v1180 = vld [vmem:[%s607 + $0x44] sm:$0xf]
        %v1181 = vld [vmem:[%s607 + $0x48] sm:$0xf]
        %v1182 = vld [vmem:[%s607 + $0x4c] sm:$0xf]
        %v1183 = vld [vmem:[%s607 + $0x50] sm:$0xf]
        %v1184 = vld [vmem:[%s607 + $0x54] sm:$0xf]
        %v1185 = vld [vmem:[%s607 + $0x58] sm:$0xf]
        %v1186 = vld [vmem:[%s607 + $0x5c] sm:$0xf]
        %v1187 = vld [vmem:[%s607 + $0x60] sm:$0xf]
        %v1188 = vld [vmem:[%s607 + $0x64] sm:$0xf]
        %v1189 = vld [vmem:[%s607 + $0x68] sm:$0xf]
        %v1190 = vld [vmem:[%s607 + $0x6c] sm:$0xf]
        %v1191 = vld [vmem:[%s607 + $0x70] sm:$0xf]
        %v1192 = vld [vmem:[%s607 + $0x74] sm:$0xf]
        %v1193 = vld [vmem:[%s607 + $0x78] sm:$0xf]
        %v1194 = vld [vmem:[%s607 + $0x7c] sm:$0xf]
        %v1227 = vunpack.c.l.b16 %v1163
        %v1228 = vunpack.c.l.b16 %v1164
        %v1229 = vunpack.c.l.b16 %v1165
        %v1230 = vunpack.c.l.b16 %v1166
        %v1231 = vunpack.c.l.b16 %v1167
        %v1232 = vunpack.c.l.b16 %v1168
        %v1233 = vunpack.c.l.b16 %v1169
        %v1234 = vunpack.c.l.b16 %v1170
        %v1235 = vunpack.c.l.b16 %v1171
        %v1236 = vunpack.c.l.b16 %v1172
        %v1237 = vunpack.c.l.b16 %v1173
        %v1238 = vunpack.c.l.b16 %v1174
        %v1239 = vunpack.c.l.b16 %v1175
        %v1240 = vunpack.c.l.b16 %v1176
        %v1241 = vunpack.c.l.b16 %v1177
        %v1242 = vunpack.c.l.b16 %v1178
        %v1243 = vunpack.c.l.b16 %v1179
        %v1244 = vunpack.c.l.b16 %v1180
        %v1245 = vunpack.c.l.b16 %v1181
        %v1246 = vunpack.c.l.b16 %v1182
        %v1247 = vunpack.c.l.b16 %v1183
        %v1248 = vunpack.c.l.b16 %v1184
        %v1249 = vunpack.c.l.b16 %v1185
        %v1250 = vunpack.c.l.b16 %v1186
        %v1251 = vunpack.c.l.b16 %v1187
        %v1252 = vunpack.c.l.b16 %v1188
        %v1253 = vunpack.c.l.b16 %v1189
        %v1254 = vunpack.c.l.b16 %v1190
        %v1255 = vunpack.c.l.b16 %v1191
        %v1256 = vunpack.c.l.b16 %v1192
        %v1257 = vunpack.c.l.b16 %v1193
        %v1258 = vunpack.c.l.b16 %v1194
        %v1259 = vpack.c.b16 %v1228, %v1227
        %v1260 = vpack.c.b16 %v1230, %v1229
        %v1261 = vpack.c.b16 %v1232, %v1231
        %v1262 = vpack.c.b16 %v1234, %v1233
        %v1263 = vpack.c.b16 %v1236, %v1235
        %v1264 = vpack.c.b16 %v1238, %v1237
        %v1265 = vpack.c.b16 %v1240, %v1239
        %v1266 = vpack.c.b16 %v1242, %v1241
        %v1267 = vpack.c.b16 %v1244, %v1243
        %v1268 = vpack.c.b16 %v1246, %v1245
        %v1269 = vpack.c.b16 %v1248, %v1247
        %v1270 = vpack.c.b16 %v1250, %v1249
        %v1271 = vpack.c.b16 %v1252, %v1251
        %v1272 = vpack.c.b16 %v1254, %v1253
        %v1273 = vpack.c.b16 %v1256, %v1255
        %v1274 = vpack.c.b16 %v1258, %v1257
        %1291 = vmatprep.subr.bf16.mxu0 0
        %1292 = vmatpush1.bf16.xpose.msra.mxu0 %v1259
        %1293 = vmatprep.subr.bf16.mxu0 0
        %1294 = vmatpush1.bf16.xpose.msra.mxu0 %v1260
        %1295 = vmatprep.subr.bf16.mxu0 0
        %1296 = vmatpush1.bf16.xpose.msra.mxu0 %v1261
        %1297 = vmatprep.subr.bf16.mxu0 0
        %1298 = vmatpush1.bf16.xpose.msra.mxu0 %v1262
        %1299 = vmatprep.subr.bf16.mxu0 0
        %1300 = vmatpush1.bf16.xpose.msra.mxu0 %v1263
        %1301 = vmatprep.subr.bf16.mxu0 0
        %1302 = vmatpush1.bf16.xpose.msra.mxu0 %v1264
        %1303 = vmatprep.subr.bf16.mxu0 0
        %1304 = vmatpush1.bf16.xpose.msra.mxu0 %v1265
        %1305 = vmatprep.subr.bf16.mxu0 0
        %1306 = vmatpush1.bf16.xpose.msra.mxu0 %v1266
        %1307 = vmatprep.subr.bf16.mxu0 0
        %1308 = vmatpush1.bf16.xpose.msra.mxu0 %v1267
        %1309 = vmatprep.subr.bf16.mxu0 0
        %1310 = vmatpush1.bf16.xpose.msra.mxu0 %v1268
        %1311 = vmatprep.subr.bf16.mxu0 0
        %1312 = vmatpush1.bf16.xpose.msra.mxu0 %v1269
        %1313 = vmatprep.subr.bf16.mxu0 0
        %1314 = vmatpush1.bf16.xpose.msra.mxu0 %v1270
        %1315 = vmatprep.subr.bf16.mxu0 0
        %1316 = vmatpush1.bf16.xpose.msra.mxu0 %v1271
        %1317 = vmatprep.subr.bf16.mxu0 0
        %1318 = vmatpush1.bf16.xpose.msra.mxu0 %v1272
        %1319 = vmatprep.subr.bf16.mxu0 0
        %1320 = vmatpush1.bf16.xpose.msra.mxu0 %v1273
        %1321 = vmatprep.subr.bf16.mxu0 0
        %1322 = vmatpush1.bf16.xpose.msra.mxu0 %v1274
        %1323 = vmatprep.mubr.bf16.mxu0 0
        %1324 = vmatmul.mubr.bf16.gmra.mrb[0].mxu0 %v967
        %v1325 = vpop.f32.mrb[0].mxu0
        %v1326 = vadd.f32 0.0, %v1325
        %v1327 = vpop.f32.mrb[0].mxu0
        %v1328 = vadd.f32 0.0, %v1327
        %v1329 = vpop.f32.mrb[0].mxu0
        %v1330 = vpop.f32.mrb[0].mxu0
        %1331 = vdwg.mxu0
        %v1332 = vmul.f32 %v844, %v1326
        %v1333 = vmul.f32 %v845, %v1328
        %v1334 = vsel %vm525, %v1332, 0.0
        %v1335 = vsel %vm525, %v1333, 0.0
        %v1336 = vadd.f32 %v1334, %v1335
        %1337 = vadd.xlane.f32.xlu0 %v1336
        %v1338 = vpop.xlane.xlu0 %1337
        %v1339 = vmul.f32 %v844, %v1338
        %v1340 = vmul.f32 %v845, %v1338
        %v1341 = vsub.f32 %v1332, %v1339
        %v1342 = vsub.f32 %v1333, %v1340
        %v1343 = vmul.f32 %v1148, %v1326
        %v1344 = vmul.f32 %v1148, %v1328
        %v1345 = vadd.f32 %v1341, %v1343
        %v1346 = vadd.f32 %v1342, %v1344
        %v1347 = vmul.f32 %v1326, %v1345
        %v1348 = vmul.f32 %v1328, %v1346
        %v1349 = vsel %vm525, %v1347, 0.0
        %v1350 = vsel %vm525, %v1348, 0.0
        %v1351 = vadd.f32 %v1349, %v1350
        %1352 = vadd.xlane.f32.xlu0 %v1351
        %v1353 = vpop.xlane.xlu0 %1352
        %v1354 = vmax.f32 %v1353, 0.0
        %v1356 = vrot.slane %v1354, 7
        %v1358 = vmul.f32 %v353, %v1356
        %v1360 = vrot.slane %v1358, 1
        %v1362 = vadd.f32 %v1162, %v1360
        %v1363 = vmul.f32 %v966, %v966
        %v1364 = vsel %vm525, %v1363, 0.0
        %1365 = vadd.xlane.f32.xlu0 %v1364
        %v1366 = vpop.xlane.xlu0 %1365
        %v1367 = vmul.f32 %v960, %v1366
        %v1368 = vadd.f32 %v1362, %v1367
        %v1369 = vstv %s349
        %v1370 = vmul.f32 %v1369, %v1366
        %v1371 = vadd.f32 %v1368, %v1370
        %v1372 = vmax.f32 %v1371, 1e-08
        %v1373 = vstv %s347
        %v1374 = vmul.f32 %v1373, %v1366
        %v1375 = vrcp.pop %v1372
        %v1376 = vmul.f32 %v1374, %v1375
        %1378 = vset.pattern.permute.xlu0 0
        %1379 = vperm.xlu0 %1378, %v1376
        %v1380 = vpop.permute.xlu0 %1379
        %v1382 = vmul.f32 %v1380, %v966
        %v1383 = vsub.f32 %v354, %v1382
        %1384 = vst [vmem:[%s323] sm:$0x1] %v1383
        %v1385 = vpack.c.bf16 %v1383, %v1383
        %v1386 = vld [vmem:[%s284] sm:$0xf]
        %v1387 = vld [vmem:[%s284 + $0x4] sm:$0xf]
        %v1388 = vld [vmem:[%s284 + $0x8] sm:$0xf]
        %v1389 = vld [vmem:[%s284 + $0xc] sm:$0xf]
        %v1390 = vld [vmem:[%s284 + $0x10] sm:$0xf]
        %v1391 = vld [vmem:[%s284 + $0x14] sm:$0xf]
        %v1392 = vld [vmem:[%s284 + $0x18] sm:$0xf]
        %v1393 = vld [vmem:[%s284 + $0x1c] sm:$0xf]
        %v1394 = vld [vmem:[%s284 + $0x20] sm:$0xf]
        %v1395 = vld [vmem:[%s284 + $0x24] sm:$0xf]
        %v1396 = vld [vmem:[%s284 + $0x28] sm:$0xf]
        %v1397 = vld [vmem:[%s284 + $0x2c] sm:$0xf]
        %v1398 = vld [vmem:[%s284 + $0x30] sm:$0xf]
        %v1399 = vld [vmem:[%s284 + $0x34] sm:$0xf]
        %v1400 = vld [vmem:[%s284 + $0x38] sm:$0xf]
        %v1401 = vld [vmem:[%s284 + $0x3c] sm:$0xf]
        %v1402 = vld [vmem:[%s284 + $0x40] sm:$0xf]
        %v1403 = vld [vmem:[%s284 + $0x44] sm:$0xf]
        %v1404 = vld [vmem:[%s284 + $0x48] sm:$0xf]
        %v1405 = vld [vmem:[%s284 + $0x4c] sm:$0xf]
        %v1406 = vld [vmem:[%s284 + $0x50] sm:$0xf]
        %v1407 = vld [vmem:[%s284 + $0x54] sm:$0xf]
        %v1408 = vld [vmem:[%s284 + $0x58] sm:$0xf]
        %v1409 = vld [vmem:[%s284 + $0x5c] sm:$0xf]
        %v1410 = vld [vmem:[%s284 + $0x60] sm:$0xf]
        %v1411 = vld [vmem:[%s284 + $0x64] sm:$0xf]
        %v1412 = vld [vmem:[%s284 + $0x68] sm:$0xf]
        %v1413 = vld [vmem:[%s284 + $0x6c] sm:$0xf]
        %v1414 = vld [vmem:[%s284 + $0x70] sm:$0xf]
        %v1415 = vld [vmem:[%s284 + $0x74] sm:$0xf]
        %v1416 = vld [vmem:[%s284 + $0x78] sm:$0xf]
        %v1417 = vld [vmem:[%s284 + $0x7c] sm:$0xf]
        %v1450 = vunpack.c.l.b16 %v1386
        %v1451 = vunpack.c.l.b16 %v1387
        %v1452 = vunpack.c.l.b16 %v1388
        %v1453 = vunpack.c.l.b16 %v1389
        %v1454 = vunpack.c.l.b16 %v1390
        %v1455 = vunpack.c.l.b16 %v1391
        %v1456 = vunpack.c.l.b16 %v1392
        %v1457 = vunpack.c.l.b16 %v1393
        %v1458 = vunpack.c.l.b16 %v1394
        %v1459 = vunpack.c.l.b16 %v1395
        %v1460 = vunpack.c.l.b16 %v1396
        %v1461 = vunpack.c.l.b16 %v1397
        %v1462 = vunpack.c.l.b16 %v1398
        %v1463 = vunpack.c.l.b16 %v1399
        %v1464 = vunpack.c.l.b16 %v1400
        %v1465 = vunpack.c.l.b16 %v1401
        %v1466 = vunpack.c.l.b16 %v1402
        %v1467 = vunpack.c.l.b16 %v1403
        %v1468 = vunpack.c.l.b16 %v1404
        %v1469 = vunpack.c.l.b16 %v1405
        %v1470 = vunpack.c.l.b16 %v1406
        %v1471 = vunpack.c.l.b16 %v1407
        %v1472 = vunpack.c.l.b16 %v1408
        %v1473 = vunpack.c.l.b16 %v1409
        %v1474 = vunpack.c.l.b16 %v1410
        %v1475 = vunpack.c.l.b16 %v1411
        %v1476 = vunpack.c.l.b16 %v1412
        %v1477 = vunpack.c.l.b16 %v1413
        %v1478 = vunpack.c.l.b16 %v1414
        %v1479 = vunpack.c.l.b16 %v1415
        %v1480 = vunpack.c.l.b16 %v1416
        %v1481 = vunpack.c.l.b16 %v1417
        %v1482 = vpack.c.b16 %v1451, %v1450
        %v1483 = vpack.c.b16 %v1453, %v1452
        %v1484 = vpack.c.b16 %v1455, %v1454
        %v1485 = vpack.c.b16 %v1457, %v1456
        %v1486 = vpack.c.b16 %v1459, %v1458
        %v1487 = vpack.c.b16 %v1461, %v1460
        %v1488 = vpack.c.b16 %v1463, %v1462
        %v1489 = vpack.c.b16 %v1465, %v1464
        %v1490 = vpack.c.b16 %v1467, %v1466
        %v1491 = vpack.c.b16 %v1469, %v1468
        %v1492 = vpack.c.b16 %v1471, %v1470
        %v1493 = vpack.c.b16 %v1473, %v1472
        %v1494 = vpack.c.b16 %v1475, %v1474
        %v1495 = vpack.c.b16 %v1477, %v1476
        %v1496 = vpack.c.b16 %v1479, %v1478
        %v1497 = vpack.c.b16 %v1481, %v1480
        %1514 = vmatprep.subr.bf16.mxu0 0
        %1515 = vmatpush1.bf16.xpose.msra.mxu0 %v1482
        %1516 = vmatprep.subr.bf16.mxu0 0
        %1517 = vmatpush1.bf16.xpose.msra.mxu0 %v1483
        %1518 = vmatprep.subr.bf16.mxu0 0
        %1519 = vmatpush1.bf16.xpose.msra.mxu0 %v1484
        %1520 = vmatprep.subr.bf16.mxu0 0
        %1521 = vmatpush1.bf16.xpose.msra.mxu0 %v1485
        %1522 = vmatprep.subr.bf16.mxu0 0
        %1523 = vmatpush1.bf16.xpose.msra.mxu0 %v1486
        %1524 = vmatprep.subr.bf16.mxu0 0
        %1525 = vmatpush1.bf16.xpose.msra.mxu0 %v1487
        %1526 = vmatprep.subr.bf16.mxu0 0
        %1527 = vmatpush1.bf16.xpose.msra.mxu0 %v1488
        %1528 = vmatprep.subr.bf16.mxu0 0
        %1529 = vmatpush1.bf16.xpose.msra.mxu0 %v1489
        %1530 = vmatprep.subr.bf16.mxu0 0
        %1531 = vmatpush1.bf16.xpose.msra.mxu0 %v1490
        %1532 = vmatprep.subr.bf16.mxu0 0
        %1533 = vmatpush1.bf16.xpose.msra.mxu0 %v1491
        %1534 = vmatprep.subr.bf16.mxu0 0
        %1535 = vmatpush1.bf16.xpose.msra.mxu0 %v1492
        %1536 = vmatprep.subr.bf16.mxu0 0
        %1537 = vmatpush1.bf16.xpose.msra.mxu0 %v1493
        %1538 = vmatprep.subr.bf16.mxu0 0
        %1539 = vmatpush1.bf16.xpose.msra.mxu0 %v1494
        %1540 = vmatprep.subr.bf16.mxu0 0
        %1541 = vmatpush1.bf16.xpose.msra.mxu0 %v1495
        %1542 = vmatprep.subr.bf16.mxu0 0
        %1543 = vmatpush1.bf16.xpose.msra.mxu0 %v1496
        %1544 = vmatprep.subr.bf16.mxu0 0
        %1545 = vmatpush1.bf16.xpose.msra.mxu0 %v1497
        %1546 = vmatprep.mubr.bf16.mxu0 0
        %1547 = vmatmul.mubr.bf16.gmra.mrb[0].mxu0 %v1385
        %v1548 = vpop.f32.mrb[0].mxu0
        %v1549 = vadd.f32 0.0, %v1548
        %v1550 = vpop.f32.mrb[0].mxu0
        %v1551 = vadd.f32 0.0, %v1550
        %v1552 = vpop.f32.mrb[0].mxu0
        %v1553 = vpop.f32.mrb[0].mxu0
        %1554 = vdwg.mxu0
        %v1555 = vsel %vm525, %v1549, -inf
        %v1556 = vsel %vm525, %v1551, -inf
        %v1557 = vmax.f32 %v1555, %v1556
        %1558 = vmax.xlane.f32.xlu0 %v1557
        %v1559 = vpop.xlane.xlu0 %1558
        %v1560 = vsub.f32 %v1549, %v1559
        %v1561 = vsub.f32 %v1551, %v1559
        %v1562 = vmul.f32 %v1560, 1.442695
        %v1563 = vpow.pop %v1562
        %v1564 = vmul.f32 %v1561, 1.442695
        %v1565 = vpow.pop %v1564
        %v1566 = vsel %vm525, %v1563, 0.0
        %v1567 = vsel %vm525, %v1565, 0.0
        %v1568 = vadd.f32 %v1566, %v1567
        %1569 = vadd.xlane.f32.xlu0 %v1568
        %v1570 = vpop.xlane.xlu0 %1569
        %v1571 = vsub.f32 0.0, %v1559
        %v1572 = vmul.f32 %v1571, 1.442695
        %v1573 = vpow.pop %v1572
        %v1574 = vmul.f32 %v545, %v1573
        %v1575 = vadd.f32 %v1570, %v1574
        %v1576 = vlog2.pop %v1575
        %v1577 = vmul.f32 %v1576, 0.6931472
        %v1578 = vadd.f32 %v1559, %v1577
        %v1581 = vcombine.low %v1549, %v1551
        %v1583 = vunpack.c.l.s4 1983009808
        %v1584 = vunpack.c.0.s8 %v1583
        %v1585 = vlaneseq
        %v1586 = vshrl.u32 %v1585, 7
        %v1587 = vsub.s32 %v1584, %v1586
        %v1588 = vrot.slane %v1581, %v1587
        %v1590 = vmul.f32 %v352, %v1588
        %v1592 = vlaneseq
        %v1593 = vshrl.u32 %v1592, 7
        %v1594 = vsub.s32 0, %v1593
        %v1595 = vrot.slane %v1590, %v1594
        %v1596 = vlaneseq
        %v1597 = vshrl.u32 %v1596, 7
        %v1598 = vsub.s32 2, %v1597
        %v1599 = vrot.slane %v1590, %v1598
        %v1602 = vsel %vm525, %v1595, 0.0
        %v1603 = vsel %vm525, %v1599, 0.0
        %v1604 = vadd.f32 %v1602, %v1603
        %1605 = vadd.xlane.f32.xlu0 %v1604
        %v1606 = vpop.xlane.xlu0 %1605
        %v1607 = vsub.f32 %v1578, %v1606
        %v1608 = vmul.f32 %v353, %v1607
        %v1609 = vadd.f32 %v1608, 0.0
        %v1610 = vrcp.pop %v1575
        %v1611 = vmul.f32 %v1563, %v1610
        %v1612 = vmul.f32 %v1565, %v1610
        %v1613 = vsub.f32 %v1611, %v589
        %v1614 = vsub.f32 %v1612, %v593
        %v1615 = vmul.f32 %v601, %v1613
        %v1616 = vmul.f32 %v601, %v1614
        %v1617 = vpack.c.bf16 %v1615, %v1615
        %v1618 = vpack.c.bf16 %v1616, %v1616
        %v1619 = vld [vmem:[%s607] sm:$0xf]
        %v1620 = vld [vmem:[%s607 + $0x4] sm:$0xf]
        %v1621 = vld [vmem:[%s607 + $0x8] sm:$0xf]
        %v1622 = vld [vmem:[%s607 + $0xc] sm:$0xf]
        %v1623 = vld [vmem:[%s607 + $0x10] sm:$0xf]
        %v1624 = vld [vmem:[%s607 + $0x14] sm:$0xf]
        %v1625 = vld [vmem:[%s607 + $0x18] sm:$0xf]
        %v1626 = vld [vmem:[%s607 + $0x1c] sm:$0xf]
        %v1627 = vld [vmem:[%s607 + $0x20] sm:$0xf]
        %v1628 = vld [vmem:[%s607 + $0x24] sm:$0xf]
        %v1629 = vld [vmem:[%s607 + $0x28] sm:$0xf]
        %v1630 = vld [vmem:[%s607 + $0x2c] sm:$0xf]
        %v1631 = vld [vmem:[%s607 + $0x30] sm:$0xf]
        %v1632 = vld [vmem:[%s607 + $0x34] sm:$0xf]
        %v1633 = vld [vmem:[%s607 + $0x38] sm:$0xf]
        %v1634 = vld [vmem:[%s607 + $0x3c] sm:$0xf]
        %v1635 = vld [vmem:[%s607 + $0x40] sm:$0xf]
        %v1636 = vld [vmem:[%s607 + $0x44] sm:$0xf]
        %v1637 = vld [vmem:[%s607 + $0x48] sm:$0xf]
        %v1638 = vld [vmem:[%s607 + $0x4c] sm:$0xf]
        %v1639 = vld [vmem:[%s607 + $0x50] sm:$0xf]
        %v1640 = vld [vmem:[%s607 + $0x54] sm:$0xf]
        %v1641 = vld [vmem:[%s607 + $0x58] sm:$0xf]
        %v1642 = vld [vmem:[%s607 + $0x5c] sm:$0xf]
        %v1643 = vld [vmem:[%s607 + $0x60] sm:$0xf]
        %v1644 = vld [vmem:[%s607 + $0x64] sm:$0xf]
        %v1645 = vld [vmem:[%s607 + $0x68] sm:$0xf]
        %v1646 = vld [vmem:[%s607 + $0x6c] sm:$0xf]
        %v1647 = vld [vmem:[%s607 + $0x70] sm:$0xf]
        %v1648 = vld [vmem:[%s607 + $0x74] sm:$0xf]
        %v1649 = vld [vmem:[%s607 + $0x78] sm:$0xf]
        %v1650 = vld [vmem:[%s607 + $0x7c] sm:$0xf]
        %v1683 = vunpack.c.l.b16 %v1619
        %v1684 = vunpack.c.l.b16 %v1620
        %v1685 = vunpack.c.l.b16 %v1621
        %v1686 = vunpack.c.l.b16 %v1622
        %v1687 = vunpack.c.l.b16 %v1623
        %v1688 = vunpack.c.l.b16 %v1624
        %v1689 = vunpack.c.l.b16 %v1625
        %v1690 = vunpack.c.l.b16 %v1626
        %v1691 = vunpack.c.l.b16 %v1627
        %v1692 = vunpack.c.l.b16 %v1628
        %v1693 = vunpack.c.l.b16 %v1629
        %v1694 = vunpack.c.l.b16 %v1630
        %v1695 = vunpack.c.l.b16 %v1631
        %v1696 = vunpack.c.l.b16 %v1632
        %v1697 = vunpack.c.l.b16 %v1633
        %v1698 = vunpack.c.l.b16 %v1634
        %v1699 = vunpack.c.l.b16 %v1635
        %v1700 = vunpack.c.l.b16 %v1636
        %v1701 = vunpack.c.l.b16 %v1637
        %v1702 = vunpack.c.l.b16 %v1638
        %v1703 = vunpack.c.l.b16 %v1639
        %v1704 = vunpack.c.l.b16 %v1640
        %v1705 = vunpack.c.l.b16 %v1641
        %v1706 = vunpack.c.l.b16 %v1642
        %v1707 = vunpack.c.l.b16 %v1643
        %v1708 = vunpack.c.l.b16 %v1644
        %v1709 = vunpack.c.l.b16 %v1645
        %v1710 = vunpack.c.l.b16 %v1646
        %v1711 = vunpack.c.l.b16 %v1647
        %v1712 = vunpack.c.l.b16 %v1648
        %v1713 = vunpack.c.l.b16 %v1649
        %v1714 = vunpack.c.l.b16 %v1650
        %v1715 = vpack.c.b16 %v1684, %v1683
        %v1716 = vpack.c.b16 %v1686, %v1685
        %v1717 = vpack.c.b16 %v1688, %v1687
        %v1718 = vpack.c.b16 %v1690, %v1689
        %v1719 = vpack.c.b16 %v1692, %v1691
        %v1720 = vpack.c.b16 %v1694, %v1693
        %v1721 = vpack.c.b16 %v1696, %v1695
        %v1722 = vpack.c.b16 %v1698, %v1697
        %v1723 = vpack.c.b16 %v1700, %v1699
        %v1724 = vpack.c.b16 %v1702, %v1701
        %v1725 = vpack.c.b16 %v1704, %v1703
        %v1726 = vpack.c.b16 %v1706, %v1705
        %v1727 = vpack.c.b16 %v1708, %v1707
        %v1728 = vpack.c.b16 %v1710, %v1709
        %v1729 = vpack.c.b16 %v1712, %v1711
        %v1730 = vpack.c.b16 %v1714, %v1713
        %1747 = vmatprep.subr.bf16.mxu0 0
        %1748 = vmatpush1.bf16.xpose.msra.mxu0 %v1715
        %1749 = vmatprep.subr.bf16.mxu0 0
        %1750 = vmatpush1.bf16.xpose.msra.mxu0 %v1716
        %1751 = vmatprep.subr.bf16.mxu0 0
        %1752 = vmatpush1.bf16.xpose.msra.mxu0 %v1717
        %1753 = vmatprep.subr.bf16.mxu0 0
        %1754 = vmatpush1.bf16.xpose.msra.mxu0 %v1718
        %1755 = vmatprep.subr.bf16.mxu0 0
        %1756 = vmatpush1.bf16.xpose.msra.mxu0 %v1719
        %1757 = vmatprep.subr.bf16.mxu0 0
        %1758 = vmatpush1.bf16.xpose.msra.mxu0 %v1720
        %1759 = vmatprep.subr.bf16.mxu0 0
        %1760 = vmatpush1.bf16.xpose.msra.mxu0 %v1721
        %1761 = vmatprep.subr.bf16.mxu0 0
        %1762 = vmatpush1.bf16.xpose.msra.mxu0 %v1722
        %1763 = vmatprep.subr.bf16.mxu0 0
        %1764 = vmatpush1.bf16.xpose.msra.mxu0 %v1723
        %1765 = vmatprep.subr.bf16.mxu0 0
        %1766 = vmatpush1.bf16.xpose.msra.mxu0 %v1724
        %1767 = vmatprep.subr.bf16.mxu0 0
        %1768 = vmatpush1.bf16.xpose.msra.mxu0 %v1725
        %1769 = vmatprep.subr.bf16.mxu0 0
        %1770 = vmatpush1.bf16.xpose.msra.mxu0 %v1726
        %1771 = vmatprep.subr.bf16.mxu0 0
        %1772 = vmatpush1.bf16.xpose.msra.mxu0 %v1727
        %1773 = vmatprep.subr.bf16.mxu0 0
        %1774 = vmatpush1.bf16.xpose.msra.mxu0 %v1728
        %1775 = vmatprep.subr.bf16.mxu0 0
        %1776 = vmatpush1.bf16.xpose.msra.mxu0 %v1729
        %1777 = vmatprep.subr.bf16.mxu0 0
        %1778 = vmatpush1.bf16.xpose.msra.mxu0 %v1730
        %1779 = vmatprep.mubr.bf16.mxu0 0
        %1780 = vmatmul.mubr.bf16.gmra.mrb[0].mxu0 %v1385
        %v1781 = vpop.f32.mrb[0].mxu0
        %v1782 = vadd.f32 0.0, %v1781
        %v1783 = vpop.f32.mrb[0].mxu0
        %v1784 = vadd.f32 0.0, %v1783
        %v1785 = vpop.f32.mrb[0].mxu0
        %v1786 = vpop.f32.mrb[0].mxu0
        %1787 = vdwg.mxu0
        %v1788 = vsel %vm525, %v1782, -inf
        %v1789 = vsel %vm525, %v1784, -inf
        %v1790 = vmax.f32 %v1788, %v1789
        %1791 = vmax.xlane.f32.xlu0 %v1790
        %v1792 = vpop.xlane.xlu0 %1791
        %v1793 = vsub.f32 %v1782, %v1792
        %v1794 = vsub.f32 %v1784, %v1792
        %v1795 = vmul.f32 %v1793, 1.442695
        %v1796 = vpow.pop %v1795
        %v1797 = vmul.f32 %v1794, 1.442695
        %v1798 = vpow.pop %v1797
        %v1799 = vsel %vm525, %v1796, 0.0
        %v1800 = vsel %vm525, %v1798, 0.0
        %v1801 = vadd.f32 %v1799, %v1800
        %1802 = vadd.xlane.f32.xlu0 %v1801
        %v1803 = vpop.xlane.xlu0 %1802
        %v1804 = vsub.f32 0.0, %v1792
        %v1805 = vmul.f32 %v1804, 1.442695
        %v1806 = vpow.pop %v1805
        %v1807 = vmul.f32 %v545, %v1806
        %v1808 = vadd.f32 %v1803, %v1807
        %v1809 = vlog2.pop %v1808
        %v1810 = vmul.f32 %v1809, 0.6931472
        %v1811 = vadd.f32 %v1792, %v1810
        %v1814 = vcombine.low %v1782, %v1784
        %v1816 = vunpack.c.l.s4 1983009808
        %v1817 = vunpack.c.0.s8 %v1816
        %v1818 = vlaneseq
        %v1819 = vshrl.u32 %v1818, 7
        %v1820 = vsub.s32 %v1817, %v1819
        %v1821 = vrot.slane %v1814, %v1820
        %v1822 = vrot.slane %v1821, 7
        %v1824 = vmul.f32 %v352, %v1822
        %v1826 = vlaneseq
        %v1827 = vshrl.u32 %v1826, 7
        %v1828 = vsub.s32 1, %v1827
        %v1829 = vrot.slane %v1824, %v1828
        %v1830 = vlaneseq
        %v1831 = vshrl.u32 %v1830, 7
        %v1832 = vsub.s32 3, %v1831
        %v1833 = vrot.slane %v1824, %v1832
        %v1836 = vsel %vm825, %v1829, 0.0
        %v1837 = vsel %vm825, %v1833, 0.0
        %v1838 = vadd.f32 %v1836, %v1837
        %1839 = vadd.xlane.f32.xlu0 %v1838
        %v1840 = vpop.xlane.xlu0 %1839
        %v1842 = vrot.slane %v1840, 1
        %v1844 = vsub.f32 %v1811, %v1842
        %v1846 = vrot.slane %v1844, 7
        %v1848 = vmul.f32 %v353, %v1846
        %v1850 = vrot.slane %v1848, 1
        %v1852 = vadd.f32 %v1609, %v1850
        %v1853 = vrcp.pop %v1808
        %v1854 = vmul.f32 %v1796, %v1853
        %v1855 = vmul.f32 %v1798, %v1853
        %v1856 = vsub.f32 %v1854, %v849
        %v1857 = vsub.f32 %v1855, %v853
        %v1860 = vrot.slane %v1856, 7
        %v1861 = vrot.slane %v1857, 7
        %v1864 = vmul.f32 %v601, %v1860
        %v1865 = vmul.f32 %v601, %v1861
        %v1866 = vpack.c.bf16 %v1864, %v1864
        %v1867 = vpack.c.bf16 %v1865, %v1865
        %v1869 = vshrl.u32 %v1866, 16
        %v1872 = vshrl.u32 %v1867, 16
        %1876 = vmatprep.subr.bf16.mxu0 0
        %1877 = vmatpush1.bf16.msra.mxu0 %v1715
        %1878 = vmatprep.subr.bf16.mxu0 0
        %1879 = vmatpush1.bf16.msra.mxu0 %v1716
        %1880 = vmatprep.subr.bf16.mxu0 0
        %1881 = vmatpush1.bf16.msra.mxu0 %v1717
        %1882 = vmatprep.subr.bf16.mxu0 0
        %1883 = vmatpush1.bf16.msra.mxu0 %v1718
        %1884 = vmatprep.subr.bf16.mxu0 0
        %1885 = vmatpush1.bf16.msra.mxu0 %v1719
        %1886 = vmatprep.subr.bf16.mxu0 0
        %1887 = vmatpush1.bf16.msra.mxu0 %v1720
        %1888 = vmatprep.subr.bf16.mxu0 0
        %1889 = vmatpush1.bf16.msra.mxu0 %v1721
        %1890 = vmatprep.subr.bf16.mxu0 0
        %1891 = vmatpush1.bf16.msra.mxu0 %v1722
        %1892 = vmatprep.subr.bf16.mxu0 0
        %1893 = vmatpush1.bf16.msra.mxu0 %v1723
        %1894 = vmatprep.subr.bf16.mxu0 0
        %1895 = vmatpush1.bf16.msra.mxu0 %v1724
        %1896 = vmatprep.subr.bf16.mxu0 0
        %1897 = vmatpush1.bf16.msra.mxu0 %v1725
        %1898 = vmatprep.subr.bf16.mxu0 0
        %1899 = vmatpush1.bf16.msra.mxu0 %v1726
        %1900 = vmatprep.subr.bf16.mxu0 0
        %1901 = vmatpush1.bf16.msra.mxu0 %v1727
        %1902 = vmatprep.subr.bf16.mxu0 0
        %1903 = vmatpush1.bf16.msra.mxu0 %v1728
        %1904 = vmatprep.subr.bf16.mxu0 0
        %1905 = vmatpush1.bf16.msra.mxu0 %v1729
        %1906 = vmatprep.subr.bf16.mxu0 0
        %1907 = vmatpush1.bf16.msra.mxu0 %v1730
        %1908 = vmatprep.mubr.bf16.mxu0 %v1872
        %1909 = vmatmul.mubr.bf16.gmra.mrb[0].mxu0 %v1869
        %v1910 = vpop.f32.mrb[0].mxu0
        %v1911 = vadd.f32 0.0, %v1910
        %v1912 = vpop.f32.mrb[0].mxu0
        %v1913 = vpop.f32.mrb[0].mxu0
        %v1914 = vpop.f32.mrb[0].mxu0
        %1915 = vdwg.mxu0
        %1916 = vmatprep.subr.bf16.mxu0 0
        %1917 = vmatpush1.bf16.msra.mxu0 %v1482
        %1918 = vmatprep.subr.bf16.mxu0 0
        %1919 = vmatpush1.bf16.msra.mxu0 %v1483
        %1920 = vmatprep.subr.bf16.mxu0 0
        %1921 = vmatpush1.bf16.msra.mxu0 %v1484
        %1922 = vmatprep.subr.bf16.mxu0 0
        %1923 = vmatpush1.bf16.msra.mxu0 %v1485
        %1924 = vmatprep.subr.bf16.mxu0 0
        %1925 = vmatpush1.bf16.msra.mxu0 %v1486
        %1926 = vmatprep.subr.bf16.mxu0 0
        %1927 = vmatpush1.bf16.msra.mxu0 %v1487
        %1928 = vmatprep.subr.bf16.mxu0 0
        %1929 = vmatpush1.bf16.msra.mxu0 %v1488
        %1930 = vmatprep.subr.bf16.mxu0 0
        %1931 = vmatpush1.bf16.msra.mxu0 %v1489
        %1932 = vmatprep.subr.bf16.mxu0 0
        %1933 = vmatpush1.bf16.msra.mxu0 %v1490
        %1934 = vmatprep.subr.bf16.mxu0 0
        %1935 = vmatpush1.bf16.msra.mxu0 %v1491
        %1936 = vmatprep.subr.bf16.mxu0 0
        %1937 = vmatpush1.bf16.msra.mxu0 %v1492
        %1938 = vmatprep.subr.bf16.mxu0 0
        %1939 = vmatpush1.bf16.msra.mxu0 %v1493
        %1940 = vmatprep.subr.bf16.mxu0 0
        %1941 = vmatpush1.bf16.msra.mxu0 %v1494
        %1942 = vmatprep.subr.bf16.mxu0 0
        %1943 = vmatpush1.bf16.msra.mxu0 %v1495
        %1944 = vmatprep.subr.bf16.mxu0 0
        %1945 = vmatpush1.bf16.msra.mxu0 %v1496
        %1946 = vmatprep.subr.bf16.mxu0 0
        %1947 = vmatpush1.bf16.msra.mxu0 %v1497
        %1948 = vmatprep.mubr.bf16.mxu0 %v1618
        %1949 = vmatmul.mubr.bf16.gmra.mrb[0].mxu0 %v1617
        %v1950 = vpop.f32.mrb[0].mxu0
        %v1951 = vadd.f32 %v1911, %v1950
        %v1952 = vpop.f32.mrb[0].mxu0
        %v1953 = vpop.f32.mrb[0].mxu0
        %v1954 = vpop.f32.mrb[0].mxu0
        %1955 = vdwg.mxu0
        %v1956 = vmul.f32 %v1383, %v1383
        %v1957 = vsel %vm525, %v1956, 0.0
        %1958 = vadd.xlane.f32.xlu0 %v1957
        %v1959 = vpop.xlane.xlu0 %1958
        %v1960 = vmul.f32 %v960, %v1959
        %v1961 = vadd.f32 %v1852, %v1960
        %s1962 = scalar_lea.vmem %s345, 1
        %1963 = vst.msk [vmem:[%s1962] sm:$0x1] %vm963, %v1961
        %v1964 = vmul.f32 %v960, %v1383
        %v1965 = vadd.f32 %v1951, %v1964
        %v1966 = vpack.c.bf16 %v1965, %v1965
        %v1967 = vld [vmem:[%s284] sm:$0xf]
        %v1968 = vld [vmem:[%s284 + $0x4] sm:$0xf]
        %v1969 = vld [vmem:[%s284 + $0x8] sm:$0xf]
        %v1970 = vld [vmem:[%s284 + $0xc] sm:$0xf]
        %v1971 = vld [vmem:[%s284 + $0x10] sm:$0xf]
        %v1972 = vld [vmem:[%s284 + $0x14] sm:$0xf]
        %v1973 = vld [vmem:[%s284 + $0x18] sm:$0xf]
        %v1974 = vld [vmem:[%s284 + $0x1c] sm:$0xf]
        %v1975 = vld [vmem:[%s284 + $0x20] sm:$0xf]
        %v1976 = vld [vmem:[%s284 + $0x24] sm:$0xf]
        %v1977 = vld [vmem:[%s284 + $0x28] sm:$0xf]
        %v1978 = vld [vmem:[%s284 + $0x2c] sm:$0xf]
        %v1979 = vld [vmem:[%s284 + $0x30] sm:$0xf]
        %v1980 = vld [vmem:[%s284 + $0x34] sm:$0xf]
        %v1981 = vld [vmem:[%s284 + $0x38] sm:$0xf]
        %v1982 = vld [vmem:[%s284 + $0x3c] sm:$0xf]
        %v1983 = vld [vmem:[%s284 + $0x40] sm:$0xf]
        %v1984 = vld [vmem:[%s284 + $0x44] sm:$0xf]
        %v1985 = vld [vmem:[%s284 + $0x48] sm:$0xf]
        %v1986 = vld [vmem:[%s284 + $0x4c] sm:$0xf]
        %v1987 = vld [vmem:[%s284 + $0x50] sm:$0xf]
        %v1988 = vld [vmem:[%s284 + $0x54] sm:$0xf]
        %v1989 = vld [vmem:[%s284 + $0x58] sm:$0xf]
        %v1990 = vld [vmem:[%s284 + $0x5c] sm:$0xf]
        %v1991 = vld [vmem:[%s284 + $0x60] sm:$0xf]
        %v1992 = vld [vmem:[%s284 + $0x64] sm:$0xf]
        %v1993 = vld [vmem:[%s284 + $0x68] sm:$0xf]
        %v1994 = vld [vmem:[%s284 + $0x6c] sm:$0xf]
        %v1995 = vld [vmem:[%s284 + $0x70] sm:$0xf]
        %v1996 = vld [vmem:[%s284 + $0x74] sm:$0xf]
        %v1997 = vld [vmem:[%s284 + $0x78] sm:$0xf]
        %v1998 = vld [vmem:[%s284 + $0x7c] sm:$0xf]
        %v2031 = vunpack.c.l.b16 %v1967
        %v2032 = vunpack.c.l.b16 %v1968
        %v2033 = vunpack.c.l.b16 %v1969
        %v2034 = vunpack.c.l.b16 %v1970
        %v2035 = vunpack.c.l.b16 %v1971
        %v2036 = vunpack.c.l.b16 %v1972
        %v2037 = vunpack.c.l.b16 %v1973
        %v2038 = vunpack.c.l.b16 %v1974
        %v2039 = vunpack.c.l.b16 %v1975
        %v2040 = vunpack.c.l.b16 %v1976
        %v2041 = vunpack.c.l.b16 %v1977
        %v2042 = vunpack.c.l.b16 %v1978
        %v2043 = vunpack.c.l.b16 %v1979
        %v2044 = vunpack.c.l.b16 %v1980
        %v2045 = vunpack.c.l.b16 %v1981
        %v2046 = vunpack.c.l.b16 %v1982
        %v2047 = vunpack.c.l.b16 %v1983
        %v2048 = vunpack.c.l.b16 %v1984
        %v2049 = vunpack.c.l.b16 %v1985
        %v2050 = vunpack.c.l.b16 %v1986
        %v2051 = vunpack.c.l.b16 %v1987
        %v2052 = vunpack.c.l.b16 %v1988
        %v2053 = vunpack.c.l.b16 %v1989
        %v2054 = vunpack.c.l.b16 %v1990
        %v2055 = vunpack.c.l.b16 %v1991
        %v2056 = vunpack.c.l.b16 %v1992
        %v2057 = vunpack.c.l.b16 %v1993
        %v2058 = vunpack.c.l.b16 %v1994
        %v2059 = vunpack.c.l.b16 %v1995
        %v2060 = vunpack.c.l.b16 %v1996
        %v2061 = vunpack.c.l.b16 %v1997
        %v2062 = vunpack.c.l.b16 %v1998
        %v2063 = vpack.c.b16 %v2032, %v2031
        %v2064 = vpack.c.b16 %v2034, %v2033
        %v2065 = vpack.c.b16 %v2036, %v2035
        %v2066 = vpack.c.b16 %v2038, %v2037
        %v2067 = vpack.c.b16 %v2040, %v2039
        %v2068 = vpack.c.b16 %v2042, %v2041
        %v2069 = vpack.c.b16 %v2044, %v2043
        %v2070 = vpack.c.b16 %v2046, %v2045
        %v2071 = vpack.c.b16 %v2048, %v2047
        %v2072 = vpack.c.b16 %v2050, %v2049
        %v2073 = vpack.c.b16 %v2052, %v2051
        %v2074 = vpack.c.b16 %v2054, %v2053
        %v2075 = vpack.c.b16 %v2056, %v2055
        %v2076 = vpack.c.b16 %v2058, %v2057
        %v2077 = vpack.c.b16 %v2060, %v2059
        %v2078 = vpack.c.b16 %v2062, %v2061
        %2095 = vmatprep.subr.bf16.mxu0 0
        %2096 = vmatpush1.bf16.xpose.msra.mxu0 %v2063
        %2097 = vmatprep.subr.bf16.mxu0 0
        %2098 = vmatpush1.bf16.xpose.msra.mxu0 %v2064
        %2099 = vmatprep.subr.bf16.mxu0 0
        %2100 = vmatpush1.bf16.xpose.msra.mxu0 %v2065
        %2101 = vmatprep.subr.bf16.mxu0 0
        %2102 = vmatpush1.bf16.xpose.msra.mxu0 %v2066
        %2103 = vmatprep.subr.bf16.mxu0 0
        %2104 = vmatpush1.bf16.xpose.msra.mxu0 %v2067
        %2105 = vmatprep.subr.bf16.mxu0 0
        %2106 = vmatpush1.bf16.xpose.msra.mxu0 %v2068
        %2107 = vmatprep.subr.bf16.mxu0 0
        %2108 = vmatpush1.bf16.xpose.msra.mxu0 %v2069
        %2109 = vmatprep.subr.bf16.mxu0 0
        %2110 = vmatpush1.bf16.xpose.msra.mxu0 %v2070
        %2111 = vmatprep.subr.bf16.mxu0 0
        %2112 = vmatpush1.bf16.xpose.msra.mxu0 %v2071
        %2113 = vmatprep.subr.bf16.mxu0 0
        %2114 = vmatpush1.bf16.xpose.msra.mxu0 %v2072
        %2115 = vmatprep.subr.bf16.mxu0 0
        %2116 = vmatpush1.bf16.xpose.msra.mxu0 %v2073
        %2117 = vmatprep.subr.bf16.mxu0 0
        %2118 = vmatpush1.bf16.xpose.msra.mxu0 %v2074
        %2119 = vmatprep.subr.bf16.mxu0 0
        %2120 = vmatpush1.bf16.xpose.msra.mxu0 %v2075
        %2121 = vmatprep.subr.bf16.mxu0 0
        %2122 = vmatpush1.bf16.xpose.msra.mxu0 %v2076
        %2123 = vmatprep.subr.bf16.mxu0 0
        %2124 = vmatpush1.bf16.xpose.msra.mxu0 %v2077
        %2125 = vmatprep.subr.bf16.mxu0 0
        %2126 = vmatpush1.bf16.xpose.msra.mxu0 %v2078
        %2127 = vmatprep.mubr.bf16.mxu0 0
        %2128 = vmatmul.mubr.bf16.gmra.mrb[0].mxu0 %v1966
        %v2129 = vpop.f32.mrb[0].mxu0
        %v2130 = vadd.f32 0.0, %v2129
        %v2131 = vpop.f32.mrb[0].mxu0
        %v2132 = vadd.f32 0.0, %v2131
        %v2133 = vpop.f32.mrb[0].mxu0
        %v2134 = vpop.f32.mrb[0].mxu0
        %2135 = vdwg.mxu0
        %v2136 = vmul.f32 %v1611, %v2130
        %v2137 = vmul.f32 %v1612, %v2132
        %v2138 = vsel %vm525, %v2136, 0.0
        %v2139 = vsel %vm525, %v2137, 0.0
        %v2140 = vadd.f32 %v2138, %v2139
        %2141 = vadd.xlane.f32.xlu0 %v2140
        %v2142 = vpop.xlane.xlu0 %2141
        %v2143 = vmul.f32 %v1611, %v2142
        %v2144 = vmul.f32 %v1612, %v2142
        %v2145 = vsub.f32 %v2136, %v2143
        %v2146 = vsub.f32 %v2137, %v2144
        %v2147 = vmul.f32 %v1148, %v2130
        %v2148 = vmul.f32 %v1148, %v2132
        %v2149 = vadd.f32 %v2145, %v2147
        %v2150 = vadd.f32 %v2146, %v2148
        %v2151 = vmul.f32 %v2130, %v2149
        %v2152 = vmul.f32 %v2132, %v2150
        %v2153 = vsel %vm525, %v2151, 0.0
        %v2154 = vsel %vm525, %v2152, 0.0
        %v2155 = vadd.f32 %v2153, %v2154
        %2156 = vadd.xlane.f32.xlu0 %v2155
        %v2157 = vpop.xlane.xlu0 %2156
        %v2158 = vmax.f32 %v2157, 0.0
        %v2159 = vmul.f32 %v353, %v2158
        %v2160 = vadd.f32 %v2159, 0.0
        %v2161 = vld [vmem:[%s607] sm:$0xf]
        %v2162 = vld [vmem:[%s607 + $0x4] sm:$0xf]
        %v2163 = vld [vmem:[%s607 + $0x8] sm:$0xf]
        %v2164 = vld [vmem:[%s607 + $0xc] sm:$0xf]
        %v2165 = vld [vmem:[%s607 + $0x10] sm:$0xf]
        %v2166 = vld [vmem:[%s607 + $0x14] sm:$0xf]
        %v2167 = vld [vmem:[%s607 + $0x18] sm:$0xf]
        %v2168 = vld [vmem:[%s607 + $0x1c] sm:$0xf]
        %v2169 = vld [vmem:[%s607 + $0x20] sm:$0xf]
        %v2170 = vld [vmem:[%s607 + $0x24] sm:$0xf]
        %v2171 = vld [vmem:[%s607 + $0x28] sm:$0xf]
        %v2172 = vld [vmem:[%s607 + $0x2c] sm:$0xf]
        %v2173 = vld [vmem:[%s607 + $0x30] sm:$0xf]
        %v2174 = vld [vmem:[%s607 + $0x34] sm:$0xf]
        %v2175 = vld [vmem:[%s607 + $0x38] sm:$0xf]
        %v2176 = vld [vmem:[%s607 + $0x3c] sm:$0xf]
        %v2177 = vld [vmem:[%s607 + $0x40] sm:$0xf]
        %v2178 = vld [vmem:[%s607 + $0x44] sm:$0xf]
        %v2179 = vld [vmem:[%s607 + $0x48] sm:$0xf]
        %v2180 = vld [vmem:[%s607 + $0x4c] sm:$0xf]
        %v2181 = vld [vmem:[%s607 + $0x50] sm:$0xf]
        %v2182 = vld [vmem:[%s607 + $0x54] sm:$0xf]
        %v2183 = vld [vmem:[%s607 + $0x58] sm:$0xf]
        %v2184 = vld [vmem:[%s607 + $0x5c] sm:$0xf]
        %v2185 = vld [vmem:[%s607 + $0x60] sm:$0xf]
        %v2186 = vld [vmem:[%s607 + $0x64] sm:$0xf]
        %v2187 = vld [vmem:[%s607 + $0x68] sm:$0xf]
        %v2188 = vld [vmem:[%s607 + $0x6c] sm:$0xf]
        %v2189 = vld [vmem:[%s607 + $0x70] sm:$0xf]
        %v2190 = vld [vmem:[%s607 + $0x74] sm:$0xf]
        %v2191 = vld [vmem:[%s607 + $0x78] sm:$0xf]
        %v2192 = vld [vmem:[%s607 + $0x7c] sm:$0xf]
        %v2225 = vunpack.c.l.b16 %v2161
        %v2226 = vunpack.c.l.b16 %v2162
        %v2227 = vunpack.c.l.b16 %v2163
        %v2228 = vunpack.c.l.b16 %v2164
        %v2229 = vunpack.c.l.b16 %v2165
        %v2230 = vunpack.c.l.b16 %v2166
        %v2231 = vunpack.c.l.b16 %v2167
        %v2232 = vunpack.c.l.b16 %v2168
        %v2233 = vunpack.c.l.b16 %v2169
        %v2234 = vunpack.c.l.b16 %v2170
        %v2235 = vunpack.c.l.b16 %v2171
        %v2236 = vunpack.c.l.b16 %v2172
        %v2237 = vunpack.c.l.b16 %v2173
        %v2238 = vunpack.c.l.b16 %v2174
        %v2239 = vunpack.c.l.b16 %v2175
        %v2240 = vunpack.c.l.b16 %v2176
        %v2241 = vunpack.c.l.b16 %v2177
        %v2242 = vunpack.c.l.b16 %v2178
        %v2243 = vunpack.c.l.b16 %v2179
        %v2244 = vunpack.c.l.b16 %v2180
        %v2245 = vunpack.c.l.b16 %v2181
        %v2246 = vunpack.c.l.b16 %v2182
        %v2247 = vunpack.c.l.b16 %v2183
        %v2248 = vunpack.c.l.b16 %v2184
        %v2249 = vunpack.c.l.b16 %v2185
        %v2250 = vunpack.c.l.b16 %v2186
        %v2251 = vunpack.c.l.b16 %v2187
        %v2252 = vunpack.c.l.b16 %v2188
        %v2253 = vunpack.c.l.b16 %v2189
        %v2254 = vunpack.c.l.b16 %v2190
        %v2255 = vunpack.c.l.b16 %v2191
        %v2256 = vunpack.c.l.b16 %v2192
        %v2257 = vpack.c.b16 %v2226, %v2225
        %v2258 = vpack.c.b16 %v2228, %v2227
        %v2259 = vpack.c.b16 %v2230, %v2229
        %v2260 = vpack.c.b16 %v2232, %v2231
        %v2261 = vpack.c.b16 %v2234, %v2233
        %v2262 = vpack.c.b16 %v2236, %v2235
        %v2263 = vpack.c.b16 %v2238, %v2237
        %v2264 = vpack.c.b16 %v2240, %v2239
        %v2265 = vpack.c.b16 %v2242, %v2241
        %v2266 = vpack.c.b16 %v2244, %v2243
        %v2267 = vpack.c.b16 %v2246, %v2245
        %v2268 = vpack.c.b16 %v2248, %v2247
        %v2269 = vpack.c.b16 %v2250, %v2249
        %v2270 = vpack.c.b16 %v2252, %v2251
        %v2271 = vpack.c.b16 %v2254, %v2253
        %v2272 = vpack.c.b16 %v2256, %v2255
        %2289 = vmatprep.subr.bf16.mxu0 0
        %2290 = vmatpush1.bf16.xpose.msra.mxu0 %v2257
        %2291 = vmatprep.subr.bf16.mxu0 0
        %2292 = vmatpush1.bf16.xpose.msra.mxu0 %v2258
        %2293 = vmatprep.subr.bf16.mxu0 0
        %2294 = vmatpush1.bf16.xpose.msra.mxu0 %v2259
        %2295 = vmatprep.subr.bf16.mxu0 0
        %2296 = vmatpush1.bf16.xpose.msra.mxu0 %v2260
        %2297 = vmatprep.subr.bf16.mxu0 0
        %2298 = vmatpush1.bf16.xpose.msra.mxu0 %v2261
        %2299 = vmatprep.subr.bf16.mxu0 0
        %2300 = vmatpush1.bf16.xpose.msra.mxu0 %v2262
        %2301 = vmatprep.subr.bf16.mxu0 0
        %2302 = vmatpush1.bf16.xpose.msra.mxu0 %v2263
        %2303 = vmatprep.subr.bf16.mxu0 0
        %2304 = vmatpush1.bf16.xpose.msra.mxu0 %v2264
        %2305 = vmatprep.subr.bf16.mxu0 0
        %2306 = vmatpush1.bf16.xpose.msra.mxu0 %v2265
        %2307 = vmatprep.subr.bf16.mxu0 0
        %2308 = vmatpush1.bf16.xpose.msra.mxu0 %v2266
        %2309 = vmatprep.subr.bf16.mxu0 0
        %2310 = vmatpush1.bf16.xpose.msra.mxu0 %v2267
        %2311 = vmatprep.subr.bf16.mxu0 0
        %2312 = vmatpush1.bf16.xpose.msra.mxu0 %v2268
        %2313 = vmatprep.subr.bf16.mxu0 0
        %2314 = vmatpush1.bf16.xpose.msra.mxu0 %v2269
        %2315 = vmatprep.subr.bf16.mxu0 0
        %2316 = vmatpush1.bf16.xpose.msra.mxu0 %v2270
        %2317 = vmatprep.subr.bf16.mxu0 0
        %2318 = vmatpush1.bf16.xpose.msra.mxu0 %v2271
        %2319 = vmatprep.subr.bf16.mxu0 0
        %2320 = vmatpush1.bf16.xpose.msra.mxu0 %v2272
        %2321 = vmatprep.mubr.bf16.mxu0 0
        %2322 = vmatmul.mubr.bf16.gmra.mrb[0].mxu0 %v1966
        %v2323 = vpop.f32.mrb[0].mxu0
        %v2324 = vadd.f32 0.0, %v2323
        %v2325 = vpop.f32.mrb[0].mxu0
        %v2326 = vadd.f32 0.0, %v2325
        %v2327 = vpop.f32.mrb[0].mxu0
        %v2328 = vpop.f32.mrb[0].mxu0
        %2329 = vdwg.mxu0
        %v2330 = vmul.f32 %v1854, %v2324
        %v2331 = vmul.f32 %v1855, %v2326
        %v2332 = vsel %vm525, %v2330, 0.0
        %v2333 = vsel %vm525, %v2331, 0.0
        %v2334 = vadd.f32 %v2332, %v2333
        %2335 = vadd.xlane.f32.xlu0 %v2334
        %v2336 = vpop.xlane.xlu0 %2335
        %v2337 = vmul.f32 %v1854, %v2336
        %v2338 = vmul.f32 %v1855, %v2336
        %v2339 = vsub.f32 %v2330, %v2337
        %v2340 = vsub.f32 %v2331, %v2338
        %v2341 = vmul.f32 %v1148, %v2324
        %v2342 = vmul.f32 %v1148, %v2326
        %v2343 = vadd.f32 %v2339, %v2341
        %v2344 = vadd.f32 %v2340, %v2342
        %v2345 = vmul.f32 %v2324, %v2343
        %v2346 = vmul.f32 %v2326, %v2344
        %v2347 = vsel %vm525, %v2345, 0.0
        %v2348 = vsel %vm525, %v2346, 0.0
        %v2349 = vadd.f32 %v2347, %v2348
        %2350 = vadd.xlane.f32.xlu0 %v2349
        %v2351 = vpop.xlane.xlu0 %2350
        %v2352 = vmax.f32 %v2351, 0.0
        %v2354 = vrot.slane %v2352, 7
        %v2356 = vmul.f32 %v353, %v2354
        %v2358 = vrot.slane %v2356, 1
        %v2360 = vadd.f32 %v2160, %v2358
        %v2361 = vmul.f32 %v1965, %v1965
        %v2362 = vsel %vm525, %v2361, 0.0
        %2363 = vadd.xlane.f32.xlu0 %v2362
        %v2364 = vpop.xlane.xlu0 %2363
        %v2365 = vmul.f32 %v960, %v2364
        %v2366 = vadd.f32 %v2360, %v2365
        %v2367 = vmul.f32 %v1369, %v2364
        %v2368 = vadd.f32 %v2366, %v2367
        %v2369 = vmax.f32 %v2368, 1e-08
        %v2370 = vmul.f32 %v1373, %v2364
        %v2371 = vrcp.pop %v2369
        %v2372 = vmul.f32 %v2370, %v2371
        %2374 = vset.pattern.permute.xlu0 0
        %2375 = vperm.xlu0 %2374, %v2372
        %v2376 = vpop.permute.xlu0 %2375
        %v2378 = vmul.f32 %v2376, %v1965
        %v2379 = vsub.f32 %v1383, %v2378
        %s2380 = scalar_lea.vmem %s323, 1 [#allocation7]
        %2381 = vst [vmem:[%s2380] sm:$0x1] %v2379
        %v2382 = vpack.c.bf16 %v2379, %v2379
        %v2383 = vld [vmem:[%s284] sm:$0xf]
        %v2384 = vld [vmem:[%s284 + $0x4] sm:$0xf]
        %v2385 = vld [vmem:[%s284 + $0x8] sm:$0xf]
        %v2386 = vld [vmem:[%s284 + $0xc] sm:$0xf]
        %v2387 = vld [vmem:[%s284 + $0x10] sm:$0xf]
        %v2388 = vld [vmem:[%s284 + $0x14] sm:$0xf]
        %v2389 = vld [vmem:[%s284 + $0x18] sm:$0xf]
        %v2390 = vld [vmem:[%s284 + $0x1c] sm:$0xf]
        %v2391 = vld [vmem:[%s284 + $0x20] sm:$0xf]
        %v2392 = vld [vmem:[%s284 + $0x24] sm:$0xf]
        %v2393 = vld [vmem:[%s284 + $0x28] sm:$0xf]
        %v2394 = vld [vmem:[%s284 + $0x2c] sm:$0xf]
        %v2395 = vld [vmem:[%s284 + $0x30] sm:$0xf]
        %v2396 = vld [vmem:[%s284 + $0x34] sm:$0xf]
        %v2397 = vld [vmem:[%s284 + $0x38] sm:$0xf]
        %v2398 = vld [vmem:[%s284 + $0x3c] sm:$0xf]
        %v2399 = vld [vmem:[%s284 + $0x40] sm:$0xf]
        %v2400 = vld [vmem:[%s284 + $0x44] sm:$0xf]
        %v2401 = vld [vmem:[%s284 + $0x48] sm:$0xf]
        %v2402 = vld [vmem:[%s284 + $0x4c] sm:$0xf]
        %v2403 = vld [vmem:[%s284 + $0x50] sm:$0xf]
        %v2404 = vld [vmem:[%s284 + $0x54] sm:$0xf]
        %v2405 = vld [vmem:[%s284 + $0x58] sm:$0xf]
        %v2406 = vld [vmem:[%s284 + $0x5c] sm:$0xf]
        %v2407 = vld [vmem:[%s284 + $0x60] sm:$0xf]
        %v2408 = vld [vmem:[%s284 + $0x64] sm:$0xf]
        %v2409 = vld [vmem:[%s284 + $0x68] sm:$0xf]
        %v2410 = vld [vmem:[%s284 + $0x6c] sm:$0xf]
        %v2411 = vld [vmem:[%s284 + $0x70] sm:$0xf]
        %v2412 = vld [vmem:[%s284 + $0x74] sm:$0xf]
        %v2413 = vld [vmem:[%s284 + $0x78] sm:$0xf]
        %v2414 = vld [vmem:[%s284 + $0x7c] sm:$0xf]
        %v2447 = vunpack.c.l.b16 %v2383
        %v2448 = vunpack.c.l.b16 %v2384
        %v2449 = vunpack.c.l.b16 %v2385
        %v2450 = vunpack.c.l.b16 %v2386
        %v2451 = vunpack.c.l.b16 %v2387
        %v2452 = vunpack.c.l.b16 %v2388
        %v2453 = vunpack.c.l.b16 %v2389
        %v2454 = vunpack.c.l.b16 %v2390
        %v2455 = vunpack.c.l.b16 %v2391
        %v2456 = vunpack.c.l.b16 %v2392
        %v2457 = vunpack.c.l.b16 %v2393
        %v2458 = vunpack.c.l.b16 %v2394
        %v2459 = vunpack.c.l.b16 %v2395
        %v2460 = vunpack.c.l.b16 %v2396
        %v2461 = vunpack.c.l.b16 %v2397
        %v2462 = vunpack.c.l.b16 %v2398
        %v2463 = vunpack.c.l.b16 %v2399
        %v2464 = vunpack.c.l.b16 %v2400
        %v2465 = vunpack.c.l.b16 %v2401
        %v2466 = vunpack.c.l.b16 %v2402
        %v2467 = vunpack.c.l.b16 %v2403
        %v2468 = vunpack.c.l.b16 %v2404
        %v2469 = vunpack.c.l.b16 %v2405
        %v2470 = vunpack.c.l.b16 %v2406
        %v2471 = vunpack.c.l.b16 %v2407
        %v2472 = vunpack.c.l.b16 %v2408
        %v2473 = vunpack.c.l.b16 %v2409
        %v2474 = vunpack.c.l.b16 %v2410
        %v2475 = vunpack.c.l.b16 %v2411
        %v2476 = vunpack.c.l.b16 %v2412
        %v2477 = vunpack.c.l.b16 %v2413
        %v2478 = vunpack.c.l.b16 %v2414
        %v2479 = vpack.c.b16 %v2448, %v2447
        %v2480 = vpack.c.b16 %v2450, %v2449
        %v2481 = vpack.c.b16 %v2452, %v2451
        %v2482 = vpack.c.b16 %v2454, %v2453
        %v2483 = vpack.c.b16 %v2456, %v2455
        %v2484 = vpack.c.b16 %v2458, %v2457
        %v2485 = vpack.c.b16 %v2460, %v2459
        %v2486 = vpack.c.b16 %v2462, %v2461
        %v2487 = vpack.c.b16 %v2464, %v2463
        %v2488 = vpack.c.b16 %v2466, %v2465
        %v2489 = vpack.c.b16 %v2468, %v2467
        %v2490 = vpack.c.b16 %v2470, %v2469
        %v2491 = vpack.c.b16 %v2472, %v2471
        %v2492 = vpack.c.b16 %v2474, %v2473
        %v2493 = vpack.c.b16 %v2476, %v2475
        %v2494 = vpack.c.b16 %v2478, %v2477
        %2511 = vmatprep.subr.bf16.mxu0 0
        %2512 = vmatpush1.bf16.xpose.msra.mxu0 %v2479
        %2513 = vmatprep.subr.bf16.mxu0 0
        %2514 = vmatpush1.bf16.xpose.msra.mxu0 %v2480
        %2515 = vmatprep.subr.bf16.mxu0 0
        %2516 = vmatpush1.bf16.xpose.msra.mxu0 %v2481
        %2517 = vmatprep.subr.bf16.mxu0 0
        %2518 = vmatpush1.bf16.xpose.msra.mxu0 %v2482
        %2519 = vmatprep.subr.bf16.mxu0 0
        %2520 = vmatpush1.bf16.xpose.msra.mxu0 %v2483
        %2521 = vmatprep.subr.bf16.mxu0 0
        %2522 = vmatpush1.bf16.xpose.msra.mxu0 %v2484
        %2523 = vmatprep.subr.bf16.mxu0 0
        %2524 = vmatpush1.bf16.xpose.msra.mxu0 %v2485
        %2525 = vmatprep.subr.bf16.mxu0 0
        %2526 = vmatpush1.bf16.xpose.msra.mxu0 %v2486
        %2527 = vmatprep.subr.bf16.mxu0 0
        %2528 = vmatpush1.bf16.xpose.msra.mxu0 %v2487
        %2529 = vmatprep.subr.bf16.mxu0 0
        %2530 = vmatpush1.bf16.xpose.msra.mxu0 %v2488
        %2531 = vmatprep.subr.bf16.mxu0 0
        %2532 = vmatpush1.bf16.xpose.msra.mxu0 %v2489
        %2533 = vmatprep.subr.bf16.mxu0 0
        %2534 = vmatpush1.bf16.xpose.msra.mxu0 %v2490
        %2535 = vmatprep.subr.bf16.mxu0 0
        %2536 = vmatpush1.bf16.xpose.msra.mxu0 %v2491
        %2537 = vmatprep.subr.bf16.mxu0 0
        %2538 = vmatpush1.bf16.xpose.msra.mxu0 %v2492
        %2539 = vmatprep.subr.bf16.mxu0 0
        %2540 = vmatpush1.bf16.xpose.msra.mxu0 %v2493
        %2541 = vmatprep.subr.bf16.mxu0 0
        %2542 = vmatpush1.bf16.xpose.msra.mxu0 %v2494
        %2543 = vmatprep.mubr.bf16.mxu0 0
        %2544 = vmatmul.mubr.bf16.gmra.mrb[0].mxu0 %v2382
        %v2545 = vpop.f32.mrb[0].mxu0
        %v2546 = vadd.f32 0.0, %v2545
        %v2547 = vpop.f32.mrb[0].mxu0
        %v2548 = vadd.f32 0.0, %v2547
        %v2549 = vpop.f32.mrb[0].mxu0
        %v2550 = vpop.f32.mrb[0].mxu0
        %2551 = vdwg.mxu0
        %v2552 = vsel %vm525, %v2546, -inf
        %v2553 = vsel %vm525, %v2548, -inf
        %v2554 = vmax.f32 %v2552, %v2553
        %2555 = vmax.xlane.f32.xlu0 %v2554
        %v2556 = vpop.xlane.xlu0 %2555
        %v2557 = vsub.f32 %v2546, %v2556
        %v2558 = vsub.f32 %v2548, %v2556
        %v2559 = vmul.f32 %v2557, 1.442695
        %v2560 = vpow.pop %v2559
        %v2561 = vmul.f32 %v2558, 1.442695
        %v2562 = vpow.pop %v2561
        %v2563 = vsel %vm525, %v2560, 0.0
        %v2564 = vsel %vm525, %v2562, 0.0
        %v2565 = vadd.f32 %v2563, %v2564
        %2566 = vadd.xlane.f32.xlu0 %v2565
        %v2567 = vpop.xlane.xlu0 %2566
        %v2568 = vsub.f32 0.0, %v2556
        %v2569 = vmul.f32 %v2568, 1.442695
        %v2570 = vpow.pop %v2569
        %v2571 = vmul.f32 %v545, %v2570
        %v2572 = vadd.f32 %v2567, %v2571
        %v2573 = vlog2.pop %v2572
        %v2574 = vmul.f32 %v2573, 0.6931472
        %v2575 = vadd.f32 %v2556, %v2574
        %v2578 = vcombine.low %v2546, %v2548
        %v2580 = vunpack.c.l.s4 1983009808
        %v2581 = vunpack.c.0.s8 %v2580
        %v2582 = vlaneseq
        %v2583 = vshrl.u32 %v2582, 7
        %v2584 = vsub.s32 %v2581, %v2583
        %v2585 = vrot.slane %v2578, %v2584
        %v2587 = vmul.f32 %v352, %v2585
        %v2589 = vlaneseq
        %v2590 = vshrl.u32 %v2589, 7
        %v2591 = vsub.s32 0, %v2590
        %v2592 = vrot.slane %v2587, %v2591
        %v2593 = vlaneseq
        %v2594 = vshrl.u32 %v2593, 7
        %v2595 = vsub.s32 2, %v2594
        %v2596 = vrot.slane %v2587, %v2595
        %v2599 = vsel %vm525, %v2592, 0.0
        %v2600 = vsel %vm525, %v2596, 0.0
        %v2601 = vadd.f32 %v2599, %v2600
        %2602 = vadd.xlane.f32.xlu0 %v2601
        %v2603 = vpop.xlane.xlu0 %2602
        %v2604 = vsub.f32 %v2575, %v2603
        %v2605 = vmul.f32 %v353, %v2604
        %v2606 = vadd.f32 %v2605, 0.0
        %v2607 = vld [vmem:[%s607] sm:$0xf]
        %v2608 = vld [vmem:[%s607 + $0x4] sm:$0xf]
        %v2609 = vld [vmem:[%s607 + $0x8] sm:$0xf]
        %v2610 = vld [vmem:[%s607 + $0xc] sm:$0xf]
        %v2611 = vld [vmem:[%s607 + $0x10] sm:$0xf]
        %v2612 = vld [vmem:[%s607 + $0x14] sm:$0xf]
        %v2613 = vld [vmem:[%s607 + $0x18] sm:$0xf]
        %v2614 = vld [vmem:[%s607 + $0x1c] sm:$0xf]
        %v2615 = vld [vmem:[%s607 + $0x20] sm:$0xf]
        %v2616 = vld [vmem:[%s607 + $0x24] sm:$0xf]
        %v2617 = vld [vmem:[%s607 + $0x28] sm:$0xf]
        %v2618 = vld [vmem:[%s607 + $0x2c] sm:$0xf]
        %v2619 = vld [vmem:[%s607 + $0x30] sm:$0xf]
        %v2620 = vld [vmem:[%s607 + $0x34] sm:$0xf]
        %v2621 = vld [vmem:[%s607 + $0x38] sm:$0xf]
        %v2622 = vld [vmem:[%s607 + $0x3c] sm:$0xf]
        %v2623 = vld [vmem:[%s607 + $0x40] sm:$0xf]
        %v2624 = vld [vmem:[%s607 + $0x44] sm:$0xf]
        %v2625 = vld [vmem:[%s607 + $0x48] sm:$0xf]
        %v2626 = vld [vmem:[%s607 + $0x4c] sm:$0xf]
        %v2627 = vld [vmem:[%s607 + $0x50] sm:$0xf]
        %v2628 = vld [vmem:[%s607 + $0x54] sm:$0xf]
        %v2629 = vld [vmem:[%s607 + $0x58] sm:$0xf]
        %v2630 = vld [vmem:[%s607 + $0x5c] sm:$0xf]
        %v2631 = vld [vmem:[%s607 + $0x60] sm:$0xf]
        %v2632 = vld [vmem:[%s607 + $0x64] sm:$0xf]
        %v2633 = vld [vmem:[%s607 + $0x68] sm:$0xf]
        %v2634 = vld [vmem:[%s607 + $0x6c] sm:$0xf]
        %v2635 = vld [vmem:[%s607 + $0x70] sm:$0xf]
        %v2636 = vld [vmem:[%s607 + $0x74] sm:$0xf]
        %v2637 = vld [vmem:[%s607 + $0x78] sm:$0xf]
        %v2638 = vld [vmem:[%s607 + $0x7c] sm:$0xf]
        %v2671 = vunpack.c.l.b16 %v2607
        %v2672 = vunpack.c.l.b16 %v2608
        %v2673 = vunpack.c.l.b16 %v2609
        %v2674 = vunpack.c.l.b16 %v2610
        %v2675 = vunpack.c.l.b16 %v2611
        %v2676 = vunpack.c.l.b16 %v2612
        %v2677 = vunpack.c.l.b16 %v2613
        %v2678 = vunpack.c.l.b16 %v2614
        %v2679 = vunpack.c.l.b16 %v2615
        %v2680 = vunpack.c.l.b16 %v2616
        %v2681 = vunpack.c.l.b16 %v2617
        %v2682 = vunpack.c.l.b16 %v2618
        %v2683 = vunpack.c.l.b16 %v2619
        %v2684 = vunpack.c.l.b16 %v2620
        %v2685 = vunpack.c.l.b16 %v2621
        %v2686 = vunpack.c.l.b16 %v2622
        %v2687 = vunpack.c.l.b16 %v2623
        %v2688 = vunpack.c.l.b16 %v2624
        %v2689 = vunpack.c.l.b16 %v2625
        %v2690 = vunpack.c.l.b16 %v2626
        %v2691 = vunpack.c.l.b16 %v2627
        %v2692 = vunpack.c.l.b16 %v2628
        %v2693 = vunpack.c.l.b16 %v2629
        %v2694 = vunpack.c.l.b16 %v2630
        %v2695 = vunpack.c.l.b16 %v2631
        %v2696 = vunpack.c.l.b16 %v2632
        %v2697 = vunpack.c.l.b16 %v2633
        %v2698 = vunpack.c.l.b16 %v2634
        %v2699 = vunpack.c.l.b16 %v2635
        %v2700 = vunpack.c.l.b16 %v2636
        %v2701 = vunpack.c.l.b16 %v2637
        %v2702 = vunpack.c.l.b16 %v2638
        %v2703 = vpack.c.b16 %v2672, %v2671
        %v2704 = vpack.c.b16 %v2674, %v2673
        %v2705 = vpack.c.b16 %v2676, %v2675
        %v2706 = vpack.c.b16 %v2678, %v2677
        %v2707 = vpack.c.b16 %v2680, %v2679
        %v2708 = vpack.c.b16 %v2682, %v2681
        %v2709 = vpack.c.b16 %v2684, %v2683
        %v2710 = vpack.c.b16 %v2686, %v2685
        %v2711 = vpack.c.b16 %v2688, %v2687
        %v2712 = vpack.c.b16 %v2690, %v2689
        %v2713 = vpack.c.b16 %v2692, %v2691
        %v2714 = vpack.c.b16 %v2694, %v2693
        %v2715 = vpack.c.b16 %v2696, %v2695
        %v2716 = vpack.c.b16 %v2698, %v2697
        %v2717 = vpack.c.b16 %v2700, %v2699
        %v2718 = vpack.c.b16 %v2702, %v2701
        %2735 = vmatprep.subr.bf16.mxu0 0
        %2736 = vmatpush1.bf16.xpose.msra.mxu0 %v2703
        %2737 = vmatprep.subr.bf16.mxu0 0
        %2738 = vmatpush1.bf16.xpose.msra.mxu0 %v2704
        %2739 = vmatprep.subr.bf16.mxu0 0
        %2740 = vmatpush1.bf16.xpose.msra.mxu0 %v2705
        %2741 = vmatprep.subr.bf16.mxu0 0
        %2742 = vmatpush1.bf16.xpose.msra.mxu0 %v2706
        %2743 = vmatprep.subr.bf16.mxu0 0
        %2744 = vmatpush1.bf16.xpose.msra.mxu0 %v2707
        %2745 = vmatprep.subr.bf16.mxu0 0
        %2746 = vmatpush1.bf16.xpose.msra.mxu0 %v2708
        %2747 = vmatprep.subr.bf16.mxu0 0
        %2748 = vmatpush1.bf16.xpose.msra.mxu0 %v2709
        %2749 = vmatprep.subr.bf16.mxu0 0
        %2750 = vmatpush1.bf16.xpose.msra.mxu0 %v2710
        %2751 = vmatprep.subr.bf16.mxu0 0
        %2752 = vmatpush1.bf16.xpose.msra.mxu0 %v2711
        %2753 = vmatprep.subr.bf16.mxu0 0
        %2754 = vmatpush1.bf16.xpose.msra.mxu0 %v2712
        %2755 = vmatprep.subr.bf16.mxu0 0
        %2756 = vmatpush1.bf16.xpose.msra.mxu0 %v2713
        %2757 = vmatprep.subr.bf16.mxu0 0
        %2758 = vmatpush1.bf16.xpose.msra.mxu0 %v2714
        %2759 = vmatprep.subr.bf16.mxu0 0
        %2760 = vmatpush1.bf16.xpose.msra.mxu0 %v2715
        %2761 = vmatprep.subr.bf16.mxu0 0
        %2762 = vmatpush1.bf16.xpose.msra.mxu0 %v2716
        %2763 = vmatprep.subr.bf16.mxu0 0
        %2764 = vmatpush1.bf16.xpose.msra.mxu0 %v2717
        %2765 = vmatprep.subr.bf16.mxu0 0
        %2766 = vmatpush1.bf16.xpose.msra.mxu0 %v2718
        %2767 = vmatprep.mubr.bf16.mxu0 0
        %2768 = vmatmul.mubr.bf16.gmra.mrb[0].mxu0 %v2382
        %v2769 = vpop.f32.mrb[0].mxu0
        %v2770 = vadd.f32 0.0, %v2769
        %v2771 = vpop.f32.mrb[0].mxu0
        %v2772 = vadd.f32 0.0, %v2771
        %v2773 = vpop.f32.mrb[0].mxu0
        %v2774 = vpop.f32.mrb[0].mxu0
        %2775 = vdwg.mxu0
        %v2776 = vsel %vm525, %v2770, -inf
        %v2777 = vsel %vm525, %v2772, -inf
        %v2778 = vmax.f32 %v2776, %v2777
        %2779 = vmax.xlane.f32.xlu0 %v2778
        %v2780 = vpop.xlane.xlu0 %2779
        %v2781 = vsub.f32 %v2770, %v2780
        %v2782 = vsub.f32 %v2772, %v2780
        %v2783 = vmul.f32 %v2781, 1.442695
        %v2784 = vpow.pop %v2783
        %v2785 = vmul.f32 %v2782, 1.442695
        %v2786 = vpow.pop %v2785
        %v2787 = vsel %vm525, %v2784, 0.0
        %v2788 = vsel %vm525, %v2786, 0.0
        %v2789 = vadd.f32 %v2787, %v2788
        %2790 = vadd.xlane.f32.xlu0 %v2789
        %v2791 = vpop.xlane.xlu0 %2790
        %v2792 = vsub.f32 0.0, %v2780
        %v2793 = vmul.f32 %v2792, 1.442695
        %v2794 = vpow.pop %v2793
        %v2795 = vmul.f32 %v545, %v2794
        %v2796 = vadd.f32 %v2791, %v2795
        %v2797 = vlog2.pop %v2796
        %v2798 = vmul.f32 %v2797, 0.6931472
        %v2799 = vadd.f32 %v2780, %v2798
        %v2802 = vcombine.low %v2770, %v2772
        %v2804 = vunpack.c.l.s4 1983009808
        %v2805 = vunpack.c.0.s8 %v2804
        %v2806 = vlaneseq
        %v2807 = vshrl.u32 %v2806, 7
        %v2808 = vsub.s32 %v2805, %v2807
        %v2809 = vrot.slane %v2802, %v2808
        %v2810 = vrot.slane %v2809, 7
        %v2812 = vmul.f32 %v352, %v2810
        %v2814 = vlaneseq
        %v2815 = vshrl.u32 %v2814, 7
        %v2816 = vsub.s32 1, %v2815
        %v2817 = vrot.slane %v2812, %v2816
        %v2818 = vlaneseq
        %v2819 = vshrl.u32 %v2818, 7
        %v2820 = vsub.s32 3, %v2819
        %v2821 = vrot.slane %v2812, %v2820
        %v2824 = vsel %vm825, %v2817, 0.0
        %v2825 = vsel %vm825, %v2821, 0.0
        %v2826 = vadd.f32 %v2824, %v2825
        %2827 = vadd.xlane.f32.xlu0 %v2826
        %v2828 = vpop.xlane.xlu0 %2827
        %v2830 = vrot.slane %v2828, 1
        %v2832 = vsub.f32 %v2799, %v2830
        %v2834 = vrot.slane %v2832, 7
        %v2836 = vmul.f32 %v353, %v2834
        %v2838 = vrot.slane %v2836, 1
        %v2840 = vadd.f32 %v2606, %v2838
        %v2841 = vmul.f32 %v2379, %v2379
        %v2842 = vsel %vm525, %v2841, 0.0
        %2843 = vadd.xlane.f32.xlu0 %v2842
        %v2844 = vpop.xlane.xlu0 %2843
        %v2845 = vmul.f32 %v960, %v2844
        %v2846 = vadd.f32 %v2840, %v2845
        %s2847 = scalar_lea.vmem %s345, 2
        %2848 = vst.msk [vmem:[%s2847] sm:$0x1] %vm963, %v2846
        %s2849 = sand.u32 %s158, 1
        %s2850 = scalar_lea.sflag [#allocation4], %s2849
        %s2851 = sand.u32 %s158, 1
        %s2852 = smul.addr %s2851, 2
        %s2853 = scalar_lea.vmem [#allocation7], %s2852
        %p2854 = scmp.lt.s32.totalorder %s25, 3
        %s2855 = scalar_select %p2854, %s25, 3
        %s2856 = smul.addr %s2855, 3
        %s2857 = scalar_lea.vmem %s6, %s2856
        // Predicated region
        $region49: #{tpu_custom_call.1} parent=39 // pred_check
          %p2858 = pneg %p168
        $region50: #{tpu_custom_call.1} parent=39 // pred_check_branch
          %2860 = sbr.rel (%p2858) target = $region52
        $region51: #{tpu_custom_call.1} parent=39 // pred_region
          %s2862 = ssub.s32 32, 32
          %2863 = vsyncadd %s2850, %s2862
          %s2864 = smul.addr %s25, 2
          %s2865 = smul.addr %s2864, 16
          %s2866 = scalar_lea.hbm %s5, %s2865
          %s2867 = sshll.u32 %s2853, 4
          %s2868 = int_to_ptr.vmem [resolvable:$true] %s2867
          %2873 = dma.vmem_to_hbm [thread:$0]  %s2868, 32, %s2866, %s2850, 16, 16, 1
        $region52: #{tpu_custom_call.1} parent=39 // pred_fallthru
          _
        // Predicated region
        $region53: #{tpu_custom_call.1} parent=39 // pred_check
          %p2874 = pneg %p194
        $region54: #{tpu_custom_call.1} parent=39 // pred_check_branch
          %2876 = sbr.rel (%p2874) target = $region56
        $region55: #{tpu_custom_call.1} parent=39 // pred_region
          _
        $region56: #{tpu_custom_call.1} parent=39 // pred_fallthru
          _
      $region40: #{tpu_custom_call.1} parent=5 // pred_fallthru
        _
      %p2877 = scmp.le.s32.totalorder 2, %s20
      // Predicated region
      $region57: #{tpu_custom_call.1} parent=5 // pred_check
        %p2878 = pneg %p2877
      $region58: #{tpu_custom_call.1} parent=5 // pred_check_branch
        %2880 = sbr.rel (%p2878) target = $region60
      $region59: #{tpu_custom_call.1} parent=5 // pred_region
        %s2881 = ssub.s32 %s20, 2
        // Predicated region
        $region61: #{tpu_custom_call.1} parent=59 // pred_check
          %p2882 = pneg %p174
        $region62: #{tpu_custom_call.1} parent=59 // pred_check_branch
          %2884 = sbr.rel (%p2882) target = $region64
        $region63: #{tpu_custom_call.1} parent=59 // pred_region
          %s2885 = sand.u32 %s159, 1
          %s2886 = scalar_lea.sflag [#allocation4], %s2885
          %s2887 = sand.u32 %s159, 1
          %s2888 = smul.addr %s2887, 2
          %s2889 = scalar_lea.vmem [#allocation7], %s2888
          %2890 = dma.done %s2886, 32
        $region64: #{tpu_custom_call.1} parent=59 // pred_fallthru
          _
        // Predicated region
        $region65: #{tpu_custom_call.1} parent=59 // pred_check
          %p2891 = pneg %p200
        $region66: #{tpu_custom_call.1} parent=59 // pred_check_branch
          %2893 = sbr.rel (%p2891) target = $region68
        $region67: #{tpu_custom_call.1} parent=59 // pred_region
          %p2894 = scmp.lt.s32.totalorder %s26, 3
          %s2895 = scalar_select %p2894, %s26, 3
          %s2896 = smul.addr %s2895, 3
          %s2897 = scalar_lea.vmem %s6, %s2896
        $region68: #{tpu_custom_call.1} parent=59 // pred_fallthru
          _
      $region60: #{tpu_custom_call.1} parent=5 // pred_fallthru
        _
    $region6: #{tpu_custom_call.1} parent=1 // loop_footer
      %s24 = sadd.s32 1, %s20
    $region7: #{tpu_custom_call.1} parent=1 // loop_footer_branch
      %19 = sbr.rel target = $region3
    $region8: #{tpu_custom_call.1} parent=1 // loop_exit
      _
    %2898 = vsyncpa [#allocation3], 1
    %s2899 = scalar_lea.sflag [#allocation3], 1
    %2900 = vsyncpa %s2899, 1
    %2901 = vsyncpa [#allocation4], 1
    %s2902 = scalar_lea.sflag [#allocation4], 1
    %2903 = vsyncpa %s2902, 1
    %2904 = vsyncpa [#allocation5], 1
    %s2905 = scalar_lea.sflag [#allocation5], 1
    %2906 = vsyncpa %s2905, 1

</llo_original>
